<compile_context>
chip_gen: v7x
topology: tpu7x:2x2x1
jax: 0.10.0
libtpu: 0.0.40
codegen_flags: <defaults>
</compile_context>

<pallas_src>
import math
import numpy as np
import jax
import jax.numpy as jnp
from jax.experimental import pallas as pl
from jax.experimental.pallas import tpu as pltpu


# ----------------------------------------------------------------------------
# exact-GELU helpers (used inside the kernel)
# ----------------------------------------------------------------------------
def _erf(x):
    # Abramowitz & Stegun 7.1.26 polynomial (|error| < 1.5e-7).  lax.erf has no
    # Mosaic lowering; this needs only exp / mul / add / where / rcp, which map
    # to VPU/EUP ops.
    a1, a2, a3, a4, a5 = (0.254829592, -0.284496736, 1.421413741,
                          -1.453152027, 1.061405429)
    p = 0.3275911
    sign = jnp.where(x >= 0.0, 1.0, -1.0)
    ax = jnp.abs(x)
    d = 1.0 + p * ax
    # Divide on the EUP (approx rcp) + one Newton step back to ~f32 accuracy.
    t = pl.reciprocal(d, approx=True)
    t = t * (2.0 - d * t)
    poly = ((((a5 * t + a4) * t + a3) * t + a2) * t + a1) * t
    return sign * (1.0 - poly * jnp.exp(-ax * ax))


def _gelu_exact(x):
    # torch.nn.GELU() default (approximate='none'): 0.5*x*(1 + erf(x/sqrt(2)))
    return x * 0.5 * (1.0 + _erf(x * (1.0 / math.sqrt(2.0))))


# ----------------------------------------------------------------------------
# fused MLP kernel
# ----------------------------------------------------------------------------
def _mlp_kernel(x_ref, w1_ref, b1_ref, w2_ref, b2_ref, o_ref):
    # fc1 on the MXU: bf16 x bf16 -> f32 accumulate.
    h = jnp.dot(x_ref[...], w1_ref[...], preferred_element_type=jnp.float32)
    h = h + b1_ref[...]                       # (TM, H) f32 bias-add
    # NOTE: when N % TM != 0 the padded rows of the last block hold garbage
    # that flows through exp(); harmless here because the computation is
    # row-independent and padded rows are never stored.
    h = _gelu_exact(h)
    # Dropout p = 0.0 -> identity (training dropout would use prng_random_bits).
    h = h.astype(w2_ref.dtype)                # back to bf16 for the 2nd MXU pass
    y = jnp.dot(h, w2_ref[...], preferred_element_type=jnp.float32)
    y = y + b2_ref[...]                       # (TM, Cout) f32
    o_ref[...] = y.astype(o_ref.dtype)


def mlp_forward(x, w1, b1, w2, b2, *, block_rows=1024, min_grid_steps=4):
    """x: (N, Cin);  w1: (Cin, H);  b1: (H,);  w2: (H, Cout);  b2: (Cout,).

    Weights are stored already transposed relative to torch.nn.Linear
    (torch: y = x @ W.T + b  ->  here W is (in, out)).
    """
    N, Cin = x.shape
    Hd = w1.shape[1]
    Cout = w2.shape[1]
    out_dtype = x.dtype
    out_itemsize = jnp.dtype(out_dtype).itemsize

    # bf16 operands for both MXU passes; biases stay f32 (added in f32).
    x_lp = x.astype(jnp.bfloat16)
    w1_lp = w1.astype(jnp.bfloat16)
    w2_lp = w2.astype(jnp.bfloat16)
    b1_f32 = b1.astype(jnp.float32).reshape(1, Hd)
    b2_f32 = b2.astype(jnp.float32).reshape(1, Cout)

    # Row tiling: cap TM so the "parallel" grid has >= min_grid_steps steps
    # (2 TensorCores on v7x need >= 2 steps each), keep TM a multiple of 128
    # (MXU friendly), never exceed block_rows (bounds the (TM, H) intermediate).
    tm = min(block_rows, N)
    if N >= min_grid_steps * 128:
        cap = ((pl.cdiv(N, min_grid_steps) + 127) // 128) * 128
        tm = min(tm, max(128, cap))
    grid = (pl.cdiv(N, tm),)

    # Advisory cost hint (bytes reflect the mixed bf16/f32 dtypes).
    flops = 2 * N * Cin * Hd + 2 * N * Hd * Cout
    bytes_accessed = (x_lp.size * 2 + w1_lp.size * 2 + w2_lp.size * 2
                      + b1_f32.size * 4 + b2_f32.size * 4
                      + N * Cout * out_itemsize)
    cost = pl.CostEstimate(flops=flops,
                           transcendentals=2 * N * Hd,   # exp + rcp per element
                           bytes_accessed=bytes_accessed)

    # Explicit VMEM budget: resident weights (worst case double-buffered) +
    # double-buffered x/out tiles + f32 intermediate + bf16 copy, ~25% headroom.
    resident = 2 * (w1_lp.size * 2 + w2_lp.size * 2
                    + b1_f32.size * 4 + b2_f32.size * 4)
    streamed = 2 * tm * Cin * 2 + 2 * tm * Cout * out_itemsize
    interm = tm * Hd * (4 + 2)
    vmem_limit = int(1.25 * (resident + streamed + interm))
    vmem_limit = min(max(vmem_limit, 4 * 1024 * 1024), 64 * 1024 * 1024)

    def _build(single_buffer_weights):
        if single_buffer_weights:
            def w_spec(shape):
                return pl.BlockSpec(shape, lambda i: (0, 0),
                                    pipeline_mode=pl.Buffered(1))
        else:
            def w_spec(shape):
                return pl.BlockSpec(shape, lambda i: (0, 0))

        in_specs = [
            pl.BlockSpec((tm, Cin), lambda i: (i, 0)),   # x: tiled over rows
            w_spec((Cin, Hd)),                           # w1: VMEM-resident
            w_spec((1, Hd)),                             # b1: VMEM-resident
            w_spec((Hd, Cout)),                          # w2: VMEM-resident
            w_spec((1, Cout)),                           # b2: VMEM-resident
        ]
        return pl.pallas_call(
            _mlp_kernel,
            out_shape=jax.ShapeDtypeStruct((N, Cout), out_dtype),
            grid=grid,
            in_specs=in_specs,
            out_specs=pl.BlockSpec((tm, Cout), lambda i: (i, 0)),  # lane-dense
            compiler_params=pltpu.CompilerParams(
                dimension_semantics=("parallel",),
                vmem_limit_bytes=vmem_limit),
            cost_estimate=cost,
        )

    args = (x_lp, w1_lp, b1_f32, w2_lp, b2_f32)
    try:
        # Preferred: single-buffer the grid-invariant weights (halves their
        # VMEM footprint; they are never re-fetched).
        return _build(True)(*args)
    except Exception:
        # Fallback if pl.Buffered(1) is rejected by this jax/Mosaic version:
        # identical kernel with default double-buffered pipelining.
        return _build(False)(*args)


# ----------------------------------------------------------------------------
# pure-JAX reference (mirrors torch Linear -> GELU(exact) -> Linear, with the
# same bf16 operand rounding the kernel applies so tolerances stay tight)
# ----------------------------------------------------------------------------
def reference_mlp(x, w1, b1, w2, b2):
    xb = x.astype(jnp.bfloat16).astype(jnp.float32)
    w1b = w1.astype(jnp.bfloat16).astype(jnp.float32)
    w2b = w2.astype(jnp.bfloat16).astype(jnp.float32)
    h = jnp.dot(xb, w1b, precision=jax.lax.Precision.HIGHEST) + b1
    h = jax.nn.gelu(h, approximate=False)          # exact erf GELU == nn.GELU()
    h = h.astype(jnp.bfloat16).astype(jnp.float32)
    return jnp.dot(h, w2b, precision=jax.lax.Precision.HIGHEST) + b2


if __name__ == "__main__":
    # small, lane-aligned config: N=512 points, in=out=128, hidden=256
    N, Cin, Hd, Cout = 512, 128, 256, 128

    key = jax.random.PRNGKey(0)
    kx, kw1, kb1, kw2, kb2 = jax.random.split(key, 5)

    x = jax.random.normal(kx, (N, Cin), dtype=jnp.float32)
    w1 = jax.random.normal(kw1, (Cin, Hd), jnp.float32) / math.sqrt(Cin)
    b1 = jax.random.normal(kb1, (Hd,), jnp.float32) * 0.02
    w2 = jax.random.normal(kw2, (Hd, Cout), jnp.float32) / math.sqrt(Hd)
    b2 = jax.random.normal(kb2, (Cout,), jnp.float32) * 0.02

    out = mlp_forward(x, w1, b1, w2, b2)
    out = jax.block_until_ready(out)

    ref = jax.block_until_ready(reference_mlp(x, w1, b1, w2, b2))

    np.testing.assert_allclose(np.asarray(out, dtype=np.float32),
                               np.asarray(ref, dtype=np.float32),
                               rtol=1e-2, atol=1e-2)
    assert out.shape == (N, Cout)
    print("KERNEL_OK")
</pallas_src>

<mosaic_0001>
module attributes {stable_mosaic.version = 11 : i64} {
  func.func @_mlp_kernel(%arg0: i32, %arg1: memref<128x128xbf16, #tpu.memory_space<vmem>>, %arg2: memref<128x256xbf16, #tpu.memory_space<vmem>>, %arg3: memref<1x256xf32, #tpu.memory_space<vmem>>, %arg4: memref<256x128xbf16, #tpu.memory_space<vmem>>, %arg5: memref<1x128xf32, #tpu.memory_space<vmem>>, %arg6: memref<128x128xf32, #tpu.memory_space<vmem>>) attributes {dimension_semantics = [#tpu.dimension_semantics<parallel>], iteration_bounds = array<i64: 4>, scalar_prefetch = 0 : i64, scratch_operands = 0 : i64, tpu.core_type = #tpu.core_type<tc>, window_params = [{transform_indices = @transform_0, window_bounds = array<i64: 128, 128>}, {pipeline_mode = #tpu.pipeline_mode<synchronous>, transform_indices = @transform_1, window_bounds = array<i64: 128, 256>}, {pipeline_mode = #tpu.pipeline_mode<synchronous>, transform_indices = @transform_2, window_bounds = array<i64: 1, 256>}, {pipeline_mode = #tpu.pipeline_mode<synchronous>, transform_indices = @transform_3, window_bounds = array<i64: 256, 128>}, {pipeline_mode = #tpu.pipeline_mode<synchronous>, transform_indices = @transform_4, window_bounds = array<i64: 1, 128>}, {transform_indices = @transform_5, window_bounds = array<i64: 128, 128>}]} {
    %c0 = arith.constant 0 : index
    %c0_0 = arith.constant 0 : index
    %0 = vector.load %arg1[%c0, %c0_0] : memref<128x128xbf16, #tpu.memory_space<vmem>>, vector<128x128xbf16>
    %c0_1 = arith.constant 0 : index
    %c0_2 = arith.constant 0 : index
    %1 = vector.load %arg2[%c0_1, %c0_2] : memref<128x256xbf16, #tpu.memory_space<vmem>>, vector<128x256xbf16>
    %cst = arith.constant dense<0.000000e+00> : vector<128x256xf32>
    %2 = tpu.matmul %0, %1, %cst {dimension_numbers = #tpu.dot_dimension_numbers<[1], [0], [0], [1], [0, 0, 1, 1], [], []>} : vector<128x128xbf16>, vector<128x256xbf16>, vector<128x256xf32> -> vector<128x256xf32>
    %c0_3 = arith.constant 0 : index
    %c0_4 = arith.constant 0 : index
    %3 = vector.load %arg3[%c0_3, %c0_4] : memref<1x256xf32, #tpu.memory_space<vmem>>, vector<1x256xf32>
    %4 = vector.broadcast %3 : vector<1x256xf32> to vector<128x256xf32>
    %5 = arith.addf %2, %4 : vector<128x256xf32>
    %cst_5 = arith.constant 5.000000e-01 : f32
    %6 = vector.broadcast %cst_5 : f32 to vector<128x256xf32>
    %7 = arith.mulf %5, %6 : vector<128x256xf32>
    %cst_6 = arith.constant 0.707106769 : f32
    %8 = vector.broadcast %cst_6 : f32 to vector<128x256xf32>
    %9 = arith.mulf %5, %8 : vector<128x256xf32>
    %cst_7 = arith.constant 0.000000e+00 : f32
    %10 = vector.broadcast %cst_7 : f32 to vector<128x256xf32>
    %11 = arith.cmpf oge, %9, %10 : vector<128x256xf32>
    %cst_8 = arith.constant 1.000000e+00 : f32
    %cst_9 = arith.constant -1.000000e+00 : f32
    %12 = vector.broadcast %cst_8 : f32 to vector<128x256xf32>
    %13 = vector.broadcast %cst_9 : f32 to vector<128x256xf32>
    %14 = arith.select %11, %12, %13 : vector<128x256xi1>, vector<128x256xf32>
    %15 = math.absf %9 : vector<128x256xf32>
    %cst_10 = arith.constant 0.327591091 : f32
    %16 = vector.broadcast %cst_10 : f32 to vector<128x256xf32>
    %17 = arith.mulf %16, %15 : vector<128x256xf32>
    %cst_11 = arith.constant 1.000000e+00 : f32
    %18 = vector.broadcast %cst_11 : f32 to vector<128x256xf32>
    %19 = arith.addf %18, %17 : vector<128x256xf32>
    %20 = tpu.reciprocal %19 {approx = true} : vector<128x256xf32> -> vector<128x256xf32>
    %21 = arith.mulf %19, %20 : vector<128x256xf32>
    %cst_12 = arith.constant 2.000000e+00 : f32
    %22 = vector.broadcast %cst_12 : f32 to vector<128x256xf32>
    %23 = arith.subf %22, %21 : vector<128x256xf32>
    %24 = arith.mulf %20, %23 : vector<128x256xf32>
    %cst_13 = arith.constant 1.06140542 : f32
    %25 = vector.broadcast %cst_13 : f32 to vector<128x256xf32>
    %26 = arith.mulf %25, %24 : vector<128x256xf32>
    %cst_14 = arith.constant -1.45315206 : f32
    %27 = vector.broadcast %cst_14 : f32 to vector<128x256xf32>
    %28 = arith.addf %26, %27 : vector<128x256xf32>
    %29 = arith.mulf %28, %24 : vector<128x256xf32>
    %cst_15 = arith.constant 1.42141378 : f32
    %30 = vector.broadcast %cst_15 : f32 to vector<128x256xf32>
    %31 = arith.addf %29, %30 : vector<128x256xf32>
    %32 = arith.mulf %31, %24 : vector<128x256xf32>
    %cst_16 = arith.constant -0.284496725 : f32
    %33 = vector.broadcast %cst_16 : f32 to vector<128x256xf32>
    %34 = arith.addf %32, %33 : vector<128x256xf32>
    %35 = arith.mulf %34, %24 : vector<128x256xf32>
    %cst_17 = arith.constant 0.254829586 : f32
    %36 = vector.broadcast %cst_17 : f32 to vector<128x256xf32>
    %37 = arith.addf %35, %36 : vector<128x256xf32>
    %38 = arith.mulf %37, %24 : vector<128x256xf32>
    %cst_18 = arith.constant 0.000000e+00 : f32
    %39 = vector.broadcast %cst_18 : f32 to vector<128x256xf32>
    %40 = arith.subf %39, %15 : vector<128x256xf32>
    %41 = arith.mulf %40, %15 : vector<128x256xf32>
    %42 = math.exp %41 : vector<128x256xf32>
    %43 = arith.mulf %38, %42 : vector<128x256xf32>
    %cst_19 = arith.constant 1.000000e+00 : f32
    %44 = vector.broadcast %cst_19 : f32 to vector<128x256xf32>
    %45 = arith.subf %44, %43 : vector<128x256xf32>
    %46 = arith.mulf %14, %45 : vector<128x256xf32>
    %cst_20 = arith.constant 1.000000e+00 : f32
    %47 = vector.broadcast %cst_20 : f32 to vector<128x256xf32>
    %48 = arith.addf %47, %46 : vector<128x256xf32>
    %49 = arith.mulf %7, %48 : vector<128x256xf32>
    %50 = arith.truncf %49 : vector<128x256xf32> to vector<128x256xbf16>
    %c0_21 = arith.constant 0 : index
    %c0_22 = arith.constant 0 : index
    %51 = vector.load %arg4[%c0_21, %c0_22] : memref<256x128xbf16, #tpu.memory_space<vmem>>, vector<256x128xbf16>
    %cst_23 = arith.constant dense<0.000000e+00> : vector<128x128xf32>
    %52 = tpu.matmul %50, %51, %cst_23 {dimension_numbers = #tpu.dot_dimension_numbers<[1], [0], [0], [1], [0, 0, 1, 1], [], []>} : vector<128x256xbf16>, vector<256x128xbf16>, vector<128x128xf32> -> vector<128x128xf32>
    %c0_24 = arith.constant 0 : index
    %c0_25 = arith.constant 0 : index
    %53 = vector.load %arg5[%c0_24, %c0_25] : memref<1x128xf32, #tpu.memory_space<vmem>>, vector<1x128xf32>
    %54 = vector.broadcast %53 : vector<1x128xf32> to vector<128x128xf32>
    %55 = arith.addf %52, %54 : vector<128x128xf32>
    %c0_26 = arith.constant 0 : index
    %c0_27 = arith.constant 0 : index
    %56 = vector.load %arg6[%c0_26, %c0_27] : memref<128x128xf32, #tpu.memory_space<vmem>>, vector<128x128xf32>
    tpu.vector_store %arg6[%c0_26, %c0_27], %55 {strides = array<i32>} : memref<128x128xf32, #tpu.memory_space<vmem>>, vector<128x128xf32>,
    return
  }
  func.func @transform_0(%arg0: i32) -> (i32, i32) {
    %c0_i32 = arith.constant 0 : i32
    %c0_i32_0 = arith.constant 0 : i32
    return %arg0, %c0_i32 : i32, i32
  }
  func.func @transform_1(%arg0: i32) -> (i32, i32) {
    %c0_i32 = arith.constant 0 : i32
    %c0_i32_0 = arith.constant 0 : i32
    %c0_i32_1 = arith.constant 0 : i32
    return %c0_i32, %c0_i32_0 : i32, i32
  }
  func.func @transform_2(%arg0: i32) -> (i32, i32) {
    %c0_i32 = arith.constant 0 : i32
    %c0_i32_0 = arith.constant 0 : i32
    %c0_i32_1 = arith.constant 0 : i32
    return %c0_i32, %c0_i32_0 : i32, i32
  }
  func.func @transform_3(%arg0: i32) -> (i32, i32) {
    %c0_i32 = arith.constant 0 : i32
    %c0_i32_0 = arith.constant 0 : i32
    %c0_i32_1 = arith.constant 0 : i32
    return %c0_i32, %c0_i32_0 : i32, i32
  }
  func.func @transform_4(%arg0: i32) -> (i32, i32) {
    %c0_i32 = arith.constant 0 : i32
    %c0_i32_0 = arith.constant 0 : i32
    %c0_i32_1 = arith.constant 0 : i32
    return %c0_i32, %c0_i32_0 : i32, i32
  }
  func.func @transform_5(%arg0: i32) -> (i32, i32) {
    %c0_i32 = arith.constant 0 : i32
    %c0_i32_0 = arith.constant 0 : i32
    return %arg0, %c0_i32 : i32, i32
  }
}

module attributes {stable_mosaic.version = 11 : i64} {
  func.func @_mlp_kernel(%arg0: i32, %arg1: memref<128x128xbf16, #tpu.memory_space<vmem>>, %arg2: memref<128x256xbf16, #tpu.memory_space<vmem>>, %arg3: memref<1x256xf32, #tpu.memory_space<vmem>>, %arg4: memref<256x128xbf16, #tpu.memory_space<vmem>>, %arg5: memref<1x128xf32, #tpu.memory_space<vmem>>, %arg6: memref<128x128xf32, #tpu.memory_space<vmem>>) attributes {dimension_semantics = [#tpu.dimension_semantics<parallel>], iteration_bounds = array<i64: 4>, scalar_prefetch = 0 : i64, scratch_operands = 0 : i64, tpu.core_type = #tpu.core_type<tc>, window_params = [{transform_indices = @transform_0, window_bounds = array<i64: 128, 128>}, {pipeline_mode = #tpu.pipeline_mode<synchronous>, transform_indices = @transform_1, window_bounds = array<i64: 128, 256>}, {pipeline_mode = #tpu.pipeline_mode<synchronous>, transform_indices = @transform_2, window_bounds = array<i64: 1, 256>}, {pipeline_mode = #tpu.pipeline_mode<synchronous>, transform_indices = @transform_3, window_bounds = array<i64: 256, 128>}, {pipeline_mode = #tpu.pipeline_mode<synchronous>, transform_indices = @transform_4, window_bounds = array<i64: 1, 128>}, {transform_indices = @transform_5, window_bounds = array<i64: 128, 128>}]} {
    %c0 = arith.constant 0 : index
    %c0_0 = arith.constant 0 : index
    %0 = vector.load %arg1[%c0, %c0_0] : memref<128x128xbf16, #tpu.memory_space<vmem>>, vector<128x128xbf16>
    %c0_1 = arith.constant 0 : index
    %c0_2 = arith.constant 0 : index
    %1 = vector.load %arg2[%c0_1, %c0_2] : memref<128x256xbf16, #tpu.memory_space<vmem>>, vector<128x256xbf16>
    %cst = arith.constant dense<0.000000e+00> : vector<128x256xf32>
    %2 = tpu.matmul %0, %1, %cst {dimension_numbers = #tpu.dot_dimension_numbers<[1], [0], [0], [1], [0, 0, 1, 1], [], []>} : vector<128x128xbf16>, vector<128x256xbf16>, vector<128x256xf32> -> vector<128x256xf32>
    %c0_3 = arith.constant 0 : index
    %c0_4 = arith.constant 0 : index
    %3 = vector.load %arg3[%c0_3, %c0_4] : memref<1x256xf32, #tpu.memory_space<vmem>>, vector<1x256xf32>
    %4 = vector.broadcast %3 : vector<1x256xf32> to vector<128x256xf32>
    %5 = arith.addf %2, %4 : vector<128x256xf32>
    %cst_5 = arith.constant 5.000000e-01 : f32
    %6 = vector.broadcast %cst_5 : f32 to vector<128x256xf32>
    %7 = arith.mulf %5, %6 : vector<128x256xf32>
    %cst_6 = arith.constant 0.707106769 : f32
    %8 = vector.broadcast %cst_6 : f32 to vector<128x256xf32>
    %9 = arith.mulf %5, %8 : vector<128x256xf32>
    %cst_7 = arith.constant 0.000000e+00 : f32
    %10 = vector.broadcast %cst_7 : f32 to vector<128x256xf32>
    %11 = arith.cmpf oge, %9, %10 : vector<128x256xf32>
    %cst_8 = arith.constant 1.000000e+00 : f32
    %cst_9 = arith.constant -1.000000e+00 : f32
    %12 = vector.broadcast %cst_8 : f32 to vector<128x256xf32>
    %13 = vector.broadcast %cst_9 : f32 to vector<128x256xf32>
    %14 = arith.select %11, %12, %13 : vector<128x256xi1>, vector<128x256xf32>
    %15 = math.absf %9 : vector<128x256xf32>
    %cst_10 = arith.constant 0.327591091 : f32
    %16 = vector.broadcast %cst_10 : f32 to vector<128x256xf32>
    %17 = arith.mulf %16, %15 : vector<128x256xf32>
    %cst_11 = arith.constant 1.000000e+00 : f32
    %18 = vector.broadcast %cst_11 : f32 to vector<128x256xf32>
    %19 = arith.addf %18, %17 : vector<128x256xf32>
    %20 = tpu.reciprocal %19 {approx = true} : vector<128x256xf32> -> vector<128x256xf32>
    %21 = arith.mulf %19, %20 : vector<128x256xf32>
    %cst_12 = arith.constant 2.000000e+00 : f32
    %22 = vector.broadcast %cst_12 : f32 to vector<128x256xf32>
    %23 = arith.subf %22, %21 : vector<128x256xf32>
    %24 = arith.mulf %20, %23 : vector<128x256xf32>
    %cst_13 = arith.constant 1.06140542 : f32
    %25 = vector.broadcast %cst_13 : f32 to vector<128x256xf32>
    %26 = arith.mulf %25, %24 : vector<128x256xf32>
    %cst_14 = arith.constant -1.45315206 : f32
    %27 = vector.broadcast %cst_14 : f32 to vector<128x256xf32>
    %28 = arith.addf %26, %27 : vector<128x256xf32>
    %29 = arith.mulf %28, %24 : vector<128x256xf32>
    %cst_15 = arith.constant 1.42141378 : f32
    %30 = vector.broadcast %cst_15 : f32 to vector<128x256xf32>
    %31 = arith.addf %29, %30 : vector<128x256xf32>
    %32 = arith.mulf %31, %24 : vector<128x256xf32>
    %cst_16 = arith.constant -0.284496725 : f32
    %33 = vector.broadcast %cst_16 : f32 to vector<128x256xf32>
    %34 = arith.addf %32, %33 : vector<128x256xf32>
    %35 = arith.mulf %34, %24 : vector<128x256xf32>
    %cst_17 = arith.constant 0.254829586 : f32
    %36 = vector.broadcast %cst_17 : f32 to vector<128x256xf32>
    %37 = arith.addf %35, %36 : vector<128x256xf32>
    %38 = arith.mulf %37, %24 : vector<128x256xf32>
    %cst_18 = arith.constant 0.000000e+00 : f32
    %39 = vector.broadcast %cst_18 : f32 to vector<128x256xf32>
    %40 = arith.subf %39, %15 : vector<128x256xf32>
    %41 = arith.mulf %40, %15 : vector<128x256xf32>
    %42 = math.exp %41 : vector<128x256xf32>
    %43 = arith.mulf %38, %42 : vector<128x256xf32>
    %cst_19 = arith.constant 1.000000e+00 : f32
    %44 = vector.broadcast %cst_19 : f32 to vector<128x256xf32>
    %45 = arith.subf %44, %43 : vector<128x256xf32>
    %46 = arith.mulf %14, %45 : vector<128x256xf32>
    %cst_20 = arith.constant 1.000000e+00 : f32
    %47 = vector.broadcast %cst_20 : f32 to vector<128x256xf32>
    %48 = arith.addf %47, %46 : vector<128x256xf32>
    %49 = arith.mulf %7, %48 : vector<128x256xf32>
    %50 = arith.truncf %49 : vector<128x256xf32> to vector<128x256xbf16>
    %c0_21 = arith.constant 0 : index
    %c0_22 = arith.constant 0 : index
    %51 = vector.load %arg4[%c0_21, %c0_22] : memref<256x128xbf16, #tpu.memory_space<vmem>>, vector<256x128xbf16>
    %cst_23 = arith.constant dense<0.000000e+00> : vector<128x128xf32>
    %52 = tpu.matmul %50, %51, %cst_23 {dimension_numbers = #tpu.dot_dimension_numbers<[1], [0], [0], [1], [0, 0, 1, 1], [], []>} : vector<128x256xbf16>, vector<256x128xbf16>, vector<128x128xf32> -> vector<128x128xf32>
    %c0_24 = arith.constant 0 : index
    %c0_25 = arith.constant 0 : index
    %53 = vector.load %arg5[%c0_24, %c0_25] : memref<1x128xf32, #tpu.memory_space<vmem>>, vector<1x128xf32>
    %54 = vector.broadcast %53 : vector<1x128xf32> to vector<128x128xf32>
    %55 = arith.addf %52, %54 : vector<128x128xf32>
    %c0_26 = arith.constant 0 : index
    %c0_27 = arith.constant 0 : index
    %56 = vector.load %arg6[%c0_26, %c0_27] : memref<128x128xf32, #tpu.memory_space<vmem>>, vector<128x128xf32>
    tpu.vector_store %arg6[%c0_26, %c0_27], %55 {strides = array<i32>} : memref<128x128xf32, #tpu.memory_space<vmem>>, vector<128x128xf32>,
    return
  }
  func.func @transform_0(%arg0: i32) -> (i32, i32) {
    %c0_i32 = arith.constant 0 : i32
    %c0_i32_0 = arith.constant 0 : i32
    return %arg0, %c0_i32 : i32, i32
  }
  func.func @transform_1(%arg0: i32) -> (i32, i32) {
    %c0_i32 = arith.constant 0 : i32
    %c0_i32_0 = arith.constant 0 : i32
    %c0_i32_1 = arith.constant 0 : i32
    return %c0_i32, %c0_i32_0 : i32, i32
  }
  func.func @transform_2(%arg0: i32) -> (i32, i32) {
    %c0_i32 = arith.constant 0 : i32
    %c0_i32_0 = arith.constant 0 : i32
    %c0_i32_1 = arith.constant 0 : i32
    return %c0_i32, %c0_i32_0 : i32, i32
  }
  func.func @transform_3(%arg0: i32) -> (i32, i32) {
    %c0_i32 = arith.constant 0 : i32
    %c0_i32_0 = arith.constant 0 : i32
    %c0_i32_1 = arith.constant 0 : i32
    return %c0_i32, %c0_i32_0 : i32, i32
  }
  func.func @transform_4(%arg0: i32) -> (i32, i32) {
    %c0_i32 = arith.constant 0 : i32
    %c0_i32_0 = arith.constant 0 : i32
    %c0_i32_1 = arith.constant 0 : i32
    return %c0_i32, %c0_i32_0 : i32, i32
  }
  func.func @transform_5(%arg0: i32) -> (i32, i32) {
    %c0_i32 = arith.constant 0 : i32
    %c0_i32_0 = arith.constant 0 : i32
    return %arg0, %c0_i32 : i32, i32
  }
}

</mosaic_0001>

<llo_original>
// kernel: tpu_custom_call.1
$region0: #{tpu_custom_call.1}
  #allocation0 [shape = 'u32[]', space=smem, size = 0x4, offset = 0x4, fixed_abs, tag = 'smem constant byte address 0x4 - core index']
  #allocation1 [shape = 'u32[144,128]{1,0:T(1,128)}', space=vmem, size = 0x12000, scoped, tag = 'internal scratch']
  %s0 = inlined_call_operand.hbm [shape: bf16[512,128], index: 0, kind: input, shape index: {}]
  %s1 = inlined_call_operand.hbm [shape: bf16[128,256], index: 1, kind: input, shape index: {}]
  %s2 = inlined_call_operand.vmem [shape: f32[1,256], index: 2, kind: input, shape index: {}]
  %s3 = inlined_call_operand.hbm [shape: bf16[256,128], index: 3, kind: input, shape index: {}]
  %s4 = inlined_call_operand.vmem [shape: f32[1,128], index: 4, kind: input, shape index: {}]
  %s5 = inlined_call_operand.hbm [shape: f32[512,128], index: 5, kind: output, shape index: {}]
  %s6 = sld [smem:[#allocation0]]
  $region65: #{tpu_custom_call.1} parent=0
    _
  %s8 = ssub.s32 1, %s6
  %s9 = scalar_select 0, %s8, %s6
  $region1: #{tpu_custom_call.1} parent=0
    #allocation2 [shape = 'u8[65536]{0}', space=vmem, size = 0x10000, scoped, tag = 'input window, operand 0']
    #allocation3 [shape = 's32[2]{0}', space=sflag, size = 0x8, scoped, tag = 'scoped memory for tpu_custom_call.1']
    #allocation4 [shape = 's32[2]{0}', space=sflag, size = 0x8, scoped, tag = 'scoped memory for tpu_custom_call.1']
    #allocation5 [shape = 'u8[65536]{0}', space=vmem, size = 0x10000, scoped, tag = 'input window, operand 1, single buffered']
    #allocation6 [shape = 's32[1]{0}', space=sflag, size = 0x4, scoped, tag = 'scoped memory for tpu_custom_call.1']
    #allocation7 [shape = 'u8[65536]{0}', space=vmem, size = 0x10000, scoped, tag = 'input window, operand 3, single buffered']
    #allocation8 [shape = 'u8[131072]{0}', space=vmem, size = 0x20000, scoped, tag = 'output window, operand 0']
    %10 = vsyncpa [#allocation3], 0
    %s11 = scalar_lea.sflag [#allocation3], 1
    %12 = vsyncpa %s11, 0
    %13 = vsyncpa [#allocation6], 0
    %14 = vsyncpa [#allocation4], 0
    %s15 = scalar_lea.sflag [#allocation4], 1
    %16 = vsyncpa %s15, 0
    loop: start=0, step=1, limit=6
    $region2: #{tpu_custom_call.1} parent=1 // loop_pre_header
      _
    $region3: #{tpu_custom_call.1} parent=1 // loop_header
      %s18 = sphi 0, %s22
      %p19 = scmp.ge.s32.totalorder %s18, 6
      %s28 = sphi 0, %s30
      %s31 = sphi 0, %s28
      %s32 = sphi 0, %s31
      %s48 = sphi 0, %s32
      %s52 = sphi 0, %s52
      %s54 = sphi 0, %s52
      %s55 = sphi 0, %s54
      %s69 = sphi 0, %s55
      %s73 = sphi 0, %s73
      %s75 = sphi 0, %s73
      %s76 = sphi 0, %s75
      %s90 = sphi 0, %s76
      %s94 = sphi 0, %s94
      %s96 = sphi 0, %s94
      %s97 = sphi 0, %s96
      %s111 = sphi 0, %s97
      %s115 = sphi 0, %s115
      %s117 = sphi 0, %s115
      %s118 = sphi 0, %s117
      %s132 = sphi 0, %s118
      %s138 = sphi 0, %s140
      %s141 = sphi 0, %s138
      %s142 = sphi 0, %s141
      %s158 = sphi 0, %s142
    $region4: #{tpu_custom_call.1} parent=1 // loop_header_branch
      %21 = sbr.rel (%p19) target = $region8
    $region5: #{tpu_custom_call.1} parent=1 // loop_body
      %s23 = ssub.s32 %s18, 1
      %s24 = ssub.s32 %s18, 2
      %s25 = sadd.s32 %s18, 1
      %s26 = ssub.s32 %s18, %s25
      %p27 = scmp.eq.s32.totalorder %s26, 0
      %s29 = sadd.s32 %s28, 1
      %s30 = scalar_select %p27, %s28, %s29
      %p33 = pneg %p27
      %p34 = scmp.eq.s32.totalorder %s18, 3
      %p35 = por %p33, %p34
      %p36 = scmp.ne.s32.totalorder %s28, %s31
      %p37 = scmp.eq.s32.totalorder %s18, 0
      %p38 = por %p36, %p37
      %p39 = scmp.ne.s32.totalorder %s28, %s31
      %p40 = scmp.eq.s32.totalorder %s23, 3
      %p41 = por %p39, %p40
      %p42 = scmp.ne.s32.totalorder %s31, %s32
      %p43 = scmp.eq.s32.totalorder %s23, 0
      %p44 = por %p42, %p43
      %p45 = scmp.ne.s32.totalorder %s31, %s32
      %p46 = scmp.eq.s32.totalorder %s24, 3
      %p47 = por %p45, %p46
      %p49 = scmp.ne.s32.totalorder %s32, %s48
      %p50 = scmp.eq.s32.totalorder %s24, 0
      %p51 = por %p49, %p50
      %s53 = sadd.s32 %s52, 1
      %p56 = scmp.eq.s32.totalorder %s18, 3
      %p57 = scmp.ne.s32.totalorder %s52, %s54
      %p58 = scmp.eq.s32.totalorder %s18, 0
      %p59 = por %p57, %p58
      %p60 = scmp.ne.s32.totalorder %s52, %s54
      %p61 = scmp.eq.s32.totalorder %s23, 3
      %p62 = por %p60, %p61
      %p63 = scmp.ne.s32.totalorder %s54, %s55
      %p64 = scmp.eq.s32.totalorder %s23, 0
      %p65 = por %p63, %p64
      %p66 = scmp.ne.s32.totalorder %s54, %s55
      %p67 = scmp.eq.s32.totalorder %s24, 3
      %p68 = por %p66, %p67
      %p70 = scmp.ne.s32.totalorder %s55, %s69
      %p71 = scmp.eq.s32.totalorder %s24, 0
      %p72 = por %p70, %p71
      %s74 = sadd.s32 %s73, 1
      %p77 = scmp.eq.s32.totalorder %s18, 3
      %p78 = scmp.ne.s32.totalorder %s73, %s75
      %p79 = scmp.eq.s32.totalorder %s18, 0
      %p80 = por %p78, %p79
      %p81 = scmp.ne.s32.totalorder %s73, %s75
      %p82 = scmp.eq.s32.totalorder %s23, 3
      %p83 = por %p81, %p82
      %p84 = scmp.ne.s32.totalorder %s75, %s76
      %p85 = scmp.eq.s32.totalorder %s23, 0
      %p86 = por %p84, %p85
      %p87 = scmp.ne.s32.totalorder %s75, %s76
      %p88 = scmp.eq.s32.totalorder %s24, 3
      %p89 = por %p87, %p88
      %p91 = scmp.ne.s32.totalorder %s76, %s90
      %p92 = scmp.eq.s32.totalorder %s24, 0
      %p93 = por %p91, %p92
      %s95 = sadd.s32 %s94, 1
      %p98 = scmp.eq.s32.totalorder %s18, 3
      %p99 = scmp.ne.s32.totalorder %s94, %s96
      %p100 = scmp.eq.s32.totalorder %s18, 0
      %p101 = por %p99, %p100
      %p102 = scmp.ne.s32.totalorder %s94, %s96
      %p103 = scmp.eq.s32.totalorder %s23, 3
      %p104 = por %p102, %p103
      %p105 = scmp.ne.s32.totalorder %s96, %s97
      %p106 = scmp.eq.s32.totalorder %s23, 0
      %p107 = por %p105, %p106
      %p108 = scmp.ne.s32.totalorder %s96, %s97
      %p109 = scmp.eq.s32.totalorder %s24, 3
      %p110 = por %p108, %p109
      %p112 = scmp.ne.s32.totalorder %s97, %s111
      %p113 = scmp.eq.s32.totalorder %s24, 0
      %p114 = por %p112, %p113
      %s116 = sadd.s32 %s115, 1
      %p119 = scmp.eq.s32.totalorder %s18, 3
      %p120 = scmp.ne.s32.totalorder %s115, %s117
      %p121 = scmp.eq.s32.totalorder %s18, 0
      %p122 = por %p120, %p121
      %p123 = scmp.ne.s32.totalorder %s115, %s117
      %p124 = scmp.eq.s32.totalorder %s23, 3
      %p125 = por %p123, %p124
      %p126 = scmp.ne.s32.totalorder %s117, %s118
      %p127 = scmp.eq.s32.totalorder %s23, 0
      %p128 = por %p126, %p127
      %p129 = scmp.ne.s32.totalorder %s117, %s118
      %p130 = scmp.eq.s32.totalorder %s24, 3
      %p131 = por %p129, %p130
      %p133 = scmp.ne.s32.totalorder %s118, %s132
      %p134 = scmp.eq.s32.totalorder %s24, 0
      %p135 = por %p133, %p134
      %s136 = ssub.s32 %s18, %s25
      %p137 = scmp.eq.s32.totalorder %s136, 0
      %s139 = sadd.s32 %s138, 1
      %s140 = scalar_select %p137, %s138, %s139
      %p143 = pneg %p137
      %p144 = scmp.eq.s32.totalorder %s18, 3
      %p145 = por %p143, %p144
      %p146 = scmp.ne.s32.totalorder %s138, %s141
      %p147 = scmp.eq.s32.totalorder %s18, 0
      %p148 = por %p146, %p147
      %p149 = scmp.ne.s32.totalorder %s138, %s141
      %p150 = scmp.eq.s32.totalorder %s23, 3
      %p151 = por %p149, %p150
      %p152 = scmp.ne.s32.totalorder %s141, %s142
      %p153 = scmp.eq.s32.totalorder %s23, 0
      %p154 = por %p152, %p153
      %p155 = scmp.ne.s32.totalorder %s141, %s142
      %p156 = scmp.eq.s32.totalorder %s24, 3
      %p157 = por %p155, %p156
      %p159 = scmp.ne.s32.totalorder %s142, %s158
      %p160 = scmp.eq.s32.totalorder %s24, 0
      %p161 = por %p159, %p160
      %p162 = scmp.le.s32.totalorder 1, %s18
      %p163 = scmp.lt.s32.totalorder %s18, 5
      %p164 = pnand %p162, %p163
      %p165 = pneg %p164
      // Predicated region
      $region9: #{tpu_custom_call.1} parent=5 // pred_check
        _
      $region10: #{tpu_custom_call.1} parent=5 // pred_check_branch
        %167 = sbr.rel (%p164) target = $region12
      $region11: #{tpu_custom_call.1} parent=5 // pred_region
        %s168 = ssub.s32 %s18, 1
        // Predicated region
        $region13: #{tpu_custom_call.1} parent=11 // pred_check
          %p169 = pneg %p65
        $region14: #{tpu_custom_call.1} parent=11 // pred_check_branch
          %171 = sbr.rel (%p169) target = $region16
        $region15: #{tpu_custom_call.1} parent=11 // pred_region
          %s173 = ssub.s32 2048, 2048
          %174 = vsyncadd [#allocation6], %s173
          %s175 = sshll.u32 [#allocation5], 4
          %s176 = int_to_ptr.vmem [resolvable:$true] %s175
          %181 = dma.hbm_to_vmem [thread:$0]  %s1, 2048, %s176, [#allocation6], 128, 128, 8
        $region16: #{tpu_custom_call.1} parent=11 // pred_fallthru
          _
        // Predicated region
        $region17: #{tpu_custom_call.1} parent=11 // pred_check
          %p182 = pneg %p86
        $region18: #{tpu_custom_call.1} parent=11 // pred_check_branch
          %184 = sbr.rel (%p182) target = $region20
        $region19: #{tpu_custom_call.1} parent=11 // pred_region
          _
        $region20: #{tpu_custom_call.1} parent=11 // pred_fallthru
          _
        // Predicated region
        $region21: #{tpu_custom_call.1} parent=11 // pred_check
          %p185 = pneg %p107
        $region22: #{tpu_custom_call.1} parent=11 // pred_check_branch
          %187 = sbr.rel (%p185) target = $region24
        $region23: #{tpu_custom_call.1} parent=11 // pred_region
          %s189 = ssub.s32 2048, 2048
          %190 = vsyncadd [#allocation6], %s189
          %s191 = sshll.u32 [#allocation7], 4
          %s192 = int_to_ptr.vmem [resolvable:$true] %s191
          %197 = dma.hbm_to_vmem [thread:$0]  %s3, 2048, %s192, [#allocation6], 64, 64, 4
        $region24: #{tpu_custom_call.1} parent=11 // pred_fallthru
          _
        // Predicated region
        $region25: #{tpu_custom_call.1} parent=11 // pred_check
          %p198 = pneg %p128
        $region26: #{tpu_custom_call.1} parent=11 // pred_check_branch
          %200 = sbr.rel (%p198) target = $region28
        $region27: #{tpu_custom_call.1} parent=11 // pred_region
          _
        $region28: #{tpu_custom_call.1} parent=11 // pred_fallthru
          _
      $region12: #{tpu_custom_call.1} parent=5 // pred_fallthru
        _
      %p201 = scmp.lt.s32.totalorder %s18, 4
      // Predicated region
      $region29: #{tpu_custom_call.1} parent=5 // pred_check
        %p202 = pneg %p201
      $region30: #{tpu_custom_call.1} parent=5 // pred_check_branch
        %204 = sbr.rel (%p202) target = $region32
      $region31: #{tpu_custom_call.1} parent=5 // pred_region
        // Predicated region
        $region33: #{tpu_custom_call.1} parent=31 // pred_check
          %p205 = pneg %p38
        $region34: #{tpu_custom_call.1} parent=31 // pred_check_branch
          %207 = sbr.rel (%p205) target = $region36
        $region35: #{tpu_custom_call.1} parent=31 // pred_region
          %s208 = sand.u32 %s28, 1
          %s209 = scalar_lea.sflag [#allocation3], %s208
          %s210 = sand.u32 %s28, 1
          %s211 = smul.addr %s210, 64
          %s212 = scalar_lea.vmem [#allocation2], %s211
          %s213 = smul.u32 16, %s18
          %s215 = ssub.s32 1024, 1024
          %216 = vsyncadd %s209, %s215
          %s217 = smul.addr %s213, 64
          %s218 = scalar_lea.hbm %s0, %s217
          %s219 = sshll.u32 %s212, 4
          %s220 = int_to_ptr.vmem [resolvable:$true] %s219
          %225 = dma.hbm_to_vmem [thread:$0]  %s218, 1024, %s220, %s209, 64, 64, 4
        $region36: #{tpu_custom_call.1} parent=31 // pred_fallthru
          _
      $region32: #{tpu_custom_call.1} parent=5 // pred_fallthru
        _
      %p226 = scmp.le.s32.totalorder 1, %s18
      %p227 = scmp.lt.s32.totalorder %s18, 5
      %p228 = pnand %p226, %p227
      %p229 = pneg %p228
      // Predicated region
      $region37: #{tpu_custom_call.1} parent=5 // pred_check
        _
      $region38: #{tpu_custom_call.1} parent=5 // pred_check_branch
        %231 = sbr.rel (%p228) target = $region40
      $region39: #{tpu_custom_call.1} parent=5 // pred_region
        %s232 = ssub.s32 %s18, 1
        %s233 = sand.u32 %s31, 1
        %s234 = scalar_lea.sflag [#allocation3], %s233
        %s235 = sand.u32 %s31, 1
        %s236 = smul.addr %s235, 64
        %s237 = scalar_lea.vmem [#allocation2], %s236
        // Predicated region
        $region41: #{tpu_custom_call.1} parent=39 // pred_check
          %p238 = pneg %p44
        $region42: #{tpu_custom_call.1} parent=39 // pred_check_branch
          %240 = sbr.rel (%p238) target = $region44
        $region43: #{tpu_custom_call.1} parent=39 // pred_region
          %241 = dma.done %s234, 1024
        $region44: #{tpu_custom_call.1} parent=39 // pred_fallthru
          _
        // Predicated region
        $region45: #{tpu_custom_call.1} parent=39 // pred_check
          %p242 = pneg %p65
        $region46: #{tpu_custom_call.1} parent=39 // pred_check_branch
          %244 = sbr.rel (%p242) target = $region48
        $region47: #{tpu_custom_call.1} parent=39 // pred_region
          %245 = dma.done [#allocation6], 2048
        $region48: #{tpu_custom_call.1} parent=39 // pred_fallthru
          _
        // Predicated region
        $region49: #{tpu_custom_call.1} parent=39 // pred_check
          %p246 = pneg %p107
        $region50: #{tpu_custom_call.1} parent=39 // pred_check_branch
          %248 = sbr.rel (%p246) target = $region52
        $region51: #{tpu_custom_call.1} parent=39 // pred_region
          %249 = dma.done [#allocation6], 2048
        $region52: #{tpu_custom_call.1} parent=39 // pred_fallthru
          _
        %s250 = sand.u32 %s31, 1
        %s251 = scalar_lea.sflag [#allocation3], %s250
        %s252 = sand.u32 %s31, 1
        %s253 = smul.addr %s252, 64
        %s254 = scalar_lea.vmem [#allocation2], %s253
        %p255 = pneg %p44
        %p256 = pneg %p41
        %p257 = pneg %p65
        %p258 = pneg %p62
        %p259 = pneg %p86
        %p260 = pneg %p83
        %p261 = pneg %p107
        %p262 = pneg %p104
        %p263 = pneg %p128
        %p264 = pneg %p125
        %p265 = pneg %p154
        %p266 = pneg %p151
        %s267 = sand.u32 %s141, 1
        %s268 = scalar_lea.sflag [#allocation4], %s267
        %s269 = sand.u32 %s141, 1
        %s270 = smul.addr %s269, 128
        %s271 = scalar_lea.vmem [#allocation8], %s270
        %s272 = smul.u32 16, %s23
        %s273 = smul.u32 16, %s23
        %v275 = vld [vmem:[%s237] sm:$0xf]
        %v276 = vld [vmem:[%s237 + $0x4] sm:$0xf]
        %v277 = vld [vmem:[%s237 + $0x8] sm:$0xf]
        %v278 = vld [vmem:[%s237 + $0xc] sm:$0xf]
        %v279 = vld [vmem:[%s237 + $0x10] sm:$0xf]
        %v280 = vld [vmem:[%s237 + $0x14] sm:$0xf]
        %v281 = vld [vmem:[%s237 + $0x18] sm:$0xf]
        %v282 = vld [vmem:[%s237 + $0x1c] sm:$0xf]
        %v283 = vld [vmem:[%s237 + $0x20] sm:$0xf]
        %v284 = vld [vmem:[%s237 + $0x24] sm:$0xf]
        %v285 = vld [vmem:[%s237 + $0x28] sm:$0xf]
        %v286 = vld [vmem:[%s237 + $0x2c] sm:$0xf]
        %v287 = vld [vmem:[%s237 + $0x30] sm:$0xf]
        %v288 = vld [vmem:[%s237 + $0x34] sm:$0xf]
        %v289 = vld [vmem:[%s237 + $0x38] sm:$0xf]
        %v290 = vld [vmem:[%s237 + $0x3c] sm:$0xf]
        %v291 = vld [vmem:[#allocation5] sm:$0xff]
        %v292 = vld [vmem:[#allocation5 + $0x8] sm:$0xff]
        %v293 = vld [vmem:[#allocation5 + $0x10] sm:$0xff]
        %v294 = vld [vmem:[#allocation5 + $0x18] sm:$0xff]
        %v295 = vld [vmem:[#allocation5 + $0x20] sm:$0xff]
        %v296 = vld [vmem:[#allocation5 + $0x28] sm:$0xff]
        %v297 = vld [vmem:[#allocation5 + $0x30] sm:$0xff]
        %v298 = vld [vmem:[#allocation5 + $0x38] sm:$0xff]
        %v299 = vld [vmem:[#allocation5 + $0x40] sm:$0xff]
        %v300 = vld [vmem:[#allocation5 + $0x48] sm:$0xff]
        %v301 = vld [vmem:[#allocation5 + $0x50] sm:$0xff]
        %v302 = vld [vmem:[#allocation5 + $0x58] sm:$0xff]
        %v303 = vld [vmem:[#allocation5 + $0x60] sm:$0xff]
        %v304 = vld [vmem:[#allocation5 + $0x68] sm:$0xff]
        %v305 = vld [vmem:[#allocation5 + $0x70] sm:$0xff]
        %v306 = vld [vmem:[#allocation5 + $0x78] sm:$0xff]
        %v307 = vld [vmem:[%s2] sm:$0x3]
        %v309 = vlaneseq
        %v310 = vshrl.u32 %v309, 7
        %v311 = vsub.s32 0, %v310
        %v312 = vrot.slane %v307, %v311
        %v313 = vlaneseq
        %v314 = vshrl.u32 %v313, 7
        %v315 = vsub.s32 1, %v314
        %v316 = vrot.slane %v307, %v315
        %v335 = vunpack.c.l.b16 %v275
        %v336 = vunpack.c.l.b16 %v276
        %v337 = vunpack.c.l.b16 %v277
        %v338 = vunpack.c.l.b16 %v278
        %v339 = vunpack.c.l.b16 %v279
        %v340 = vunpack.c.l.b16 %v280
        %v341 = vunpack.c.l.b16 %v281
        %v342 = vunpack.c.l.b16 %v282
        %v343 = vunpack.c.l.b16 %v283
        %v344 = vunpack.c.l.b16 %v284
        %v345 = vunpack.c.l.b16 %v285
        %v346 = vunpack.c.l.b16 %v286
        %v347 = vunpack.c.l.b16 %v287
        %v348 = vunpack.c.l.b16 %v288
        %v349 = vunpack.c.l.b16 %v289
        %v350 = vunpack.c.l.b16 %v290
        %v351 = vpack.c.b16 %v336, %v335
        %v352 = vpack.c.b16 %v338, %v337
        %v353 = vpack.c.b16 %v340, %v339
        %v354 = vpack.c.b16 %v342, %v341
        %v355 = vpack.c.b16 %v344, %v343
        %v356 = vpack.c.b16 %v346, %v345
        %v357 = vpack.c.b16 %v348, %v347
        %v358 = vpack.c.b16 %v350, %v349
        %v383 = vunpack.c.l.b16 %v291
        %v384 = vunpack.c.h.b16 %v291
        %v385 = vunpack.c.l.b16 %v292
        %v386 = vunpack.c.h.b16 %v292
        %v387 = vunpack.c.l.b16 %v293
        %v388 = vunpack.c.h.b16 %v293
        %v389 = vunpack.c.l.b16 %v294
        %v390 = vunpack.c.h.b16 %v294
        %v391 = vunpack.c.l.b16 %v295
        %v392 = vunpack.c.h.b16 %v295
        %v393 = vunpack.c.l.b16 %v296
        %v394 = vunpack.c.h.b16 %v296
        %v395 = vunpack.c.l.b16 %v297
        %v396 = vunpack.c.h.b16 %v297
        %v397 = vunpack.c.l.b16 %v298
        %v398 = vunpack.c.h.b16 %v298
        %v399 = vunpack.c.l.b16 %v299
        %v400 = vunpack.c.h.b16 %v299
        %v401 = vunpack.c.l.b16 %v300
        %v402 = vunpack.c.h.b16 %v300
        %v403 = vunpack.c.l.b16 %v301
        %v404 = vunpack.c.h.b16 %v301
        %v405 = vunpack.c.l.b16 %v302
        %v406 = vunpack.c.h.b16 %v302
        %v407 = vunpack.c.l.b16 %v303
        %v408 = vunpack.c.h.b16 %v303
        %v409 = vunpack.c.l.b16 %v304
        %v410 = vunpack.c.h.b16 %v304
        %v411 = vunpack.c.l.b16 %v305
        %v412 = vunpack.c.h.b16 %v305
        %v413 = vunpack.c.l.b16 %v306
        %v414 = vunpack.c.h.b16 %v306
        %v415 = vpack.c.b16 %v385, %v383
        %v416 = vpack.c.b16 %v386, %v384
        %v417 = vpack.c.b16 %v389, %v387
        %v418 = vpack.c.b16 %v390, %v388
        %v419 = vpack.c.b16 %v393, %v391
        %v420 = vpack.c.b16 %v394, %v392
        %v421 = vpack.c.b16 %v397, %v395
        %v422 = vpack.c.b16 %v398, %v396
        %v423 = vpack.c.b16 %v401, %v399
        %v424 = vpack.c.b16 %v402, %v400
        %v425 = vpack.c.b16 %v405, %v403
        %v426 = vpack.c.b16 %v406, %v404
        %v427 = vpack.c.b16 %v409, %v407
        %v428 = vpack.c.b16 %v410, %v408
        %v429 = vpack.c.b16 %v413, %v411
        %v430 = vpack.c.b16 %v414, %v412
        %447 = vmatprep.subr.bf16.mxu0 %v416
        %448 = vmatpush1.bf16.msra.mxu0 %v415
        %449 = vmatprep.subr.bf16.mxu0 %v418
        %450 = vmatpush1.bf16.msra.mxu0 %v417
        %451 = vmatprep.subr.bf16.mxu0 %v420
        %452 = vmatpush1.bf16.msra.mxu0 %v419
        %453 = vmatprep.subr.bf16.mxu0 %v422
        %454 = vmatpush1.bf16.msra.mxu0 %v421
        %455 = vmatprep.subr.bf16.mxu0 %v424
        %456 = vmatpush1.bf16.msra.mxu0 %v423
        %457 = vmatprep.subr.bf16.mxu0 %v426
        %458 = vmatpush1.bf16.msra.mxu0 %v425
        %459 = vmatprep.subr.bf16.mxu0 %v428
        %460 = vmatpush1.bf16.msra.mxu0 %v427
        %461 = vmatprep.subr.bf16.mxu0 %v430
        %462 = vmatpush1.bf16.msra.mxu0 %v429
        %463 = vmatprep.subr.bf16.mxu0 0
        %464 = vmatpush1.bf16.msra.mxu0 0
        %465 = vmatprep.subr.bf16.mxu0 0
        %466 = vmatpush1.bf16.msra.mxu0 0
        %467 = vmatprep.subr.bf16.mxu0 0
        %468 = vmatpush1.bf16.msra.mxu0 0
        %469 = vmatprep.subr.bf16.mxu0 0
        %470 = vmatpush1.bf16.msra.mxu0 0
        %471 = vmatprep.subr.bf16.mxu0 0
        %472 = vmatpush1.bf16.msra.mxu0 0
        %473 = vmatprep.subr.bf16.mxu0 0
        %474 = vmatpush1.bf16.msra.mxu0 0
        %475 = vmatprep.subr.bf16.mxu0 0
        %476 = vmatpush1.bf16.msra.mxu0 0
        %477 = vmatprep.subr.bf16.mxu0 0
        %478 = vmatpush1.bf16.msra.mxu0 0
        %479 = vmatprep.mubr.bf16.mxu0 0
        %480 = vmatmul.mubr.bf16.gmra.mrb[0].mxu0 %v351
        %v481 = vpop.f32.mrb[0].mxu0
        %v482 = vadd.f32 %v312, %v481
        %v483 = vpop.f32.mrb[0].mxu0
        %v484 = vadd.f32 %v316, %v483
        %v485 = vpop.f32.mrb[0].mxu0
        %v486 = vadd.f32 %v312, %v485
        %v487 = vpop.f32.mrb[0].mxu0
        %v488 = vadd.f32 %v316, %v487
        %489 = vmatprep.mubr.bf16.mxu0 0
        %490 = vmatmul.mubr.bf16.gmra.mrb[0].mxu0 %v352
        %v491 = vpop.f32.mrb[0].mxu0
        %v492 = vadd.f32 %v312, %v491
        %v493 = vpop.f32.mrb[0].mxu0
        %v494 = vadd.f32 %v316, %v493
        %v495 = vpop.f32.mrb[0].mxu0
        %v496 = vadd.f32 %v312, %v495
        %v497 = vpop.f32.mrb[0].mxu0
        %v498 = vadd.f32 %v316, %v497
        %499 = vmatprep.mubr.bf16.mxu0 0
        %500 = vmatmul.mubr.bf16.gmra.mrb[0].mxu0 %v353
        %v501 = vpop.f32.mrb[0].mxu0
        %v502 = vadd.f32 %v312, %v501
        %v503 = vpop.f32.mrb[0].mxu0
        %v504 = vadd.f32 %v316, %v503
        %v505 = vpop.f32.mrb[0].mxu0
        %v506 = vadd.f32 %v312, %v505
        %v507 = vpop.f32.mrb[0].mxu0
        %v508 = vadd.f32 %v316, %v507
        %509 = vmatprep.mubr.bf16.mxu0 0
        %510 = vmatmul.mubr.bf16.gmra.mrb[0].mxu0 %v354
        %v511 = vpop.f32.mrb[0].mxu0
        %v512 = vadd.f32 %v312, %v511
        %v513 = vpop.f32.mrb[0].mxu0
        %v514 = vadd.f32 %v316, %v513
        %v515 = vpop.f32.mrb[0].mxu0
        %v516 = vadd.f32 %v312, %v515
        %v517 = vpop.f32.mrb[0].mxu0
        %v518 = vadd.f32 %v316, %v517
        %519 = vmatprep.mubr.bf16.mxu0 0
        %520 = vmatmul.mubr.bf16.gmra.mrb[0].mxu0 %v355
        %v521 = vpop.f32.mrb[0].mxu0
        %v522 = vadd.f32 %v312, %v521
        %v523 = vpop.f32.mrb[0].mxu0
        %v524 = vadd.f32 %v316, %v523
        %v525 = vpop.f32.mrb[0].mxu0
        %v526 = vadd.f32 %v312, %v525
        %v527 = vpop.f32.mrb[0].mxu0
        %v528 = vadd.f32 %v316, %v527
        %529 = vmatprep.mubr.bf16.mxu0 0
        %530 = vmatmul.mubr.bf16.gmra.mrb[0].mxu0 %v356
        %v531 = vpop.f32.mrb[0].mxu0
        %v532 = vadd.f32 %v312, %v531
        %v533 = vpop.f32.mrb[0].mxu0
        %v534 = vadd.f32 %v316, %v533
        %v535 = vpop.f32.mrb[0].mxu0
        %v536 = vadd.f32 %v312, %v535
        %v537 = vpop.f32.mrb[0].mxu0
        %v538 = vadd.f32 %v316, %v537
        %539 = vmatprep.mubr.bf16.mxu0 0
        %540 = vmatmul.mubr.bf16.gmra.mrb[0].mxu0 %v357
        %v541 = vpop.f32.mrb[0].mxu0
        %v542 = vadd.f32 %v312, %v541
        %v543 = vpop.f32.mrb[0].mxu0
        %v544 = vadd.f32 %v316, %v543
        %v545 = vpop.f32.mrb[0].mxu0
        %v546 = vadd.f32 %v312, %v545
        %v547 = vpop.f32.mrb[0].mxu0
        %v548 = vadd.f32 %v316, %v547
        %549 = vmatprep.mubr.bf16.mxu0 0
        %550 = vmatmul.mubr.bf16.gmra.mrb[0].mxu0 %v358
        %v551 = vpop.f32.mrb[0].mxu0
        %v552 = vadd.f32 %v312, %v551
        %v553 = vpop.f32.mrb[0].mxu0
        %v554 = vadd.f32 %v316, %v553
        %v555 = vpop.f32.mrb[0].mxu0
        %v556 = vadd.f32 %v312, %v555
        %v557 = vpop.f32.mrb[0].mxu0
        %v558 = vadd.f32 %v316, %v557
        %559 = vdwg.mxu0
        %v560 = vmul.f32 %v482, 0.5
        %v561 = vmul.f32 %v484, 0.5
        %v562 = vmul.f32 %v486, 0.5
        %v563 = vmul.f32 %v488, 0.5
        %v564 = vmul.f32 %v492, 0.5
        %v565 = vmul.f32 %v494, 0.5
        %v566 = vmul.f32 %v496, 0.5
        %v567 = vmul.f32 %v498, 0.5
        %v568 = vmul.f32 %v502, 0.5
        %v569 = vmul.f32 %v504, 0.5
        %v570 = vmul.f32 %v506, 0.5
        %v571 = vmul.f32 %v508, 0.5
        %v572 = vmul.f32 %v512, 0.5
        %v573 = vmul.f32 %v514, 0.5
        %v574 = vmul.f32 %v516, 0.5
        %v575 = vmul.f32 %v518, 0.5
        %v576 = vmul.f32 %v522, 0.5
        %v577 = vmul.f32 %v524, 0.5
        %v578 = vmul.f32 %v526, 0.5
        %v579 = vmul.f32 %v528, 0.5
        %v580 = vmul.f32 %v532, 0.5
        %v581 = vmul.f32 %v534, 0.5
        %v582 = vmul.f32 %v536, 0.5
        %v583 = vmul.f32 %v538, 0.5
        %v584 = vmul.f32 %v542, 0.5
        %v585 = vmul.f32 %v544, 0.5
        %v586 = vmul.f32 %v546, 0.5
        %v587 = vmul.f32 %v548, 0.5
        %v588 = vmul.f32 %v552, 0.5
        %v589 = vmul.f32 %v554, 0.5
        %v590 = vmul.f32 %v556, 0.5
        %v591 = vmul.f32 %v558, 0.5
        %v592 = vmul.f32 %v482, 0.70710677
        %v593 = vmul.f32 %v484, 0.70710677
        %v594 = vmul.f32 %v486, 0.70710677
        %v595 = vmul.f32 %v488, 0.70710677
        %v596 = vmul.f32 %v492, 0.70710677
        %v597 = vmul.f32 %v494, 0.70710677
        %v598 = vmul.f32 %v496, 0.70710677
        %v599 = vmul.f32 %v498, 0.70710677
        %v600 = vmul.f32 %v502, 0.70710677
        %v601 = vmul.f32 %v504, 0.70710677
        %v602 = vmul.f32 %v506, 0.70710677
        %v603 = vmul.f32 %v508, 0.70710677
        %v604 = vmul.f32 %v512, 0.70710677
        %v605 = vmul.f32 %v514, 0.70710677
        %v606 = vmul.f32 %v516, 0.70710677
        %v607 = vmul.f32 %v518, 0.70710677
        %v608 = vmul.f32 %v522, 0.70710677
        %v609 = vmul.f32 %v524, 0.70710677
        %v610 = vmul.f32 %v526, 0.70710677
        %v611 = vmul.f32 %v528, 0.70710677
        %v612 = vmul.f32 %v532, 0.70710677
        %v613 = vmul.f32 %v534, 0.70710677
        %v614 = vmul.f32 %v536, 0.70710677
        %v615 = vmul.f32 %v538, 0.70710677
        %v616 = vmul.f32 %v542, 0.70710677
        %v617 = vmul.f32 %v544, 0.70710677
        %v618 = vmul.f32 %v546, 0.70710677
        %v619 = vmul.f32 %v548, 0.70710677
        %v620 = vmul.f32 %v552, 0.70710677
        %v621 = vmul.f32 %v554, 0.70710677
        %v622 = vmul.f32 %v556, 0.70710677
        %v623 = vmul.f32 %v558, 0.70710677
        %vm624 = vcmp.ge.f32.partialorder %v592, 0.0
        %vm625 = vcmp.ge.f32.partialorder %v593, 0.0
        %vm626 = vcmp.ge.f32.partialorder %v594, 0.0
        %vm627 = vcmp.ge.f32.partialorder %v595, 0.0
        %vm628 = vcmp.ge.f32.partialorder %v596, 0.0
        %vm629 = vcmp.ge.f32.partialorder %v597, 0.0
        %vm630 = vcmp.ge.f32.partialorder %v598, 0.0
        %vm631 = vcmp.ge.f32.partialorder %v599, 0.0
        %vm632 = vcmp.ge.f32.partialorder %v600, 0.0
        %vm633 = vcmp.ge.f32.partialorder %v601, 0.0
        %vm634 = vcmp.ge.f32.partialorder %v602, 0.0
        %vm635 = vcmp.ge.f32.partialorder %v603, 0.0
        %vm636 = vcmp.ge.f32.partialorder %v604, 0.0
        %vm637 = vcmp.ge.f32.partialorder %v605, 0.0
        %vm638 = vcmp.ge.f32.partialorder %v606, 0.0
        %vm639 = vcmp.ge.f32.partialorder %v607, 0.0
        %vm640 = vcmp.ge.f32.partialorder %v608, 0.0
        %vm641 = vcmp.ge.f32.partialorder %v609, 0.0
        %vm642 = vcmp.ge.f32.partialorder %v610, 0.0
        %vm643 = vcmp.ge.f32.partialorder %v611, 0.0
        %vm644 = vcmp.ge.f32.partialorder %v612, 0.0
        %vm645 = vcmp.ge.f32.partialorder %v613, 0.0
        %vm646 = vcmp.ge.f32.partialorder %v614, 0.0
        %vm647 = vcmp.ge.f32.partialorder %v615, 0.0
        %vm648 = vcmp.ge.f32.partialorder %v616, 0.0
        %vm649 = vcmp.ge.f32.partialorder %v617, 0.0
        %vm650 = vcmp.ge.f32.partialorder %v618, 0.0
        %vm651 = vcmp.ge.f32.partialorder %v619, 0.0
        %vm652 = vcmp.ge.f32.partialorder %v620, 0.0
        %vm653 = vcmp.ge.f32.partialorder %v621, 0.0
        %vm654 = vcmp.ge.f32.partialorder %v622, 0.0
        %vm655 = vcmp.ge.f32.partialorder %v623, 0.0
        %v656 = vsel %vm624, 1.0, -1.0
        %v657 = vsel %vm625, 1.0, -1.0
        %v658 = vsel %vm626, 1.0, -1.0
        %v659 = vsel %vm627, 1.0, -1.0
        %v660 = vsel %vm628, 1.0, -1.0
        %v661 = vsel %vm629, 1.0, -1.0
        %v662 = vsel %vm630, 1.0, -1.0
        %v663 = vsel %vm631, 1.0, -1.0
        %v664 = vsel %vm632, 1.0, -1.0
        %v665 = vsel %vm633, 1.0, -1.0
        %v666 = vsel %vm634, 1.0, -1.0
        %v667 = vsel %vm635, 1.0, -1.0
        %v668 = vsel %vm636, 1.0, -1.0
        %v669 = vsel %vm637, 1.0, -1.0
        %v670 = vsel %vm638, 1.0, -1.0
        %v671 = vsel %vm639, 1.0, -1.0
        %v672 = vsel %vm640, 1.0, -1.0
        %v673 = vsel %vm641, 1.0, -1.0
        %v674 = vsel %vm642, 1.0, -1.0
        %v675 = vsel %vm643, 1.0, -1.0
        %v676 = vsel %vm644, 1.0, -1.0
        %v677 = vsel %vm645, 1.0, -1.0
        %v678 = vsel %vm646, 1.0, -1.0
        %v679 = vsel %vm647, 1.0, -1.0
        %v680 = vsel %vm648, 1.0, -1.0
        %v681 = vsel %vm649, 1.0, -1.0
        %v682 = vsel %vm650, 1.0, -1.0
        %v683 = vsel %vm651, 1.0, -1.0
        %v684 = vsel %vm652, 1.0, -1.0
        %v685 = vsel %vm653, 1.0, -1.0
        %v686 = vsel %vm654, 1.0, -1.0
        %v687 = vsel %vm655, 1.0, -1.0
        %v688 = vand.u32 2147483647, %v592
        %v689 = vand.u32 2147483647, %v593
        %v690 = vand.u32 2147483647, %v594
        %v691 = vand.u32 2147483647, %v595
        %v692 = vand.u32 2147483647, %v596
        %v693 = vand.u32 2147483647, %v597
        %v694 = vand.u32 2147483647, %v598
        %v695 = vand.u32 2147483647, %v599
        %v696 = vand.u32 2147483647, %v600
        %v697 = vand.u32 2147483647, %v601
        %v698 = vand.u32 2147483647, %v602
        %v699 = vand.u32 2147483647, %v603
        %v700 = vand.u32 2147483647, %v604
        %v701 = vand.u32 2147483647, %v605
        %v702 = vand.u32 2147483647, %v606
        %v703 = vand.u32 2147483647, %v607
        %v704 = vand.u32 2147483647, %v608
        %v705 = vand.u32 2147483647, %v609
        %v706 = vand.u32 2147483647, %v610
        %v707 = vand.u32 2147483647, %v611
        %v708 = vand.u32 2147483647, %v612
        %v709 = vand.u32 2147483647, %v613
        %v710 = vand.u32 2147483647, %v614
        %v711 = vand.u32 2147483647, %v615
        %v712 = vand.u32 2147483647, %v616
        %v713 = vand.u32 2147483647, %v617
        %v714 = vand.u32 2147483647, %v618
        %v715 = vand.u32 2147483647, %v619
        %v716 = vand.u32 2147483647, %v620
        %v717 = vand.u32 2147483647, %v621
        %v718 = vand.u32 2147483647, %v622
        %v719 = vand.u32 2147483647, %v623
        %v720 = vmul.f32 %v688, 0.3275911
        %v721 = vmul.f32 %v689, 0.3275911
        %v722 = vmul.f32 %v690, 0.3275911
        %v723 = vmul.f32 %v691, 0.3275911
        %v724 = vmul.f32 %v692, 0.3275911
        %v725 = vmul.f32 %v693, 0.3275911
        %v726 = vmul.f32 %v694, 0.3275911
        %v727 = vmul.f32 %v695, 0.3275911
        %v728 = vmul.f32 %v696, 0.3275911
        %v729 = vmul.f32 %v697, 0.3275911
        %v730 = vmul.f32 %v698, 0.3275911
        %v731 = vmul.f32 %v699, 0.3275911
        %v732 = vmul.f32 %v700, 0.3275911
        %v733 = vmul.f32 %v701, 0.3275911
        %v734 = vmul.f32 %v702, 0.3275911
        %v735 = vmul.f32 %v703, 0.3275911
        %v736 = vmul.f32 %v704, 0.3275911
        %v737 = vmul.f32 %v705, 0.3275911
        %v738 = vmul.f32 %v706, 0.3275911
        %v739 = vmul.f32 %v707, 0.3275911
        %v740 = vmul.f32 %v708, 0.3275911
        %v741 = vmul.f32 %v709, 0.3275911
        %v742 = vmul.f32 %v710, 0.3275911
        %v743 = vmul.f32 %v711, 0.3275911
        %v744 = vmul.f32 %v712, 0.3275911
        %v745 = vmul.f32 %v713, 0.3275911
        %v746 = vmul.f32 %v714, 0.3275911
        %v747 = vmul.f32 %v715, 0.3275911
        %v748 = vmul.f32 %v716, 0.3275911
        %v749 = vmul.f32 %v717, 0.3275911
        %v750 = vmul.f32 %v718, 0.3275911
        %v751 = vmul.f32 %v719, 0.3275911
        %v752 = vadd.f32 %v720, 1.0
        %v753 = vadd.f32 %v721, 1.0
        %v754 = vadd.f32 %v722, 1.0
        %v755 = vadd.f32 %v723, 1.0
        %v756 = vadd.f32 %v724, 1.0
        %v757 = vadd.f32 %v725, 1.0
        %v758 = vadd.f32 %v726, 1.0
        %v759 = vadd.f32 %v727, 1.0
        %v760 = vadd.f32 %v728, 1.0
        %v761 = vadd.f32 %v729, 1.0
        %v762 = vadd.f32 %v730, 1.0
        %v763 = vadd.f32 %v731, 1.0
        %v764 = vadd.f32 %v732, 1.0
        %v765 = vadd.f32 %v733, 1.0
        %v766 = vadd.f32 %v734, 1.0
        %v767 = vadd.f32 %v735, 1.0
        %v768 = vadd.f32 %v736, 1.0
        %v769 = vadd.f32 %v737, 1.0
        %v770 = vadd.f32 %v738, 1.0
        %v771 = vadd.f32 %v739, 1.0
        %v772 = vadd.f32 %v740, 1.0
        %v773 = vadd.f32 %v741, 1.0
        %v774 = vadd.f32 %v742, 1.0
        %v775 = vadd.f32 %v743, 1.0
        %v776 = vadd.f32 %v744, 1.0
        %v777 = vadd.f32 %v745, 1.0
        %v778 = vadd.f32 %v746, 1.0
        %v779 = vadd.f32 %v747, 1.0
        %v780 = vadd.f32 %v748, 1.0
        %v781 = vadd.f32 %v749, 1.0
        %v782 = vadd.f32 %v750, 1.0
        %v783 = vadd.f32 %v751, 1.0
        %v784 = vrcp.pop %v752
        %v785 = vrcp.pop %v753
        %v786 = vrcp.pop %v754
        %v787 = vrcp.pop %v755
        %v788 = vrcp.pop %v756
        %v789 = vrcp.pop %v757
        %v790 = vrcp.pop %v758
        %v791 = vrcp.pop %v759
        %v792 = vrcp.pop %v760
        %v793 = vrcp.pop %v761
        %v794 = vrcp.pop %v762
        %v795 = vrcp.pop %v763
        %v796 = vrcp.pop %v764
        %v797 = vrcp.pop %v765
        %v798 = vrcp.pop %v766
        %v799 = vrcp.pop %v767
        %v800 = vrcp.pop %v768
        %v801 = vrcp.pop %v769
        %v802 = vrcp.pop %v770
        %v803 = vrcp.pop %v771
        %v804 = vrcp.pop %v772
        %v805 = vrcp.pop %v773
        %v806 = vrcp.pop %v774
        %v807 = vrcp.pop %v775
        %v808 = vrcp.pop %v776
        %v809 = vrcp.pop %v777
        %v810 = vrcp.pop %v778
        %v811 = vrcp.pop %v779
        %v812 = vrcp.pop %v780
        %v813 = vrcp.pop %v781
        %v814 = vrcp.pop %v782
        %v815 = vrcp.pop %v783
        %v816 = vmul.f32 %v752, %v784
        %v817 = vmul.f32 %v753, %v785
        %v818 = vmul.f32 %v754, %v786
        %v819 = vmul.f32 %v755, %v787
        %v820 = vmul.f32 %v756, %v788
        %v821 = vmul.f32 %v757, %v789
        %v822 = vmul.f32 %v758, %v790
        %v823 = vmul.f32 %v759, %v791
        %v824 = vmul.f32 %v760, %v792
        %v825 = vmul.f32 %v761, %v793
        %v826 = vmul.f32 %v762, %v794
        %v827 = vmul.f32 %v763, %v795
        %v828 = vmul.f32 %v764, %v796
        %v829 = vmul.f32 %v765, %v797
        %v830 = vmul.f32 %v766, %v798
        %v831 = vmul.f32 %v767, %v799
        %v832 = vmul.f32 %v768, %v800
        %v833 = vmul.f32 %v769, %v801
        %v834 = vmul.f32 %v770, %v802
        %v835 = vmul.f32 %v771, %v803
        %v836 = vmul.f32 %v772, %v804
        %v837 = vmul.f32 %v773, %v805
        %v838 = vmul.f32 %v774, %v806
        %v839 = vmul.f32 %v775, %v807
        %v840 = vmul.f32 %v776, %v808
        %v841 = vmul.f32 %v777, %v809
        %v842 = vmul.f32 %v778, %v810
        %v843 = vmul.f32 %v779, %v811
        %v844 = vmul.f32 %v780, %v812
        %v845 = vmul.f32 %v781, %v813
        %v846 = vmul.f32 %v782, %v814
        %v847 = vmul.f32 %v783, %v815
        %v848 = vsub.f32 2.0, %v816
        %v849 = vsub.f32 2.0, %v817
        %v850 = vsub.f32 2.0, %v818
        %v851 = vsub.f32 2.0, %v819
        %v852 = vsub.f32 2.0, %v820
        %v853 = vsub.f32 2.0, %v821
        %v854 = vsub.f32 2.0, %v822
        %v855 = vsub.f32 2.0, %v823
        %v856 = vsub.f32 2.0, %v824
        %v857 = vsub.f32 2.0, %v825
        %v858 = vsub.f32 2.0, %v826
        %v859 = vsub.f32 2.0, %v827
        %v860 = vsub.f32 2.0, %v828
        %v861 = vsub.f32 2.0, %v829
        %v862 = vsub.f32 2.0, %v830
        %v863 = vsub.f32 2.0, %v831
        %v864 = vsub.f32 2.0, %v832
        %v865 = vsub.f32 2.0, %v833
        %v866 = vsub.f32 2.0, %v834
        %v867 = vsub.f32 2.0, %v835
        %v868 = vsub.f32 2.0, %v836
        %v869 = vsub.f32 2.0, %v837
        %v870 = vsub.f32 2.0, %v838
        %v871 = vsub.f32 2.0, %v839
        %v872 = vsub.f32 2.0, %v840
        %v873 = vsub.f32 2.0, %v841
        %v874 = vsub.f32 2.0, %v842
        %v875 = vsub.f32 2.0, %v843
        %v876 = vsub.f32 2.0, %v844
        %v877 = vsub.f32 2.0, %v845
        %v878 = vsub.f32 2.0, %v846
        %v879 = vsub.f32 2.0, %v847
        %v880 = vmul.f32 %v784, %v848
        %v881 = vmul.f32 %v785, %v849
        %v882 = vmul.f32 %v786, %v850
        %v883 = vmul.f32 %v787, %v851
        %v884 = vmul.f32 %v788, %v852
        %v885 = vmul.f32 %v789, %v853
        %v886 = vmul.f32 %v790, %v854
        %v887 = vmul.f32 %v791, %v855
        %v888 = vmul.f32 %v792, %v856
        %v889 = vmul.f32 %v793, %v857
        %v890 = vmul.f32 %v794, %v858
        %v891 = vmul.f32 %v795, %v859
        %v892 = vmul.f32 %v796, %v860
        %v893 = vmul.f32 %v797, %v861
        %v894 = vmul.f32 %v798, %v862
        %v895 = vmul.f32 %v799, %v863
        %v896 = vmul.f32 %v800, %v864
        %v897 = vmul.f32 %v801, %v865
        %v898 = vmul.f32 %v802, %v866
        %v899 = vmul.f32 %v803, %v867
        %v900 = vmul.f32 %v804, %v868
        %v901 = vmul.f32 %v805, %v869
        %v902 = vmul.f32 %v806, %v870
        %v903 = vmul.f32 %v807, %v871
        %v904 = vmul.f32 %v808, %v872
        %v905 = vmul.f32 %v809, %v873
        %v906 = vmul.f32 %v810, %v874
        %v907 = vmul.f32 %v811, %v875
        %v908 = vmul.f32 %v812, %v876
        %v909 = vmul.f32 %v813, %v877
        %v910 = vmul.f32 %v814, %v878
        %v911 = vmul.f32 %v815, %v879
        %v912 = vmul.f32 %v880, 1.0614054
        %v913 = vmul.f32 %v881, 1.0614054
        %v914 = vmul.f32 %v882, 1.0614054
        %v915 = vmul.f32 %v883, 1.0614054
        %v916 = vmul.f32 %v884, 1.0614054
        %v917 = vmul.f32 %v885, 1.0614054
        %v918 = vmul.f32 %v886, 1.0614054
        %v919 = vmul.f32 %v887, 1.0614054
        %v920 = vmul.f32 %v888, 1.0614054
        %v921 = vmul.f32 %v889, 1.0614054
        %v922 = vmul.f32 %v890, 1.0614054
        %v923 = vmul.f32 %v891, 1.0614054
        %v924 = vmul.f32 %v892, 1.0614054
        %v925 = vmul.f32 %v893, 1.0614054
        %v926 = vmul.f32 %v894, 1.0614054
        %v927 = vmul.f32 %v895, 1.0614054
        %v928 = vmul.f32 %v896, 1.0614054
        %v929 = vmul.f32 %v897, 1.0614054
        %v930 = vmul.f32 %v898, 1.0614054
        %v931 = vmul.f32 %v899, 1.0614054
        %v932 = vmul.f32 %v900, 1.0614054
        %v933 = vmul.f32 %v901, 1.0614054
        %v934 = vmul.f32 %v902, 1.0614054
        %v935 = vmul.f32 %v903, 1.0614054
        %v936 = vmul.f32 %v904, 1.0614054
        %v937 = vmul.f32 %v905, 1.0614054
        %v938 = vmul.f32 %v906, 1.0614054
        %v939 = vmul.f32 %v907, 1.0614054
        %v940 = vmul.f32 %v908, 1.0614054
        %v941 = vmul.f32 %v909, 1.0614054
        %v942 = vmul.f32 %v910, 1.0614054
        %v943 = vmul.f32 %v911, 1.0614054
        %v944 = vadd.f32 %v912, -1.4531521
        %v945 = vadd.f32 %v913, -1.4531521
        %v946 = vadd.f32 %v914, -1.4531521
        %v947 = vadd.f32 %v915, -1.4531521
        %v948 = vadd.f32 %v916, -1.4531521
        %v949 = vadd.f32 %v917, -1.4531521
        %v950 = vadd.f32 %v918, -1.4531521
        %v951 = vadd.f32 %v919, -1.4531521
        %v952 = vadd.f32 %v920, -1.4531521
        %v953 = vadd.f32 %v921, -1.4531521
        %v954 = vadd.f32 %v922, -1.4531521
        %v955 = vadd.f32 %v923, -1.4531521
        %v956 = vadd.f32 %v924, -1.4531521
        %v957 = vadd.f32 %v925, -1.4531521
        %v958 = vadd.f32 %v926, -1.4531521
        %v959 = vadd.f32 %v927, -1.4531521
        %v960 = vadd.f32 %v928, -1.4531521
        %v961 = vadd.f32 %v929, -1.4531521
        %v962 = vadd.f32 %v930, -1.4531521
        %v963 = vadd.f32 %v931, -1.4531521
        %v964 = vadd.f32 %v932, -1.4531521
        %v965 = vadd.f32 %v933, -1.4531521
        %v966 = vadd.f32 %v934, -1.4531521
        %v967 = vadd.f32 %v935, -1.4531521
        %v968 = vadd.f32 %v936, -1.4531521
        %v969 = vadd.f32 %v937, -1.4531521
        %v970 = vadd.f32 %v938, -1.4531521
        %v971 = vadd.f32 %v939, -1.4531521
        %v972 = vadd.f32 %v940, -1.4531521
        %v973 = vadd.f32 %v941, -1.4531521
        %v974 = vadd.f32 %v942, -1.4531521
        %v975 = vadd.f32 %v943, -1.4531521
        %v976 = vmul.f32 %v944, %v880
        %v977 = vmul.f32 %v945, %v881
        %v978 = vmul.f32 %v946, %v882
        %v979 = vmul.f32 %v947, %v883
        %v980 = vmul.f32 %v948, %v884
        %v981 = vmul.f32 %v949, %v885
        %v982 = vmul.f32 %v950, %v886
        %v983 = vmul.f32 %v951, %v887
        %v984 = vmul.f32 %v952, %v888
        %v985 = vmul.f32 %v953, %v889
        %v986 = vmul.f32 %v954, %v890
        %v987 = vmul.f32 %v955, %v891
        %v988 = vmul.f32 %v956, %v892
        %v989 = vmul.f32 %v957, %v893
        %v990 = vmul.f32 %v958, %v894
        %v991 = vmul.f32 %v959, %v895
        %v992 = vmul.f32 %v960, %v896
        %v993 = vmul.f32 %v961, %v897
        %v994 = vmul.f32 %v962, %v898
        %v995 = vmul.f32 %v963, %v899
        %v996 = vmul.f32 %v964, %v900
        %v997 = vmul.f32 %v965, %v901
        %v998 = vmul.f32 %v966, %v902
        %v999 = vmul.f32 %v967, %v903
        %v1000 = vmul.f32 %v968, %v904
        %v1001 = vmul.f32 %v969, %v905
        %v1002 = vmul.f32 %v970, %v906
        %v1003 = vmul.f32 %v971, %v907
        %v1004 = vmul.f32 %v972, %v908
        %v1005 = vmul.f32 %v973, %v909
        %v1006 = vmul.f32 %v974, %v910
        %v1007 = vmul.f32 %v975, %v911
        %v1008 = vadd.f32 %v976, 1.4214138
        %v1009 = vadd.f32 %v977, 1.4214138
        %v1010 = vadd.f32 %v978, 1.4214138
        %v1011 = vadd.f32 %v979, 1.4214138
        %v1012 = vadd.f32 %v980, 1.4214138
        %v1013 = vadd.f32 %v981, 1.4214138
        %v1014 = vadd.f32 %v982, 1.4214138
        %v1015 = vadd.f32 %v983, 1.4214138
        %v1016 = vadd.f32 %v984, 1.4214138
        %v1017 = vadd.f32 %v985, 1.4214138
        %v1018 = vadd.f32 %v986, 1.4214138
        %v1019 = vadd.f32 %v987, 1.4214138
        %v1020 = vadd.f32 %v988, 1.4214138
        %v1021 = vadd.f32 %v989, 1.4214138
        %v1022 = vadd.f32 %v990, 1.4214138
        %v1023 = vadd.f32 %v991, 1.4214138
        %v1024 = vadd.f32 %v992, 1.4214138
        %v1025 = vadd.f32 %v993, 1.4214138
        %v1026 = vadd.f32 %v994, 1.4214138
        %v1027 = vadd.f32 %v995, 1.4214138
        %v1028 = vadd.f32 %v996, 1.4214138
        %v1029 = vadd.f32 %v997, 1.4214138
        %v1030 = vadd.f32 %v998, 1.4214138
        %v1031 = vadd.f32 %v999, 1.4214138
        %v1032 = vadd.f32 %v1000, 1.4214138
        %v1033 = vadd.f32 %v1001, 1.4214138
        %v1034 = vadd.f32 %v1002, 1.4214138
        %v1035 = vadd.f32 %v1003, 1.4214138
        %v1036 = vadd.f32 %v1004, 1.4214138
        %v1037 = vadd.f32 %v1005, 1.4214138
        %v1038 = vadd.f32 %v1006, 1.4214138
        %v1039 = vadd.f32 %v1007, 1.4214138
        %v1040 = vmul.f32 %v1008, %v880
        %v1041 = vmul.f32 %v1009, %v881
        %v1042 = vmul.f32 %v1010, %v882
        %v1043 = vmul.f32 %v1011, %v883
        %v1044 = vmul.f32 %v1012, %v884
        %v1045 = vmul.f32 %v1013, %v885
        %v1046 = vmul.f32 %v1014, %v886
        %v1047 = vmul.f32 %v1015, %v887
        %v1048 = vmul.f32 %v1016, %v888
        %v1049 = vmul.f32 %v1017, %v889
        %v1050 = vmul.f32 %v1018, %v890
        %v1051 = vmul.f32 %v1019, %v891
        %v1052 = vmul.f32 %v1020, %v892
        %v1053 = vmul.f32 %v1021, %v893
        %v1054 = vmul.f32 %v1022, %v894
        %v1055 = vmul.f32 %v1023, %v895
        %v1056 = vmul.f32 %v1024, %v896
        %v1057 = vmul.f32 %v1025, %v897
        %v1058 = vmul.f32 %v1026, %v898
        %v1059 = vmul.f32 %v1027, %v899
        %v1060 = vmul.f32 %v1028, %v900
        %v1061 = vmul.f32 %v1029, %v901
        %v1062 = vmul.f32 %v1030, %v902
        %v1063 = vmul.f32 %v1031, %v903
        %v1064 = vmul.f32 %v1032, %v904
        %v1065 = vmul.f32 %v1033, %v905
        %v1066 = vmul.f32 %v1034, %v906
        %v1067 = vmul.f32 %v1035, %v907
        %v1068 = vmul.f32 %v1036, %v908
        %v1069 = vmul.f32 %v1037, %v909
        %v1070 = vmul.f32 %v1038, %v910
        %v1071 = vmul.f32 %v1039, %v911
        %v1072 = vadd.f32 %v1040, -0.28449672
        %v1073 = vadd.f32 %v1041, -0.28449672
        %v1074 = vadd.f32 %v1042, -0.28449672
        %v1075 = vadd.f32 %v1043, -0.28449672
        %v1076 = vadd.f32 %v1044, -0.28449672
        %v1077 = vadd.f32 %v1045, -0.28449672
        %v1078 = vadd.f32 %v1046, -0.28449672
        %v1079 = vadd.f32 %v1047, -0.28449672
        %v1080 = vadd.f32 %v1048, -0.28449672
        %v1081 = vadd.f32 %v1049, -0.28449672
        %v1082 = vadd.f32 %v1050, -0.28449672
        %v1083 = vadd.f32 %v1051, -0.28449672
        %v1084 = vadd.f32 %v1052, -0.28449672
        %v1085 = vadd.f32 %v1053, -0.28449672
        %v1086 = vadd.f32 %v1054, -0.28449672
        %v1087 = vadd.f32 %v1055, -0.28449672
        %v1088 = vadd.f32 %v1056, -0.28449672
        %v1089 = vadd.f32 %v1057, -0.28449672
        %v1090 = vadd.f32 %v1058, -0.28449672
        %v1091 = vadd.f32 %v1059, -0.28449672
        %v1092 = vadd.f32 %v1060, -0.28449672
        %v1093 = vadd.f32 %v1061, -0.28449672
        %v1094 = vadd.f32 %v1062, -0.28449672
        %v1095 = vadd.f32 %v1063, -0.28449672
        %v1096 = vadd.f32 %v1064, -0.28449672
        %v1097 = vadd.f32 %v1065, -0.28449672
        %v1098 = vadd.f32 %v1066, -0.28449672
        %v1099 = vadd.f32 %v1067, -0.28449672
        %v1100 = vadd.f32 %v1068, -0.28449672
        %v1101 = vadd.f32 %v1069, -0.28449672
        %v1102 = vadd.f32 %v1070, -0.28449672
        %v1103 = vadd.f32 %v1071, -0.28449672
        %v1104 = vmul.f32 %v1072, %v880
        %v1105 = vmul.f32 %v1073, %v881
        %v1106 = vmul.f32 %v1074, %v882
        %v1107 = vmul.f32 %v1075, %v883
        %v1108 = vmul.f32 %v1076, %v884
        %v1109 = vmul.f32 %v1077, %v885
        %v1110 = vmul.f32 %v1078, %v886
        %v1111 = vmul.f32 %v1079, %v887
        %v1112 = vmul.f32 %v1080, %v888
        %v1113 = vmul.f32 %v1081, %v889
        %v1114 = vmul.f32 %v1082, %v890
        %v1115 = vmul.f32 %v1083, %v891
        %v1116 = vmul.f32 %v1084, %v892
        %v1117 = vmul.f32 %v1085, %v893
        %v1118 = vmul.f32 %v1086, %v894
        %v1119 = vmul.f32 %v1087, %v895
        %v1120 = vmul.f32 %v1088, %v896
        %v1121 = vmul.f32 %v1089, %v897
        %v1122 = vmul.f32 %v1090, %v898
        %v1123 = vmul.f32 %v1091, %v899
        %v1124 = vmul.f32 %v1092, %v900
        %v1125 = vmul.f32 %v1093, %v901
        %v1126 = vmul.f32 %v1094, %v902
        %v1127 = vmul.f32 %v1095, %v903
        %v1128 = vmul.f32 %v1096, %v904
        %v1129 = vmul.f32 %v1097, %v905
        %v1130 = vmul.f32 %v1098, %v906
        %v1131 = vmul.f32 %v1099, %v907
        %v1132 = vmul.f32 %v1100, %v908
        %v1133 = vmul.f32 %v1101, %v909
        %v1134 = vmul.f32 %v1102, %v910
        %v1135 = vmul.f32 %v1103, %v911
        %v1136 = vadd.f32 %v1104, 0.2548296
        %v1137 = vadd.f32 %v1105, 0.2548296
        %v1138 = vadd.f32 %v1106, 0.2548296
        %v1139 = vadd.f32 %v1107, 0.2548296
        %v1140 = vadd.f32 %v1108, 0.2548296
        %v1141 = vadd.f32 %v1109, 0.2548296
        %v1142 = vadd.f32 %v1110, 0.2548296
        %v1143 = vadd.f32 %v1111, 0.2548296
        %v1144 = vadd.f32 %v1112, 0.2548296
        %v1145 = vadd.f32 %v1113, 0.2548296
        %v1146 = vadd.f32 %v1114, 0.2548296
        %v1147 = vadd.f32 %v1115, 0.2548296
        %v1148 = vadd.f32 %v1116, 0.2548296
        %v1149 = vadd.f32 %v1117, 0.2548296
        %v1150 = vadd.f32 %v1118, 0.2548296
        %v1151 = vadd.f32 %v1119, 0.2548296
        %v1152 = vadd.f32 %v1120, 0.2548296
        %v1153 = vadd.f32 %v1121, 0.2548296
        %v1154 = vadd.f32 %v1122, 0.2548296
        %v1155 = vadd.f32 %v1123, 0.2548296
        %v1156 = vadd.f32 %v1124, 0.2548296
        %v1157 = vadd.f32 %v1125, 0.2548296
        %v1158 = vadd.f32 %v1126, 0.2548296
        %v1159 = vadd.f32 %v1127, 0.2548296
        %v1160 = vadd.f32 %v1128, 0.2548296
        %v1161 = vadd.f32 %v1129, 0.2548296
        %v1162 = vadd.f32 %v1130, 0.2548296
        %v1163 = vadd.f32 %v1131, 0.2548296
        %v1164 = vadd.f32 %v1132, 0.2548296
        %v1165 = vadd.f32 %v1133, 0.2548296
        %v1166 = vadd.f32 %v1134, 0.2548296
        %v1167 = vadd.f32 %v1135, 0.2548296
        %v1168 = vmul.f32 %v1136, %v880
        %v1169 = vmul.f32 %v1137, %v881
        %v1170 = vmul.f32 %v1138, %v882
        %v1171 = vmul.f32 %v1139, %v883
        %v1172 = vmul.f32 %v1140, %v884
        %v1173 = vmul.f32 %v1141, %v885
        %v1174 = vmul.f32 %v1142, %v886
        %v1175 = vmul.f32 %v1143, %v887
        %v1176 = vmul.f32 %v1144, %v888
        %v1177 = vmul.f32 %v1145, %v889
        %v1178 = vmul.f32 %v1146, %v890
        %v1179 = vmul.f32 %v1147, %v891
        %v1180 = vmul.f32 %v1148, %v892
        %v1181 = vmul.f32 %v1149, %v893
        %v1182 = vmul.f32 %v1150, %v894
        %v1183 = vmul.f32 %v1151, %v895
        %v1184 = vmul.f32 %v1152, %v896
        %v1185 = vmul.f32 %v1153, %v897
        %v1186 = vmul.f32 %v1154, %v898
        %v1187 = vmul.f32 %v1155, %v899
        %v1188 = vmul.f32 %v1156, %v900
        %v1189 = vmul.f32 %v1157, %v901
        %v1190 = vmul.f32 %v1158, %v902
        %v1191 = vmul.f32 %v1159, %v903
        %v1192 = vmul.f32 %v1160, %v904
        %v1193 = vmul.f32 %v1161, %v905
        %v1194 = vmul.f32 %v1162, %v906
        %v1195 = vmul.f32 %v1163, %v907
        %v1196 = vmul.f32 %v1164, %v908
        %v1197 = vmul.f32 %v1165, %v909
        %v1198 = vmul.f32 %v1166, %v910
        %v1199 = vmul.f32 %v1167, %v911
        %v1200 = vsub.f32 0.0, %v688
        %v1201 = vsub.f32 0.0, %v689
        %v1202 = vsub.f32 0.0, %v690
        %v1203 = vsub.f32 0.0, %v691
        %v1204 = vsub.f32 0.0, %v692
        %v1205 = vsub.f32 0.0, %v693
        %v1206 = vsub.f32 0.0, %v694
        %v1207 = vsub.f32 0.0, %v695
        %v1208 = vsub.f32 0.0, %v696
        %v1209 = vsub.f32 0.0, %v697
        %v1210 = vsub.f32 0.0, %v698
        %v1211 = vsub.f32 0.0, %v699
        %v1212 = vsub.f32 0.0, %v700
        %v1213 = vsub.f32 0.0, %v701
        %v1214 = vsub.f32 0.0, %v702
        %v1215 = vsub.f32 0.0, %v703
        %v1216 = vsub.f32 0.0, %v704
        %v1217 = vsub.f32 0.0, %v705
        %v1218 = vsub.f32 0.0, %v706
        %v1219 = vsub.f32 0.0, %v707
        %v1220 = vsub.f32 0.0, %v708
        %v1221 = vsub.f32 0.0, %v709
        %v1222 = vsub.f32 0.0, %v710
        %v1223 = vsub.f32 0.0, %v711
        %v1224 = vsub.f32 0.0, %v712
        %v1225 = vsub.f32 0.0, %v713
        %v1226 = vsub.f32 0.0, %v714
        %v1227 = vsub.f32 0.0, %v715
        %v1228 = vsub.f32 0.0, %v716
        %v1229 = vsub.f32 0.0, %v717
        %v1230 = vsub.f32 0.0, %v718
        %v1231 = vsub.f32 0.0, %v719
        %v1232 = vmul.f32 %v1200, %v688
        %v1233 = vmul.f32 %v1201, %v689
        %v1234 = vmul.f32 %v1202, %v690
        %v1235 = vmul.f32 %v1203, %v691
        %v1236 = vmul.f32 %v1204, %v692
        %v1237 = vmul.f32 %v1205, %v693
        %v1238 = vmul.f32 %v1206, %v694
        %v1239 = vmul.f32 %v1207, %v695
        %v1240 = vmul.f32 %v1208, %v696
        %v1241 = vmul.f32 %v1209, %v697
        %v1242 = vmul.f32 %v1210, %v698
        %v1243 = vmul.f32 %v1211, %v699
        %v1244 = vmul.f32 %v1212, %v700
        %v1245 = vmul.f32 %v1213, %v701
        %v1246 = vmul.f32 %v1214, %v702
        %v1247 = vmul.f32 %v1215, %v703
        %v1248 = vmul.f32 %v1216, %v704
        %v1249 = vmul.f32 %v1217, %v705
        %v1250 = vmul.f32 %v1218, %v706
        %v1251 = vmul.f32 %v1219, %v707
        %v1252 = vmul.f32 %v1220, %v708
        %v1253 = vmul.f32 %v1221, %v709
        %v1254 = vmul.f32 %v1222, %v710
        %v1255 = vmul.f32 %v1223, %v711
        %v1256 = vmul.f32 %v1224, %v712
        %v1257 = vmul.f32 %v1225, %v713
        %v1258 = vmul.f32 %v1226, %v714
        %v1259 = vmul.f32 %v1227, %v715
        %v1260 = vmul.f32 %v1228, %v716
        %v1261 = vmul.f32 %v1229, %v717
        %v1262 = vmul.f32 %v1230, %v718
        %v1263 = vmul.f32 %v1231, %v719
        %v1264 = vmul.f32 %v1232, 1.442695
        %v1265 = vpow.pop %v1264
        %v1266 = vmul.f32 %v1233, 1.442695
        %v1267 = vpow.pop %v1266
        %v1268 = vmul.f32 %v1234, 1.442695
        %v1269 = vpow.pop %v1268
        %v1270 = vmul.f32 %v1235, 1.442695
        %v1271 = vpow.pop %v1270
        %v1272 = vmul.f32 %v1236, 1.442695
        %v1273 = vpow.pop %v1272
        %v1274 = vmul.f32 %v1237, 1.442695
        %v1275 = vpow.pop %v1274
        %v1276 = vmul.f32 %v1238, 1.442695
        %v1277 = vpow.pop %v1276
        %v1278 = vmul.f32 %v1239, 1.442695
        %v1279 = vpow.pop %v1278
        %v1280 = vmul.f32 %v1240, 1.442695
        %v1281 = vpow.pop %v1280
        %v1282 = vmul.f32 %v1241, 1.442695
        %v1283 = vpow.pop %v1282
        %v1284 = vmul.f32 %v1242, 1.442695
        %v1285 = vpow.pop %v1284
        %v1286 = vmul.f32 %v1243, 1.442695
        %v1287 = vpow.pop %v1286
        %v1288 = vmul.f32 %v1244, 1.442695
        %v1289 = vpow.pop %v1288
        %v1290 = vmul.f32 %v1245, 1.442695
        %v1291 = vpow.pop %v1290
        %v1292 = vmul.f32 %v1246, 1.442695
        %v1293 = vpow.pop %v1292
        %v1294 = vmul.f32 %v1247, 1.442695
        %v1295 = vpow.pop %v1294
        %v1296 = vmul.f32 %v1248, 1.442695
        %v1297 = vpow.pop %v1296
        %v1298 = vmul.f32 %v1249, 1.442695
        %v1299 = vpow.pop %v1298
        %v1300 = vmul.f32 %v1250, 1.442695
        %v1301 = vpow.pop %v1300
        %v1302 = vmul.f32 %v1251, 1.442695
        %v1303 = vpow.pop %v1302
        %v1304 = vmul.f32 %v1252, 1.442695
        %v1305 = vpow.pop %v1304
        %v1306 = vmul.f32 %v1253, 1.442695
        %v1307 = vpow.pop %v1306
        %v1308 = vmul.f32 %v1254, 1.442695
        %v1309 = vpow.pop %v1308
        %v1310 = vmul.f32 %v1255, 1.442695
        %v1311 = vpow.pop %v1310
        %v1312 = vmul.f32 %v1256, 1.442695
        %v1313 = vpow.pop %v1312
        %v1314 = vmul.f32 %v1257, 1.442695
        %v1315 = vpow.pop %v1314
        %v1316 = vmul.f32 %v1258, 1.442695
        %v1317 = vpow.pop %v1316
        %v1318 = vmul.f32 %v1259, 1.442695
        %v1319 = vpow.pop %v1318
        %v1320 = vmul.f32 %v1260, 1.442695
        %v1321 = vpow.pop %v1320
        %v1322 = vmul.f32 %v1261, 1.442695
        %v1323 = vpow.pop %v1322
        %v1324 = vmul.f32 %v1262, 1.442695
        %v1325 = vpow.pop %v1324
        %v1326 = vmul.f32 %v1263, 1.442695
        %v1327 = vpow.pop %v1326
        %v1328 = vmul.f32 %v1168, %v1265
        %v1329 = vmul.f32 %v1169, %v1267
        %v1330 = vmul.f32 %v1170, %v1269
        %v1331 = vmul.f32 %v1171, %v1271
        %v1332 = vmul.f32 %v1172, %v1273
        %v1333 = vmul.f32 %v1173, %v1275
        %v1334 = vmul.f32 %v1174, %v1277
        %v1335 = vmul.f32 %v1175, %v1279
        %v1336 = vmul.f32 %v1176, %v1281
        %v1337 = vmul.f32 %v1177, %v1283
        %v1338 = vmul.f32 %v1178, %v1285
        %v1339 = vmul.f32 %v1179, %v1287
        %v1340 = vmul.f32 %v1180, %v1289
        %v1341 = vmul.f32 %v1181, %v1291
        %v1342 = vmul.f32 %v1182, %v1293
        %v1343 = vmul.f32 %v1183, %v1295
        %v1344 = vmul.f32 %v1184, %v1297
        %v1345 = vmul.f32 %v1185, %v1299
        %v1346 = vmul.f32 %v1186, %v1301
        %v1347 = vmul.f32 %v1187, %v1303
        %v1348 = vmul.f32 %v1188, %v1305
        %v1349 = vmul.f32 %v1189, %v1307
        %v1350 = vmul.f32 %v1190, %v1309
        %v1351 = vmul.f32 %v1191, %v1311
        %v1352 = vmul.f32 %v1192, %v1313
        %v1353 = vmul.f32 %v1193, %v1315
        %v1354 = vmul.f32 %v1194, %v1317
        %v1355 = vmul.f32 %v1195, %v1319
        %v1356 = vmul.f32 %v1196, %v1321
        %v1357 = vmul.f32 %v1197, %v1323
        %v1358 = vmul.f32 %v1198, %v1325
        %v1359 = vmul.f32 %v1199, %v1327
        %v1360 = vsub.f32 1.0, %v1328
        %v1361 = vsub.f32 1.0, %v1329
        %v1362 = vsub.f32 1.0, %v1330
        %v1363 = vsub.f32 1.0, %v1331
        %v1364 = vsub.f32 1.0, %v1332
        %v1365 = vsub.f32 1.0, %v1333
        %v1366 = vsub.f32 1.0, %v1334
        %v1367 = vsub.f32 1.0, %v1335
        %v1368 = vsub.f32 1.0, %v1336
        %v1369 = vsub.f32 1.0, %v1337
        %v1370 = vsub.f32 1.0, %v1338
        %v1371 = vsub.f32 1.0, %v1339
        %v1372 = vsub.f32 1.0, %v1340
        %v1373 = vsub.f32 1.0, %v1341
        %v1374 = vsub.f32 1.0, %v1342
        %v1375 = vsub.f32 1.0, %v1343
        %v1376 = vsub.f32 1.0, %v1344
        %v1377 = vsub.f32 1.0, %v1345
        %v1378 = vsub.f32 1.0, %v1346
        %v1379 = vsub.f32 1.0, %v1347
        %v1380 = vsub.f32 1.0, %v1348
        %v1381 = vsub.f32 1.0, %v1349
        %v1382 = vsub.f32 1.0, %v1350
        %v1383 = vsub.f32 1.0, %v1351
        %v1384 = vsub.f32 1.0, %v1352
        %v1385 = vsub.f32 1.0, %v1353
        %v1386 = vsub.f32 1.0, %v1354
        %v1387 = vsub.f32 1.0, %v1355
        %v1388 = vsub.f32 1.0, %v1356
        %v1389 = vsub.f32 1.0, %v1357
        %v1390 = vsub.f32 1.0, %v1358
        %v1391 = vsub.f32 1.0, %v1359
        %v1392 = vmul.f32 %v656, %v1360
        %v1393 = vmul.f32 %v657, %v1361
        %v1394 = vmul.f32 %v658, %v1362
        %v1395 = vmul.f32 %v659, %v1363
        %v1396 = vmul.f32 %v660, %v1364
        %v1397 = vmul.f32 %v661, %v1365
        %v1398 = vmul.f32 %v662, %v1366
        %v1399 = vmul.f32 %v663, %v1367
        %v1400 = vmul.f32 %v664, %v1368
        %v1401 = vmul.f32 %v665, %v1369
        %v1402 = vmul.f32 %v666, %v1370
        %v1403 = vmul.f32 %v667, %v1371
        %v1404 = vmul.f32 %v668, %v1372
        %v1405 = vmul.f32 %v669, %v1373
        %v1406 = vmul.f32 %v670, %v1374
        %v1407 = vmul.f32 %v671, %v1375
        %v1408 = vmul.f32 %v672, %v1376
        %v1409 = vmul.f32 %v673, %v1377
        %v1410 = vmul.f32 %v674, %v1378
        %v1411 = vmul.f32 %v675, %v1379
        %v1412 = vmul.f32 %v676, %v1380
        %v1413 = vmul.f32 %v677, %v1381
        %v1414 = vmul.f32 %v678, %v1382
        %v1415 = vmul.f32 %v679, %v1383
        %v1416 = vmul.f32 %v680, %v1384
        %v1417 = vmul.f32 %v681, %v1385
        %v1418 = vmul.f32 %v682, %v1386
        %v1419 = vmul.f32 %v683, %v1387
        %v1420 = vmul.f32 %v684, %v1388
        %v1421 = vmul.f32 %v685, %v1389
        %v1422 = vmul.f32 %v686, %v1390
        %v1423 = vmul.f32 %v687, %v1391
        %v1424 = vadd.f32 %v1392, 1.0
        %v1425 = vadd.f32 %v1393, 1.0
        %v1426 = vadd.f32 %v1394, 1.0
        %v1427 = vadd.f32 %v1395, 1.0
        %v1428 = vadd.f32 %v1396, 1.0
        %v1429 = vadd.f32 %v1397, 1.0
        %v1430 = vadd.f32 %v1398, 1.0
        %v1431 = vadd.f32 %v1399, 1.0
        %v1432 = vadd.f32 %v1400, 1.0
        %v1433 = vadd.f32 %v1401, 1.0
        %v1434 = vadd.f32 %v1402, 1.0
        %v1435 = vadd.f32 %v1403, 1.0
        %v1436 = vadd.f32 %v1404, 1.0
        %v1437 = vadd.f32 %v1405, 1.0
        %v1438 = vadd.f32 %v1406, 1.0
        %v1439 = vadd.f32 %v1407, 1.0
        %v1440 = vadd.f32 %v1408, 1.0
        %v1441 = vadd.f32 %v1409, 1.0
        %v1442 = vadd.f32 %v1410, 1.0
        %v1443 = vadd.f32 %v1411, 1.0
        %v1444 = vadd.f32 %v1412, 1.0
        %v1445 = vadd.f32 %v1413, 1.0
        %v1446 = vadd.f32 %v1414, 1.0
        %v1447 = vadd.f32 %v1415, 1.0
        %v1448 = vadd.f32 %v1416, 1.0
        %v1449 = vadd.f32 %v1417, 1.0
        %v1450 = vadd.f32 %v1418, 1.0
        %v1451 = vadd.f32 %v1419, 1.0
        %v1452 = vadd.f32 %v1420, 1.0
        %v1453 = vadd.f32 %v1421, 1.0
        %v1454 = vadd.f32 %v1422, 1.0
        %v1455 = vadd.f32 %v1423, 1.0
        %v1456 = vmul.f32 %v560, %v1424
        %v1457 = vmul.f32 %v561, %v1425
        %v1458 = vmul.f32 %v562, %v1426
        %v1459 = vmul.f32 %v563, %v1427
        %v1460 = vmul.f32 %v564, %v1428
        %v1461 = vmul.f32 %v565, %v1429
        %v1462 = vmul.f32 %v566, %v1430
        %v1463 = vmul.f32 %v567, %v1431
        %v1464 = vmul.f32 %v568, %v1432
        %v1465 = vmul.f32 %v569, %v1433
        %v1466 = vmul.f32 %v570, %v1434
        %v1467 = vmul.f32 %v571, %v1435
        %v1468 = vmul.f32 %v572, %v1436
        %v1469 = vmul.f32 %v573, %v1437
        %v1470 = vmul.f32 %v574, %v1438
        %v1471 = vmul.f32 %v575, %v1439
        %v1472 = vmul.f32 %v576, %v1440
        %v1473 = vmul.f32 %v577, %v1441
        %v1474 = vmul.f32 %v578, %v1442
        %v1475 = vmul.f32 %v579, %v1443
        %v1476 = vmul.f32 %v580, %v1444
        %v1477 = vmul.f32 %v581, %v1445
        %v1478 = vmul.f32 %v582, %v1446
        %v1479 = vmul.f32 %v583, %v1447
        %v1480 = vmul.f32 %v584, %v1448
        %v1481 = vmul.f32 %v585, %v1449
        %v1482 = vmul.f32 %v586, %v1450
        %v1483 = vmul.f32 %v587, %v1451
        %v1484 = vmul.f32 %v588, %v1452
        %v1485 = vmul.f32 %v589, %v1453
        %v1486 = vmul.f32 %v590, %v1454
        %v1487 = vmul.f32 %v591, %v1455
        %v1488 = vpack.c.bf16 %v1458, %v1456
        %v1489 = vpack.c.bf16 %v1459, %v1457
        %v1490 = vpack.c.bf16 %v1462, %v1460
        %v1491 = vpack.c.bf16 %v1463, %v1461
        %v1492 = vpack.c.bf16 %v1466, %v1464
        %v1493 = vpack.c.bf16 %v1467, %v1465
        %v1494 = vpack.c.bf16 %v1470, %v1468
        %v1495 = vpack.c.bf16 %v1471, %v1469
        %v1496 = vpack.c.bf16 %v1474, %v1472
        %v1497 = vpack.c.bf16 %v1475, %v1473
        %v1498 = vpack.c.bf16 %v1478, %v1476
        %v1499 = vpack.c.bf16 %v1479, %v1477
        %v1500 = vpack.c.bf16 %v1482, %v1480
        %v1501 = vpack.c.bf16 %v1483, %v1481
        %v1502 = vpack.c.bf16 %v1486, %v1484
        %v1503 = vpack.c.bf16 %v1487, %v1485
        %v1504 = vld [vmem:[#allocation7] sm:$0xf]
        %v1505 = vld [vmem:[#allocation7 + $0x4] sm:$0xf]
        %v1506 = vld [vmem:[#allocation7 + $0x8] sm:$0xf]
        %v1507 = vld [vmem:[#allocation7 + $0xc] sm:$0xf]
        %v1508 = vld [vmem:[#allocation7 + $0x10] sm:$0xf]
        %v1509 = vld [vmem:[#allocation7 + $0x14] sm:$0xf]
        %v1510 = vld [vmem:[#allocation7 + $0x18] sm:$0xf]
        %v1511 = vld [vmem:[#allocation7 + $0x1c] sm:$0xf]
        %v1512 = vld [vmem:[#allocation7 + $0x20] sm:$0xf]
        %v1513 = vld [vmem:[#allocation7 + $0x24] sm:$0xf]
        %v1514 = vld [vmem:[#allocation7 + $0x28] sm:$0xf]
        %v1515 = vld [vmem:[#allocation7 + $0x2c] sm:$0xf]
        %v1516 = vld [vmem:[#allocation7 + $0x30] sm:$0xf]
        %v1517 = vld [vmem:[#allocation7 + $0x34] sm:$0xf]
        %v1518 = vld [vmem:[#allocation7 + $0x38] sm:$0xf]
        %v1519 = vld [vmem:[#allocation7 + $0x3c] sm:$0xf]
        %v1520 = vld [vmem:[#allocation7 + $0x40] sm:$0xf]
        %v1521 = vld [vmem:[#allocation7 + $0x44] sm:$0xf]
        %v1522 = vld [vmem:[#allocation7 + $0x48] sm:$0xf]
        %v1523 = vld [vmem:[#allocation7 + $0x4c] sm:$0xf]
        %v1524 = vld [vmem:[#allocation7 + $0x50] sm:$0xf]
        %v1525 = vld [vmem:[#allocation7 + $0x54] sm:$0xf]
        %v1526 = vld [vmem:[#allocation7 + $0x58] sm:$0xf]
        %v1527 = vld [vmem:[#allocation7 + $0x5c] sm:$0xf]
        %v1528 = vld [vmem:[#allocation7 + $0x60] sm:$0xf]
        %v1529 = vld [vmem:[#allocation7 + $0x64] sm:$0xf]
        %v1530 = vld [vmem:[#allocation7 + $0x68] sm:$0xf]
        %v1531 = vld [vmem:[#allocation7 + $0x6c] sm:$0xf]
        %v1532 = vld [vmem:[#allocation7 + $0x70] sm:$0xf]
        %v1533 = vld [vmem:[#allocation7 + $0x74] sm:$0xf]
        %v1534 = vld [vmem:[#allocation7 + $0x78] sm:$0xf]
        %v1535 = vld [vmem:[#allocation7 + $0x7c] sm:$0xf]
        %v1536 = vld [vmem:[%s4] sm:$0x1]
        %v1538 = vlaneseq
        %v1539 = vshrl.u32 %v1538, 7
        %v1540 = vsub.s32 0, %v1539
        %v1541 = vrot.slane %v1536, %v1540
        %v1575 = vunpack.c.l.b16 %v1504
        %v1576 = vunpack.c.l.b16 %v1505
        %v1577 = vunpack.c.l.b16 %v1506
        %v1578 = vunpack.c.l.b16 %v1507
        %v1579 = vunpack.c.l.b16 %v1508
        %v1580 = vunpack.c.l.b16 %v1509
        %v1581 = vunpack.c.l.b16 %v1510
        %v1582 = vunpack.c.l.b16 %v1511
        %v1583 = vunpack.c.l.b16 %v1512
        %v1584 = vunpack.c.l.b16 %v1513
        %v1585 = vunpack.c.l.b16 %v1514
        %v1586 = vunpack.c.l.b16 %v1515
        %v1587 = vunpack.c.l.b16 %v1516
        %v1588 = vunpack.c.l.b16 %v1517
        %v1589 = vunpack.c.l.b16 %v1518
        %v1590 = vunpack.c.l.b16 %v1519
        %v1591 = vunpack.c.l.b16 %v1520
        %v1592 = vunpack.c.l.b16 %v1521
        %v1593 = vunpack.c.l.b16 %v1522
        %v1594 = vunpack.c.l.b16 %v1523
        %v1595 = vunpack.c.l.b16 %v1524
        %v1596 = vunpack.c.l.b16 %v1525
        %v1597 = vunpack.c.l.b16 %v1526
        %v1598 = vunpack.c.l.b16 %v1527
        %v1599 = vunpack.c.l.b16 %v1528
        %v1600 = vunpack.c.l.b16 %v1529
        %v1601 = vunpack.c.l.b16 %v1530
        %v1602 = vunpack.c.l.b16 %v1531
        %v1603 = vunpack.c.l.b16 %v1532
        %v1604 = vunpack.c.l.b16 %v1533
        %v1605 = vunpack.c.l.b16 %v1534
        %v1606 = vunpack.c.l.b16 %v1535
        %v1607 = vpack.c.b16 %v1576, %v1575
        %v1608 = vpack.c.b16 %v1578, %v1577
        %v1609 = vpack.c.b16 %v1580, %v1579
        %v1610 = vpack.c.b16 %v1582, %v1581
        %v1611 = vpack.c.b16 %v1584, %v1583
        %v1612 = vpack.c.b16 %v1586, %v1585
        %v1613 = vpack.c.b16 %v1588, %v1587
        %v1614 = vpack.c.b16 %v1590, %v1589
        %v1615 = vpack.c.b16 %v1592, %v1591
        %v1616 = vpack.c.b16 %v1594, %v1593
        %v1617 = vpack.c.b16 %v1596, %v1595
        %v1618 = vpack.c.b16 %v1598, %v1597
        %v1619 = vpack.c.b16 %v1600, %v1599
        %v1620 = vpack.c.b16 %v1602, %v1601
        %v1621 = vpack.c.b16 %v1604, %v1603
        %v1622 = vpack.c.b16 %v1606, %v1605
        %1639 = vmatprep.subr.bf16.mxu0 0
        %1640 = vmatpush1.bf16.msra.mxu0 %v1607
        %1641 = vmatprep.subr.bf16.mxu0 0
        %1642 = vmatpush1.bf16.msra.mxu0 %v1608
        %1643 = vmatprep.subr.bf16.mxu0 0
        %1644 = vmatpush1.bf16.msra.mxu0 %v1609
        %1645 = vmatprep.subr.bf16.mxu0 0
        %1646 = vmatpush1.bf16.msra.mxu0 %v1610
        %1647 = vmatprep.subr.bf16.mxu0 0
        %1648 = vmatpush1.bf16.msra.mxu0 %v1611
        %1649 = vmatprep.subr.bf16.mxu0 0
        %1650 = vmatpush1.bf16.msra.mxu0 %v1612
        %1651 = vmatprep.subr.bf16.mxu0 0
        %1652 = vmatpush1.bf16.msra.mxu0 %v1613
        %1653 = vmatprep.subr.bf16.mxu0 0
        %1654 = vmatpush1.bf16.msra.mxu0 %v1614
        %1655 = vmatprep.subr.bf16.mxu0 0
        %1656 = vmatpush1.bf16.msra.mxu0 %v1615
        %1657 = vmatprep.subr.bf16.mxu0 0
        %1658 = vmatpush1.bf16.msra.mxu0 %v1616
        %1659 = vmatprep.subr.bf16.mxu0 0
        %1660 = vmatpush1.bf16.msra.mxu0 %v1617
        %1661 = vmatprep.subr.bf16.mxu0 0
        %1662 = vmatpush1.bf16.msra.mxu0 %v1618
        %1663 = vmatprep.subr.bf16.mxu0 0
        %1664 = vmatpush1.bf16.msra.mxu0 %v1619
        %1665 = vmatprep.subr.bf16.mxu0 0
        %1666 = vmatpush1.bf16.msra.mxu0 %v1620
        %1667 = vmatprep.subr.bf16.mxu0 0
        %1668 = vmatpush1.bf16.msra.mxu0 %v1621
        %1669 = vmatprep.subr.bf16.mxu0 0
        %1670 = vmatpush1.bf16.msra.mxu0 %v1622
        %1671 = vmatprep.mubr.bf16.mxu0 %v1489
        %1672 = vmatmul.mubr.bf16.gmra.mrb[0].mxu0 %v1488
        %v1673 = vpop.f32.mrb[0].mxu0
        %v1674 = vadd.f32 %v1541, %v1673
        %v1675 = vpop.f32.mrb[0].mxu0
        %v1676 = vpop.f32.mrb[0].mxu0
        %v1677 = vadd.f32 %v1541, %v1676
        %v1678 = vpop.f32.mrb[0].mxu0
        %1679 = vmatprep.mubr.bf16.mxu0 %v1491
        %1680 = vmatmul.mubr.bf16.gmra.mrb[0].mxu0 %v1490
        %v1681 = vpop.f32.mrb[0].mxu0
        %v1682 = vadd.f32 %v1541, %v1681
        %v1683 = vpop.f32.mrb[0].mxu0
        %v1684 = vpop.f32.mrb[0].mxu0
        %v1685 = vadd.f32 %v1541, %v1684
        %v1686 = vpop.f32.mrb[0].mxu0
        %1687 = vmatprep.mubr.bf16.mxu0 %v1493
        %1688 = vmatmul.mubr.bf16.gmra.mrb[0].mxu0 %v1492
        %v1689 = vpop.f32.mrb[0].mxu0
        %v1690 = vadd.f32 %v1541, %v1689
        %v1691 = vpop.f32.mrb[0].mxu0
        %v1692 = vpop.f32.mrb[0].mxu0
        %v1693 = vadd.f32 %v1541, %v1692
        %v1694 = vpop.f32.mrb[0].mxu0
        %1695 = vmatprep.mubr.bf16.mxu0 %v1495
        %1696 = vmatmul.mubr.bf16.gmra.mrb[0].mxu0 %v1494
        %v1697 = vpop.f32.mrb[0].mxu0
        %v1698 = vadd.f32 %v1541, %v1697
        %v1699 = vpop.f32.mrb[0].mxu0
        %v1700 = vpop.f32.mrb[0].mxu0
        %v1701 = vadd.f32 %v1541, %v1700
        %v1702 = vpop.f32.mrb[0].mxu0
        %1703 = vmatprep.mubr.bf16.mxu0 %v1497
        %1704 = vmatmul.mubr.bf16.gmra.mrb[0].mxu0 %v1496
        %v1705 = vpop.f32.mrb[0].mxu0
        %v1706 = vadd.f32 %v1541, %v1705
        %v1707 = vpop.f32.mrb[0].mxu0
        %v1708 = vpop.f32.mrb[0].mxu0
        %v1709 = vadd.f32 %v1541, %v1708
        %v1710 = vpop.f32.mrb[0].mxu0
        %1711 = vmatprep.mubr.bf16.mxu0 %v1499
        %1712 = vmatmul.mubr.bf16.gmra.mrb[0].mxu0 %v1498
        %v1713 = vpop.f32.mrb[0].mxu0
        %v1714 = vadd.f32 %v1541, %v1713
        %v1715 = vpop.f32.mrb[0].mxu0
        %v1716 = vpop.f32.mrb[0].mxu0
        %v1717 = vadd.f32 %v1541, %v1716
        %v1718 = vpop.f32.mrb[0].mxu0
        %1719 = vmatprep.mubr.bf16.mxu0 %v1501
        %1720 = vmatmul.mubr.bf16.gmra.mrb[0].mxu0 %v1500
        %v1721 = vpop.f32.mrb[0].mxu0
        %v1722 = vadd.f32 %v1541, %v1721
        %v1723 = vpop.f32.mrb[0].mxu0
        %v1724 = vpop.f32.mrb[0].mxu0
        %v1725 = vadd.f32 %v1541, %v1724
        %v1726 = vpop.f32.mrb[0].mxu0
        %1727 = vmatprep.mubr.bf16.mxu0 %v1503
        %1728 = vmatmul.mubr.bf16.gmra.mrb[0].mxu0 %v1502
        %v1729 = vpop.f32.mrb[0].mxu0
        %v1730 = vadd.f32 %v1541, %v1729
        %v1731 = vpop.f32.mrb[0].mxu0
        %v1732 = vpop.f32.mrb[0].mxu0
        %v1733 = vadd.f32 %v1541, %v1732
        %v1734 = vpop.f32.mrb[0].mxu0
        %1735 = vdwg.mxu0
        %1736 = vst [vmem:[%s271] sm:$0xff] %v1674
        %1737 = vst [vmem:[%s271 + $0x8] sm:$0xff] %v1677
        %1738 = vst [vmem:[%s271 + $0x10] sm:$0xff] %v1682
        %1739 = vst [vmem:[%s271 + $0x18] sm:$0xff] %v1685
        %1740 = vst [vmem:[%s271 + $0x20] sm:$0xff] %v1690
        %1741 = vst [vmem:[%s271 + $0x28] sm:$0xff] %v1693
        %1742 = vst [vmem:[%s271 + $0x30] sm:$0xff] %v1698
        %1743 = vst [vmem:[%s271 + $0x38] sm:$0xff] %v1701
        %1744 = vst [vmem:[%s271 + $0x40] sm:$0xff] %v1706
        %1745 = vst [vmem:[%s271 + $0x48] sm:$0xff] %v1709
        %1746 = vst [vmem:[%s271 + $0x50] sm:$0xff] %v1714
        %1747 = vst [vmem:[%s271 + $0x58] sm:$0xff] %v1717
        %1748 = vst [vmem:[%s271 + $0x60] sm:$0xff] %v1722
        %1749 = vst [vmem:[%s271 + $0x68] sm:$0xff] %v1725
        %1750 = vst [vmem:[%s271 + $0x70] sm:$0xff] %v1730
        %1751 = vst [vmem:[%s271 + $0x78] sm:$0xff] %v1733
        %s1752 = sand.u32 %s141, 1
        %s1753 = scalar_lea.sflag [#allocation4], %s1752
        %s1754 = sand.u32 %s141, 1
        %s1755 = smul.addr %s1754, 128
        %s1756 = scalar_lea.vmem [#allocation8], %s1755
        // Predicated region
        $region53: #{tpu_custom_call.1} parent=39 // pred_check
          %p1757 = pneg %p151
        $region54: #{tpu_custom_call.1} parent=39 // pred_check_branch
          %1759 = sbr.rel (%p1757) target = $region56
        $region55: #{tpu_custom_call.1} parent=39 // pred_region
          %s1760 = smul.u32 16, %s23
          %s1762 = ssub.s32 2048, 2048
          %1763 = vsyncadd %s1753, %s1762
          %s1764 = smul.addr %s1760, 128
          %s1765 = scalar_lea.hbm %s5, %s1764
          %s1766 = sshll.u32 %s1756, 4
          %s1767 = int_to_ptr.vmem [resolvable:$true] %s1766
          %1772 = dma.vmem_to_hbm [thread:$0]  %s1767, 2048, %s1765, %s1753, 128, 128, 8
        $region56: #{tpu_custom_call.1} parent=39 // pred_fallthru
          _
      $region40: #{tpu_custom_call.1} parent=5 // pred_fallthru
        _
      %p1773 = scmp.le.s32.totalorder 2, %s18
      // Predicated region
      $region57: #{tpu_custom_call.1} parent=5 // pred_check
        %p1774 = pneg %p1773
      $region58: #{tpu_custom_call.1} parent=5 // pred_check_branch
        %1776 = sbr.rel (%p1774) target = $region60
      $region59: #{tpu_custom_call.1} parent=5 // pred_region
        %s1777 = ssub.s32 %s18, 2
        // Predicated region
        $region61: #{tpu_custom_call.1} parent=59 // pred_check
          %p1778 = pneg %p157
        $region62: #{tpu_custom_call.1} parent=59 // pred_check_branch
          %1780 = sbr.rel (%p1778) target = $region64
        $region63: #{tpu_custom_call.1} parent=59 // pred_region
          %s1781 = sand.u32 %s142, 1
          %s1782 = scalar_lea.sflag [#allocation4], %s1781
          %s1783 = sand.u32 %s142, 1
          %s1784 = smul.addr %s1783, 128
          %s1785 = scalar_lea.vmem [#allocation8], %s1784
          %1786 = dma.done %s1782, 2048
        $region64: #{tpu_custom_call.1} parent=59 // pred_fallthru
          _
      $region60: #{tpu_custom_call.1} parent=5 // pred_fallthru
        _
    $region6: #{tpu_custom_call.1} parent=1 // loop_footer
      %s22 = sadd.s32 1, %s18
    $region7: #{tpu_custom_call.1} parent=1 // loop_footer_branch
      %17 = sbr.rel target = $region3
    $region8: #{tpu_custom_call.1} parent=1 // loop_exit
      _
    %1787 = vsyncpa [#allocation3], 1
    %s1788 = scalar_lea.sflag [#allocation3], 1
    %1789 = vsyncpa %s1788, 1
    %1790 = vsyncpa [#allocation6], 1
    %1791 = vsyncpa [#allocation4], 1
    %s1792 = scalar_lea.sflag [#allocation4], 1
    %1793 = vsyncpa %s1792, 1

// kernel: tpu_custom_call.1
$region0: #{tpu_custom_call.1}
  #allocation0 [shape = 'u32[]', space=smem, size = 0x4, offset = 0x4, fixed_abs, tag = 'smem constant byte address 0x4 - core index']
  #allocation1 [shape = 'u32[144,128]{1,0:T(1,128)}', space=vmem, size = 0x12000, scoped, tag = 'internal scratch']
  %s0 = inlined_call_operand.hbm [shape: bf16[512,128], index: 0, kind: input, shape index: {}]
  %s1 = inlined_call_operand.hbm [shape: bf16[128,256], index: 1, kind: input, shape index: {}]
  %s2 = inlined_call_operand.vmem [shape: f32[1,256], index: 2, kind: input, shape index: {}]
  %s3 = inlined_call_operand.hbm [shape: bf16[256,128], index: 3, kind: input, shape index: {}]
  %s4 = inlined_call_operand.vmem [shape: f32[1,128], index: 4, kind: input, shape index: {}]
  %s5 = inlined_call_operand.hbm [shape: f32[512,128], index: 5, kind: output, shape index: {}]
  %s6 = sld [smem:[#allocation0]]
  $region65: #{tpu_custom_call.1} parent=0
    _
  %s8 = ssub.s32 1, %s6
  %s9 = scalar_select 0, %s8, %s6
  $region1: #{tpu_custom_call.1} parent=0
    #allocation2 [shape = 'u8[65536]{0}', space=vmem, size = 0x10000, scoped, tag = 'input window, operand 0']
    #allocation3 [shape = 's32[2]{0}', space=sflag, size = 0x8, scoped, tag = 'scoped memory for tpu_custom_call.1']
    #allocation4 [shape = 's32[2]{0}', space=sflag, size = 0x8, scoped, tag = 'scoped memory for tpu_custom_call.1']
    #allocation5 [shape = 'u8[65536]{0}', space=vmem, size = 0x10000, scoped, tag = 'input window, operand 1, single buffered']
    #allocation6 [shape = 's32[1]{0}', space=sflag, size = 0x4, scoped, tag = 'scoped memory for tpu_custom_call.1']
    #allocation7 [shape = 'u8[65536]{0}', space=vmem, size = 0x10000, scoped, tag = 'input window, operand 3, single buffered']
    #allocation8 [shape = 'u8[131072]{0}', space=vmem, size = 0x20000, scoped, tag = 'output window, operand 0']
    %10 = vsyncpa [#allocation3], 0
    %s11 = scalar_lea.sflag [#allocation3], 1
    %12 = vsyncpa %s11, 0
    %13 = vsyncpa [#allocation6], 0
    %14 = vsyncpa [#allocation4], 0
    %s15 = scalar_lea.sflag [#allocation4], 1
    %16 = vsyncpa %s15, 0
    loop: start=0, step=1, limit=6
    $region2: #{tpu_custom_call.1} parent=1 // loop_pre_header
      _
    $region3: #{tpu_custom_call.1} parent=1 // loop_header
      %s18 = sphi 0, %s22
      %p19 = scmp.ge.s32.totalorder %s18, 6
      %s28 = sphi 0, %s30
      %s31 = sphi 0, %s28
      %s32 = sphi 0, %s31
      %s48 = sphi 0, %s32
      %s52 = sphi 0, %s52
      %s54 = sphi 0, %s52
      %s55 = sphi 0, %s54
      %s69 = sphi 0, %s55
      %s73 = sphi 0, %s73
      %s75 = sphi 0, %s73
      %s76 = sphi 0, %s75
      %s90 = sphi 0, %s76
      %s94 = sphi 0, %s94
      %s96 = sphi 0, %s94
      %s97 = sphi 0, %s96
      %s111 = sphi 0, %s97
      %s115 = sphi 0, %s115
      %s117 = sphi 0, %s115
      %s118 = sphi 0, %s117
      %s132 = sphi 0, %s118
      %s138 = sphi 0, %s140
      %s141 = sphi 0, %s138
      %s142 = sphi 0, %s141
      %s158 = sphi 0, %s142
    $region4: #{tpu_custom_call.1} parent=1 // loop_header_branch
      %21 = sbr.rel (%p19) target = $region8
    $region5: #{tpu_custom_call.1} parent=1 // loop_body
      %s23 = ssub.s32 %s18, 1
      %s24 = ssub.s32 %s18, 2
      %s25 = sadd.s32 %s18, 1
      %s26 = ssub.s32 %s18, %s25
      %p27 = scmp.eq.s32.totalorder %s26, 0
      %s29 = sadd.s32 %s28, 1
      %s30 = scalar_select %p27, %s28, %s29
      %p33 = pneg %p27
      %p34 = scmp.eq.s32.totalorder %s18, 3
      %p35 = por %p33, %p34
      %p36 = scmp.ne.s32.totalorder %s28, %s31
      %p37 = scmp.eq.s32.totalorder %s18, 0
      %p38 = por %p36, %p37
      %p39 = scmp.ne.s32.totalorder %s28, %s31
      %p40 = scmp.eq.s32.totalorder %s23, 3
      %p41 = por %p39, %p40
      %p42 = scmp.ne.s32.totalorder %s31, %s32
      %p43 = scmp.eq.s32.totalorder %s23, 0
      %p44 = por %p42, %p43
      %p45 = scmp.ne.s32.totalorder %s31, %s32
      %p46 = scmp.eq.s32.totalorder %s24, 3
      %p47 = por %p45, %p46
      %p49 = scmp.ne.s32.totalorder %s32, %s48
      %p50 = scmp.eq.s32.totalorder %s24, 0
      %p51 = por %p49, %p50
      %s53 = sadd.s32 %s52, 1
      %p56 = scmp.eq.s32.totalorder %s18, 3
      %p57 = scmp.ne.s32.totalorder %s52, %s54
      %p58 = scmp.eq.s32.totalorder %s18, 0
      %p59 = por %p57, %p58
      %p60 = scmp.ne.s32.totalorder %s52, %s54
      %p61 = scmp.eq.s32.totalorder %s23, 3
      %p62 = por %p60, %p61
      %p63 = scmp.ne.s32.totalorder %s54, %s55
      %p64 = scmp.eq.s32.totalorder %s23, 0
      %p65 = por %p63, %p64
      %p66 = scmp.ne.s32.totalorder %s54, %s55
      %p67 = scmp.eq.s32.totalorder %s24, 3
      %p68 = por %p66, %p67
      %p70 = scmp.ne.s32.totalorder %s55, %s69
      %p71 = scmp.eq.s32.totalorder %s24, 0
      %p72 = por %p70, %p71
      %s74 = sadd.s32 %s73, 1
      %p77 = scmp.eq.s32.totalorder %s18, 3
      %p78 = scmp.ne.s32.totalorder %s73, %s75
      %p79 = scmp.eq.s32.totalorder %s18, 0
      %p80 = por %p78, %p79
      %p81 = scmp.ne.s32.totalorder %s73, %s75
      %p82 = scmp.eq.s32.totalorder %s23, 3
      %p83 = por %p81, %p82
      %p84 = scmp.ne.s32.totalorder %s75, %s76
      %p85 = scmp.eq.s32.totalorder %s23, 0
      %p86 = por %p84, %p85
      %p87 = scmp.ne.s32.totalorder %s75, %s76
      %p88 = scmp.eq.s32.totalorder %s24, 3
      %p89 = por %p87, %p88
      %p91 = scmp.ne.s32.totalorder %s76, %s90
      %p92 = scmp.eq.s32.totalorder %s24, 0
      %p93 = por %p91, %p92
      %s95 = sadd.s32 %s94, 1
      %p98 = scmp.eq.s32.totalorder %s18, 3
      %p99 = scmp.ne.s32.totalorder %s94, %s96
      %p100 = scmp.eq.s32.totalorder %s18, 0
      %p101 = por %p99, %p100
      %p102 = scmp.ne.s32.totalorder %s94, %s96
      %p103 = scmp.eq.s32.totalorder %s23, 3
      %p104 = por %p102, %p103
      %p105 = scmp.ne.s32.totalorder %s96, %s97
      %p106 = scmp.eq.s32.totalorder %s23, 0
      %p107 = por %p105, %p106
      %p108 = scmp.ne.s32.totalorder %s96, %s97
      %p109 = scmp.eq.s32.totalorder %s24, 3
      %p110 = por %p108, %p109
      %p112 = scmp.ne.s32.totalorder %s97, %s111
      %p113 = scmp.eq.s32.totalorder %s24, 0
      %p114 = por %p112, %p113
      %s116 = sadd.s32 %s115, 1
      %p119 = scmp.eq.s32.totalorder %s18, 3
      %p120 = scmp.ne.s32.totalorder %s115, %s117
      %p121 = scmp.eq.s32.totalorder %s18, 0
      %p122 = por %p120, %p121
      %p123 = scmp.ne.s32.totalorder %s115, %s117
      %p124 = scmp.eq.s32.totalorder %s23, 3
      %p125 = por %p123, %p124
      %p126 = scmp.ne.s32.totalorder %s117, %s118
      %p127 = scmp.eq.s32.totalorder %s23, 0
      %p128 = por %p126, %p127
      %p129 = scmp.ne.s32.totalorder %s117, %s118
      %p130 = scmp.eq.s32.totalorder %s24, 3
      %p131 = por %p129, %p130
      %p133 = scmp.ne.s32.totalorder %s118, %s132
      %p134 = scmp.eq.s32.totalorder %s24, 0
      %p135 = por %p133, %p134
      %s136 = ssub.s32 %s18, %s25
      %p137 = scmp.eq.s32.totalorder %s136, 0
      %s139 = sadd.s32 %s138, 1
      %s140 = scalar_select %p137, %s138, %s139
      %p143 = pneg %p137
      %p144 = scmp.eq.s32.totalorder %s18, 3
      %p145 = por %p143, %p144
      %p146 = scmp.ne.s32.totalorder %s138, %s141
      %p147 = scmp.eq.s32.totalorder %s18, 0
      %p148 = por %p146, %p147
      %p149 = scmp.ne.s32.totalorder %s138, %s141
      %p150 = scmp.eq.s32.totalorder %s23, 3
      %p151 = por %p149, %p150
      %p152 = scmp.ne.s32.totalorder %s141, %s142
      %p153 = scmp.eq.s32.totalorder %s23, 0
      %p154 = por %p152, %p153
      %p155 = scmp.ne.s32.totalorder %s141, %s142
      %p156 = scmp.eq.s32.totalorder %s24, 3
      %p157 = por %p155, %p156
      %p159 = scmp.ne.s32.totalorder %s142, %s158
      %p160 = scmp.eq.s32.totalorder %s24, 0
      %p161 = por %p159, %p160
      %p162 = scmp.le.s32.totalorder 1, %s18
      %p163 = scmp.lt.s32.totalorder %s18, 5
      %p164 = pnand %p162, %p163
      %p165 = pneg %p164
      // Predicated region
      $region9: #{tpu_custom_call.1} parent=5 // pred_check
        _
      $region10: #{tpu_custom_call.1} parent=5 // pred_check_branch
        %167 = sbr.rel (%p164) target = $region12
      $region11: #{tpu_custom_call.1} parent=5 // pred_region
        %s168 = ssub.s32 %s18, 1
        // Predicated region
        $region13: #{tpu_custom_call.1} parent=11 // pred_check
          %p169 = pneg %p65
        $region14: #{tpu_custom_call.1} parent=11 // pred_check_branch
          %171 = sbr.rel (%p169) target = $region16
        $region15: #{tpu_custom_call.1} parent=11 // pred_region
          %s173 = ssub.s32 2048, 2048
          %174 = vsyncadd [#allocation6], %s173
          %s175 = sshll.u32 [#allocation5], 4
          %s176 = int_to_ptr.vmem [resolvable:$true] %s175
          %181 = dma.hbm_to_vmem [thread:$0]  %s1, 2048, %s176, [#allocation6], 128, 128, 8
        $region16: #{tpu_custom_call.1} parent=11 // pred_fallthru
          _
        // Predicated region
        $region17: #{tpu_custom_call.1} parent=11 // pred_check
          %p182 = pneg %p86
        $region18: #{tpu_custom_call.1} parent=11 // pred_check_branch
          %184 = sbr.rel (%p182) target = $region20
        $region19: #{tpu_custom_call.1} parent=11 // pred_region
          _
        $region20: #{tpu_custom_call.1} parent=11 // pred_fallthru
          _
        // Predicated region
        $region21: #{tpu_custom_call.1} parent=11 // pred_check
          %p185 = pneg %p107
        $region22: #{tpu_custom_call.1} parent=11 // pred_check_branch
          %187 = sbr.rel (%p185) target = $region24
        $region23: #{tpu_custom_call.1} parent=11 // pred_region
          %s189 = ssub.s32 2048, 2048
          %190 = vsyncadd [#allocation6], %s189
          %s191 = sshll.u32 [#allocation7], 4
          %s192 = int_to_ptr.vmem [resolvable:$true] %s191
          %197 = dma.hbm_to_vmem [thread:$0]  %s3, 2048, %s192, [#allocation6], 64, 64, 4
        $region24: #{tpu_custom_call.1} parent=11 // pred_fallthru
          _
        // Predicated region
        $region25: #{tpu_custom_call.1} parent=11 // pred_check
          %p198 = pneg %p128
        $region26: #{tpu_custom_call.1} parent=11 // pred_check_branch
          %200 = sbr.rel (%p198) target = $region28
        $region27: #{tpu_custom_call.1} parent=11 // pred_region
          _
        $region28: #{tpu_custom_call.1} parent=11 // pred_fallthru
          _
      $region12: #{tpu_custom_call.1} parent=5 // pred_fallthru
        _
      %p201 = scmp.lt.s32.totalorder %s18, 4
      // Predicated region
      $region29: #{tpu_custom_call.1} parent=5 // pred_check
        %p202 = pneg %p201
      $region30: #{tpu_custom_call.1} parent=5 // pred_check_branch
        %204 = sbr.rel (%p202) target = $region32
      $region31: #{tpu_custom_call.1} parent=5 // pred_region
        // Predicated region
        $region33: #{tpu_custom_call.1} parent=31 // pred_check
          %p205 = pneg %p38
        $region34: #{tpu_custom_call.1} parent=31 // pred_check_branch
          %207 = sbr.rel (%p205) target = $region36
        $region35: #{tpu_custom_call.1} parent=31 // pred_region
          %s208 = sand.u32 %s28, 1
          %s209 = scalar_lea.sflag [#allocation3], %s208
          %s210 = sand.u32 %s28, 1
          %s211 = smul.addr %s210, 64
          %s212 = scalar_lea.vmem [#allocation2], %s211
          %s213 = smul.u32 16, %s18
          %s215 = ssub.s32 1024, 1024
          %216 = vsyncadd %s209, %s215
          %s217 = smul.addr %s213, 64
          %s218 = scalar_lea.hbm %s0, %s217
          %s219 = sshll.u32 %s212, 4
          %s220 = int_to_ptr.vmem [resolvable:$true] %s219
          %225 = dma.hbm_to_vmem [thread:$0]  %s218, 1024, %s220, %s209, 64, 64, 4
        $region36: #{tpu_custom_call.1} parent=31 // pred_fallthru
          _
      $region32: #{tpu_custom_call.1} parent=5 // pred_fallthru
        _
      %p226 = scmp.le.s32.totalorder 1, %s18
      %p227 = scmp.lt.s32.totalorder %s18, 5
      %p228 = pnand %p226, %p227
      %p229 = pneg %p228
      // Predicated region
      $region37: #{tpu_custom_call.1} parent=5 // pred_check
        _
      $region38: #{tpu_custom_call.1} parent=5 // pred_check_branch
        %231 = sbr.rel (%p228) target = $region40
      $region39: #{tpu_custom_call.1} parent=5 // pred_region
        %s232 = ssub.s32 %s18, 1
        %s233 = sand.u32 %s31, 1
        %s234 = scalar_lea.sflag [#allocation3], %s233
        %s235 = sand.u32 %s31, 1
        %s236 = smul.addr %s235, 64
        %s237 = scalar_lea.vmem [#allocation2], %s236
        // Predicated region
        $region41: #{tpu_custom_call.1} parent=39 // pred_check
          %p238 = pneg %p44
        $region42: #{tpu_custom_call.1} parent=39 // pred_check_branch
          %240 = sbr.rel (%p238) target = $region44
        $region43: #{tpu_custom_call.1} parent=39 // pred_region
          %241 = dma.done %s234, 1024
        $region44: #{tpu_custom_call.1} parent=39 // pred_fallthru
          _
        // Predicated region
        $region45: #{tpu_custom_call.1} parent=39 // pred_check
          %p242 = pneg %p65
        $region46: #{tpu_custom_call.1} parent=39 // pred_check_branch
          %244 = sbr.rel (%p242) target = $region48
        $region47: #{tpu_custom_call.1} parent=39 // pred_region
          %245 = dma.done [#allocation6], 2048
        $region48: #{tpu_custom_call.1} parent=39 // pred_fallthru
          _
        // Predicated region
        $region49: #{tpu_custom_call.1} parent=39 // pred_check
          %p246 = pneg %p107
        $region50: #{tpu_custom_call.1} parent=39 // pred_check_branch
          %248 = sbr.rel (%p246) target = $region52
        $region51: #{tpu_custom_call.1} parent=39 // pred_region
          %249 = dma.done [#allocation6], 2048
        $region52: #{tpu_custom_call.1} parent=39 // pred_fallthru
          _
        %s250 = sand.u32 %s31, 1
        %s251 = scalar_lea.sflag [#allocation3], %s250
        %s252 = sand.u32 %s31, 1
        %s253 = smul.addr %s252, 64
        %s254 = scalar_lea.vmem [#allocation2], %s253
        %p255 = pneg %p44
        %p256 = pneg %p41
        %p257 = pneg %p65
        %p258 = pneg %p62
        %p259 = pneg %p86
        %p260 = pneg %p83
        %p261 = pneg %p107
        %p262 = pneg %p104
        %p263 = pneg %p128
        %p264 = pneg %p125
        %p265 = pneg %p154
        %p266 = pneg %p151
        %s267 = sand.u32 %s141, 1
        %s268 = scalar_lea.sflag [#allocation4], %s267
        %s269 = sand.u32 %s141, 1
        %s270 = smul.addr %s269, 128
        %s271 = scalar_lea.vmem [#allocation8], %s270
        %s272 = smul.u32 16, %s23
        %s273 = smul.u32 16, %s23
        %v275 = vld [vmem:[%s237] sm:$0xf]
        %v276 = vld [vmem:[%s237 + $0x4] sm:$0xf]
        %v277 = vld [vmem:[%s237 + $0x8] sm:$0xf]
        %v278 = vld [vmem:[%s237 + $0xc] sm:$0xf]
        %v279 = vld [vmem:[%s237 + $0x10] sm:$0xf]
        %v280 = vld [vmem:[%s237 + $0x14] sm:$0xf]
        %v281 = vld [vmem:[%s237 + $0x18] sm:$0xf]
        %v282 = vld [vmem:[%s237 + $0x1c] sm:$0xf]
        %v283 = vld [vmem:[%s237 + $0x20] sm:$0xf]
        %v284 = vld [vmem:[%s237 + $0x24] sm:$0xf]
        %v285 = vld [vmem:[%s237 + $0x28] sm:$0xf]
        %v286 = vld [vmem:[%s237 + $0x2c] sm:$0xf]
        %v287 = vld [vmem:[%s237 + $0x30] sm:$0xf]
        %v288 = vld [vmem:[%s237 + $0x34] sm:$0xf]
        %v289 = vld [vmem:[%s237 + $0x38] sm:$0xf]
        %v290 = vld [vmem:[%s237 + $0x3c] sm:$0xf]
        %v291 = vld [vmem:[#allocation5] sm:$0xff]
        %v292 = vld [vmem:[#allocation5 + $0x8] sm:$0xff]
        %v293 = vld [vmem:[#allocation5 + $0x10] sm:$0xff]
        %v294 = vld [vmem:[#allocation5 + $0x18] sm:$0xff]
        %v295 = vld [vmem:[#allocation5 + $0x20] sm:$0xff]
        %v296 = vld [vmem:[#allocation5 + $0x28] sm:$0xff]
        %v297 = vld [vmem:[#allocation5 + $0x30] sm:$0xff]
        %v298 = vld [vmem:[#allocation5 + $0x38] sm:$0xff]
        %v299 = vld [vmem:[#allocation5 + $0x40] sm:$0xff]
        %v300 = vld [vmem:[#allocation5 + $0x48] sm:$0xff]
        %v301 = vld [vmem:[#allocation5 + $0x50] sm:$0xff]
        %v302 = vld [vmem:[#allocation5 + $0x58] sm:$0xff]
        %v303 = vld [vmem:[#allocation5 + $0x60] sm:$0xff]
        %v304 = vld [vmem:[#allocation5 + $0x68] sm:$0xff]
        %v305 = vld [vmem:[#allocation5 + $0x70] sm:$0xff]
        %v306 = vld [vmem:[#allocation5 + $0x78] sm:$0xff]
        %v307 = vld [vmem:[%s2] sm:$0x3]
        %v309 = vlaneseq
        %v310 = vshrl.u32 %v309, 7
        %v311 = vsub.s32 0, %v310
        %v312 = vrot.slane %v307, %v311
        %v313 = vlaneseq
        %v314 = vshrl.u32 %v313, 7
        %v315 = vsub.s32 1, %v314
        %v316 = vrot.slane %v307, %v315
        %v335 = vunpack.c.l.b16 %v275
        %v336 = vunpack.c.l.b16 %v276
        %v337 = vunpack.c.l.b16 %v277
        %v338 = vunpack.c.l.b16 %v278
        %v339 = vunpack.c.l.b16 %v279
        %v340 = vunpack.c.l.b16 %v280
        %v341 = vunpack.c.l.b16 %v281
        %v342 = vunpack.c.l.b16 %v282
        %v343 = vunpack.c.l.b16 %v283
        %v344 = vunpack.c.l.b16 %v284
        %v345 = vunpack.c.l.b16 %v285
        %v346 = vunpack.c.l.b16 %v286
        %v347 = vunpack.c.l.b16 %v287
        %v348 = vunpack.c.l.b16 %v288
        %v349 = vunpack.c.l.b16 %v289
        %v350 = vunpack.c.l.b16 %v290
        %v351 = vpack.c.b16 %v336, %v335
        %v352 = vpack.c.b16 %v338, %v337
        %v353 = vpack.c.b16 %v340, %v339
        %v354 = vpack.c.b16 %v342, %v341
        %v355 = vpack.c.b16 %v344, %v343
        %v356 = vpack.c.b16 %v346, %v345
        %v357 = vpack.c.b16 %v348, %v347
        %v358 = vpack.c.b16 %v350, %v349
        %v383 = vunpack.c.l.b16 %v291
        %v384 = vunpack.c.h.b16 %v291
        %v385 = vunpack.c.l.b16 %v292
        %v386 = vunpack.c.h.b16 %v292
        %v387 = vunpack.c.l.b16 %v293
        %v388 = vunpack.c.h.b16 %v293
        %v389 = vunpack.c.l.b16 %v294
        %v390 = vunpack.c.h.b16 %v294
        %v391 = vunpack.c.l.b16 %v295
        %v392 = vunpack.c.h.b16 %v295
        %v393 = vunpack.c.l.b16 %v296
        %v394 = vunpack.c.h.b16 %v296
        %v395 = vunpack.c.l.b16 %v297
        %v396 = vunpack.c.h.b16 %v297
        %v397 = vunpack.c.l.b16 %v298
        %v398 = vunpack.c.h.b16 %v298
        %v399 = vunpack.c.l.b16 %v299
        %v400 = vunpack.c.h.b16 %v299
        %v401 = vunpack.c.l.b16 %v300
        %v402 = vunpack.c.h.b16 %v300
        %v403 = vunpack.c.l.b16 %v301
        %v404 = vunpack.c.h.b16 %v301
        %v405 = vunpack.c.l.b16 %v302
        %v406 = vunpack.c.h.b16 %v302
        %v407 = vunpack.c.l.b16 %v303
        %v408 = vunpack.c.h.b16 %v303
        %v409 = vunpack.c.l.b16 %v304
        %v410 = vunpack.c.h.b16 %v304
        %v411 = vunpack.c.l.b16 %v305
        %v412 = vunpack.c.h.b16 %v305
        %v413 = vunpack.c.l.b16 %v306
        %v414 = vunpack.c.h.b16 %v306
        %v415 = vpack.c.b16 %v385, %v383
        %v416 = vpack.c.b16 %v386, %v384
        %v417 = vpack.c.b16 %v389, %v387
        %v418 = vpack.c.b16 %v390, %v388
        %v419 = vpack.c.b16 %v393, %v391
        %v420 = vpack.c.b16 %v394, %v392
        %v421 = vpack.c.b16 %v397, %v395
        %v422 = vpack.c.b16 %v398, %v396
        %v423 = vpack.c.b16 %v401, %v399
        %v424 = vpack.c.b16 %v402, %v400
        %v425 = vpack.c.b16 %v405, %v403
        %v426 = vpack.c.b16 %v406, %v404
        %v427 = vpack.c.b16 %v409, %v407
        %v428 = vpack.c.b16 %v410, %v408
        %v429 = vpack.c.b16 %v413, %v411
        %v430 = vpack.c.b16 %v414, %v412
        %447 = vmatprep.subr.bf16.mxu0 %v416
        %448 = vmatpush1.bf16.msra.mxu0 %v415
        %449 = vmatprep.subr.bf16.mxu0 %v418
        %450 = vmatpush1.bf16.msra.mxu0 %v417
        %451 = vmatprep.subr.bf16.mxu0 %v420
        %452 = vmatpush1.bf16.msra.mxu0 %v419
        %453 = vmatprep.subr.bf16.mxu0 %v422
        %454 = vmatpush1.bf16.msra.mxu0 %v421
        %455 = vmatprep.subr.bf16.mxu0 %v424
        %456 = vmatpush1.bf16.msra.mxu0 %v423
        %457 = vmatprep.subr.bf16.mxu0 %v426
        %458 = vmatpush1.bf16.msra.mxu0 %v425
        %459 = vmatprep.subr.bf16.mxu0 %v428
        %460 = vmatpush1.bf16.msra.mxu0 %v427
        %461 = vmatprep.subr.bf16.mxu0 %v430
        %462 = vmatpush1.bf16.msra.mxu0 %v429
        %463 = vmatprep.subr.bf16.mxu0 0
        %464 = vmatpush1.bf16.msra.mxu0 0
        %465 = vmatprep.subr.bf16.mxu0 0
        %466 = vmatpush1.bf16.msra.mxu0 0
        %467 = vmatprep.subr.bf16.mxu0 0
        %468 = vmatpush1.bf16.msra.mxu0 0
        %469 = vmatprep.subr.bf16.mxu0 0
        %470 = vmatpush1.bf16.msra.mxu0 0
        %471 = vmatprep.subr.bf16.mxu0 0
        %472 = vmatpush1.bf16.msra.mxu0 0
        %473 = vmatprep.subr.bf16.mxu0 0
        %474 = vmatpush1.bf16.msra.mxu0 0
        %475 = vmatprep.subr.bf16.mxu0 0
        %476 = vmatpush1.bf16.msra.mxu0 0
        %477 = vmatprep.subr.bf16.mxu0 0
        %478 = vmatpush1.bf16.msra.mxu0 0
        %479 = vmatprep.mubr.bf16.mxu0 0
        %480 = vmatmul.mubr.bf16.gmra.mrb[0].mxu0 %v351
        %v481 = vpop.f32.mrb[0].mxu0
        %v482 = vadd.f32 %v312, %v481
        %v483 = vpop.f32.mrb[0].mxu0
        %v484 = vadd.f32 %v316, %v483
        %v485 = vpop.f32.mrb[0].mxu0
        %v486 = vadd.f32 %v312, %v485
        %v487 = vpop.f32.mrb[0].mxu0
        %v488 = vadd.f32 %v316, %v487
        %489 = vmatprep.mubr.bf16.mxu0 0
        %490 = vmatmul.mubr.bf16.gmra.mrb[0].mxu0 %v352
        %v491 = vpop.f32.mrb[0].mxu0
        %v492 = vadd.f32 %v312, %v491
        %v493 = vpop.f32.mrb[0].mxu0
        %v494 = vadd.f32 %v316, %v493
        %v495 = vpop.f32.mrb[0].mxu0
        %v496 = vadd.f32 %v312, %v495
        %v497 = vpop.f32.mrb[0].mxu0
        %v498 = vadd.f32 %v316, %v497
        %499 = vmatprep.mubr.bf16.mxu0 0
        %500 = vmatmul.mubr.bf16.gmra.mrb[0].mxu0 %v353
        %v501 = vpop.f32.mrb[0].mxu0
        %v502 = vadd.f32 %v312, %v501
        %v503 = vpop.f32.mrb[0].mxu0
        %v504 = vadd.f32 %v316, %v503
        %v505 = vpop.f32.mrb[0].mxu0
        %v506 = vadd.f32 %v312, %v505
        %v507 = vpop.f32.mrb[0].mxu0
        %v508 = vadd.f32 %v316, %v507
        %509 = vmatprep.mubr.bf16.mxu0 0
        %510 = vmatmul.mubr.bf16.gmra.mrb[0].mxu0 %v354
        %v511 = vpop.f32.mrb[0].mxu0
        %v512 = vadd.f32 %v312, %v511
        %v513 = vpop.f32.mrb[0].mxu0
        %v514 = vadd.f32 %v316, %v513
        %v515 = vpop.f32.mrb[0].mxu0
        %v516 = vadd.f32 %v312, %v515
        %v517 = vpop.f32.mrb[0].mxu0
        %v518 = vadd.f32 %v316, %v517
        %519 = vmatprep.mubr.bf16.mxu0 0
        %520 = vmatmul.mubr.bf16.gmra.mrb[0].mxu0 %v355
        %v521 = vpop.f32.mrb[0].mxu0
        %v522 = vadd.f32 %v312, %v521
        %v523 = vpop.f32.mrb[0].mxu0
        %v524 = vadd.f32 %v316, %v523
        %v525 = vpop.f32.mrb[0].mxu0
        %v526 = vadd.f32 %v312, %v525
        %v527 = vpop.f32.mrb[0].mxu0
        %v528 = vadd.f32 %v316, %v527
        %529 = vmatprep.mubr.bf16.mxu0 0
        %530 = vmatmul.mubr.bf16.gmra.mrb[0].mxu0 %v356
        %v531 = vpop.f32.mrb[0].mxu0
        %v532 = vadd.f32 %v312, %v531
        %v533 = vpop.f32.mrb[0].mxu0
        %v534 = vadd.f32 %v316, %v533
        %v535 = vpop.f32.mrb[0].mxu0
        %v536 = vadd.f32 %v312, %v535
        %v537 = vpop.f32.mrb[0].mxu0
        %v538 = vadd.f32 %v316, %v537
        %539 = vmatprep.mubr.bf16.mxu0 0
        %540 = vmatmul.mubr.bf16.gmra.mrb[0].mxu0 %v357
        %v541 = vpop.f32.mrb[0].mxu0
        %v542 = vadd.f32 %v312, %v541
        %v543 = vpop.f32.mrb[0].mxu0
        %v544 = vadd.f32 %v316, %v543
        %v545 = vpop.f32.mrb[0].mxu0
        %v546 = vadd.f32 %v312, %v545
        %v547 = vpop.f32.mrb[0].mxu0
        %v548 = vadd.f32 %v316, %v547
        %549 = vmatprep.mubr.bf16.mxu0 0
        %550 = vmatmul.mubr.bf16.gmra.mrb[0].mxu0 %v358
        %v551 = vpop.f32.mrb[0].mxu0
        %v552 = vadd.f32 %v312, %v551
        %v553 = vpop.f32.mrb[0].mxu0
        %v554 = vadd.f32 %v316, %v553
        %v555 = vpop.f32.mrb[0].mxu0
        %v556 = vadd.f32 %v312, %v555
        %v557 = vpop.f32.mrb[0].mxu0
        %v558 = vadd.f32 %v316, %v557
        %559 = vdwg.mxu0
        %v560 = vmul.f32 %v482, 0.5
        %v561 = vmul.f32 %v484, 0.5
        %v562 = vmul.f32 %v486, 0.5
        %v563 = vmul.f32 %v488, 0.5
        %v564 = vmul.f32 %v492, 0.5
        %v565 = vmul.f32 %v494, 0.5
        %v566 = vmul.f32 %v496, 0.5
        %v567 = vmul.f32 %v498, 0.5
        %v568 = vmul.f32 %v502, 0.5
        %v569 = vmul.f32 %v504, 0.5
        %v570 = vmul.f32 %v506, 0.5
        %v571 = vmul.f32 %v508, 0.5
        %v572 = vmul.f32 %v512, 0.5
        %v573 = vmul.f32 %v514, 0.5
        %v574 = vmul.f32 %v516, 0.5
        %v575 = vmul.f32 %v518, 0.5
        %v576 = vmul.f32 %v522, 0.5
        %v577 = vmul.f32 %v524, 0.5
        %v578 = vmul.f32 %v526, 0.5
        %v579 = vmul.f32 %v528, 0.5
        %v580 = vmul.f32 %v532, 0.5
        %v581 = vmul.f32 %v534, 0.5
        %v582 = vmul.f32 %v536, 0.5
        %v583 = vmul.f32 %v538, 0.5
        %v584 = vmul.f32 %v542, 0.5
        %v585 = vmul.f32 %v544, 0.5
        %v586 = vmul.f32 %v546, 0.5
        %v587 = vmul.f32 %v548, 0.5
        %v588 = vmul.f32 %v552, 0.5
        %v589 = vmul.f32 %v554, 0.5
        %v590 = vmul.f32 %v556, 0.5
        %v591 = vmul.f32 %v558, 0.5
        %v592 = vmul.f32 %v482, 0.70710677
        %v593 = vmul.f32 %v484, 0.70710677
        %v594 = vmul.f32 %v486, 0.70710677
        %v595 = vmul.f32 %v488, 0.70710677
        %v596 = vmul.f32 %v492, 0.70710677
        %v597 = vmul.f32 %v494, 0.70710677
        %v598 = vmul.f32 %v496, 0.70710677
        %v599 = vmul.f32 %v498, 0.70710677
        %v600 = vmul.f32 %v502, 0.70710677
        %v601 = vmul.f32 %v504, 0.70710677
        %v602 = vmul.f32 %v506, 0.70710677
        %v603 = vmul.f32 %v508, 0.70710677
        %v604 = vmul.f32 %v512, 0.70710677
        %v605 = vmul.f32 %v514, 0.70710677
        %v606 = vmul.f32 %v516, 0.70710677
        %v607 = vmul.f32 %v518, 0.70710677
        %v608 = vmul.f32 %v522, 0.70710677
        %v609 = vmul.f32 %v524, 0.70710677
        %v610 = vmul.f32 %v526, 0.70710677
        %v611 = vmul.f32 %v528, 0.70710677
        %v612 = vmul.f32 %v532, 0.70710677
        %v613 = vmul.f32 %v534, 0.70710677
        %v614 = vmul.f32 %v536, 0.70710677
        %v615 = vmul.f32 %v538, 0.70710677
        %v616 = vmul.f32 %v542, 0.70710677
        %v617 = vmul.f32 %v544, 0.70710677
        %v618 = vmul.f32 %v546, 0.70710677
        %v619 = vmul.f32 %v548, 0.70710677
        %v620 = vmul.f32 %v552, 0.70710677
        %v621 = vmul.f32 %v554, 0.70710677
        %v622 = vmul.f32 %v556, 0.70710677
        %v623 = vmul.f32 %v558, 0.70710677
        %vm624 = vcmp.ge.f32.partialorder %v592, 0.0
        %vm625 = vcmp.ge.f32.partialorder %v593, 0.0
        %vm626 = vcmp.ge.f32.partialorder %v594, 0.0
        %vm627 = vcmp.ge.f32.partialorder %v595, 0.0
        %vm628 = vcmp.ge.f32.partialorder %v596, 0.0
        %vm629 = vcmp.ge.f32.partialorder %v597, 0.0
        %vm630 = vcmp.ge.f32.partialorder %v598, 0.0
        %vm631 = vcmp.ge.f32.partialorder %v599, 0.0
        %vm632 = vcmp.ge.f32.partialorder %v600, 0.0
        %vm633 = vcmp.ge.f32.partialorder %v601, 0.0
        %vm634 = vcmp.ge.f32.partialorder %v602, 0.0
        %vm635 = vcmp.ge.f32.partialorder %v603, 0.0
        %vm636 = vcmp.ge.f32.partialorder %v604, 0.0
        %vm637 = vcmp.ge.f32.partialorder %v605, 0.0
        %vm638 = vcmp.ge.f32.partialorder %v606, 0.0
        %vm639 = vcmp.ge.f32.partialorder %v607, 0.0
        %vm640 = vcmp.ge.f32.partialorder %v608, 0.0
        %vm641 = vcmp.ge.f32.partialorder %v609, 0.0
        %vm642 = vcmp.ge.f32.partialorder %v610, 0.0
        %vm643 = vcmp.ge.f32.partialorder %v611, 0.0
        %vm644 = vcmp.ge.f32.partialorder %v612, 0.0
        %vm645 = vcmp.ge.f32.partialorder %v613, 0.0
        %vm646 = vcmp.ge.f32.partialorder %v614, 0.0
        %vm647 = vcmp.ge.f32.partialorder %v615, 0.0
        %vm648 = vcmp.ge.f32.partialorder %v616, 0.0
        %vm649 = vcmp.ge.f32.partialorder %v617, 0.0
        %vm650 = vcmp.ge.f32.partialorder %v618, 0.0
        %vm651 = vcmp.ge.f32.partialorder %v619, 0.0
        %vm652 = vcmp.ge.f32.partialorder %v620, 0.0
        %vm653 = vcmp.ge.f32.partialorder %v621, 0.0
        %vm654 = vcmp.ge.f32.partialorder %v622, 0.0
        %vm655 = vcmp.ge.f32.partialorder %v623, 0.0
        %v656 = vsel %vm624, 1.0, -1.0
        %v657 = vsel %vm625, 1.0, -1.0
        %v658 = vsel %vm626, 1.0, -1.0
        %v659 = vsel %vm627, 1.0, -1.0
        %v660 = vsel %vm628, 1.0, -1.0
        %v661 = vsel %vm629, 1.0, -1.0
        %v662 = vsel %vm630, 1.0, -1.0
        %v663 = vsel %vm631, 1.0, -1.0
        %v664 = vsel %vm632, 1.0, -1.0
        %v665 = vsel %vm633, 1.0, -1.0
        %v666 = vsel %vm634, 1.0, -1.0
        %v667 = vsel %vm635, 1.0, -1.0
        %v668 = vsel %vm636, 1.0, -1.0
        %v669 = vsel %vm637, 1.0, -1.0
        %v670 = vsel %vm638, 1.0, -1.0
        %v671 = vsel %vm639, 1.0, -1.0
        %v672 = vsel %vm640, 1.0, -1.0
        %v673 = vsel %vm641, 1.0, -1.0
        %v674 = vsel %vm642, 1.0, -1.0
        %v675 = vsel %vm643, 1.0, -1.0
        %v676 = vsel %vm644, 1.0, -1.0
        %v677 = vsel %vm645, 1.0, -1.0
        %v678 = vsel %vm646, 1.0, -1.0
        %v679 = vsel %vm647, 1.0, -1.0
        %v680 = vsel %vm648, 1.0, -1.0
        %v681 = vsel %vm649, 1.0, -1.0
        %v682 = vsel %vm650, 1.0, -1.0
        %v683 = vsel %vm651, 1.0, -1.0
        %v684 = vsel %vm652, 1.0, -1.0
        %v685 = vsel %vm653, 1.0, -1.0
        %v686 = vsel %vm654, 1.0, -1.0
        %v687 = vsel %vm655, 1.0, -1.0
        %v688 = vand.u32 2147483647, %v592
        %v689 = vand.u32 2147483647, %v593
        %v690 = vand.u32 2147483647, %v594
        %v691 = vand.u32 2147483647, %v595
        %v692 = vand.u32 2147483647, %v596
        %v693 = vand.u32 2147483647, %v597
        %v694 = vand.u32 2147483647, %v598
        %v695 = vand.u32 2147483647, %v599
        %v696 = vand.u32 2147483647, %v600
        %v697 = vand.u32 2147483647, %v601
        %v698 = vand.u32 2147483647, %v602
        %v699 = vand.u32 2147483647, %v603
        %v700 = vand.u32 2147483647, %v604
        %v701 = vand.u32 2147483647, %v605
        %v702 = vand.u32 2147483647, %v606
        %v703 = vand.u32 2147483647, %v607
        %v704 = vand.u32 2147483647, %v608
        %v705 = vand.u32 2147483647, %v609
        %v706 = vand.u32 2147483647, %v610
        %v707 = vand.u32 2147483647, %v611
        %v708 = vand.u32 2147483647, %v612
        %v709 = vand.u32 2147483647, %v613
        %v710 = vand.u32 2147483647, %v614
        %v711 = vand.u32 2147483647, %v615
        %v712 = vand.u32 2147483647, %v616
        %v713 = vand.u32 2147483647, %v617
        %v714 = vand.u32 2147483647, %v618
        %v715 = vand.u32 2147483647, %v619
        %v716 = vand.u32 2147483647, %v620
        %v717 = vand.u32 2147483647, %v621
        %v718 = vand.u32 2147483647, %v622
        %v719 = vand.u32 2147483647, %v623
        %v720 = vmul.f32 %v688, 0.3275911
        %v721 = vmul.f32 %v689, 0.3275911
        %v722 = vmul.f32 %v690, 0.3275911
        %v723 = vmul.f32 %v691, 0.3275911
        %v724 = vmul.f32 %v692, 0.3275911
        %v725 = vmul.f32 %v693, 0.3275911
        %v726 = vmul.f32 %v694, 0.3275911
        %v727 = vmul.f32 %v695, 0.3275911
        %v728 = vmul.f32 %v696, 0.3275911
        %v729 = vmul.f32 %v697, 0.3275911
        %v730 = vmul.f32 %v698, 0.3275911
        %v731 = vmul.f32 %v699, 0.3275911
        %v732 = vmul.f32 %v700, 0.3275911
        %v733 = vmul.f32 %v701, 0.3275911
        %v734 = vmul.f32 %v702, 0.3275911
        %v735 = vmul.f32 %v703, 0.3275911
        %v736 = vmul.f32 %v704, 0.3275911
        %v737 = vmul.f32 %v705, 0.3275911
        %v738 = vmul.f32 %v706, 0.3275911
        %v739 = vmul.f32 %v707, 0.3275911
        %v740 = vmul.f32 %v708, 0.3275911
        %v741 = vmul.f32 %v709, 0.3275911
        %v742 = vmul.f32 %v710, 0.3275911
        %v743 = vmul.f32 %v711, 0.3275911
        %v744 = vmul.f32 %v712, 0.3275911
        %v745 = vmul.f32 %v713, 0.3275911
        %v746 = vmul.f32 %v714, 0.3275911
        %v747 = vmul.f32 %v715, 0.3275911
        %v748 = vmul.f32 %v716, 0.3275911
        %v749 = vmul.f32 %v717, 0.3275911
        %v750 = vmul.f32 %v718, 0.3275911
        %v751 = vmul.f32 %v719, 0.3275911
        %v752 = vadd.f32 %v720, 1.0
        %v753 = vadd.f32 %v721, 1.0
        %v754 = vadd.f32 %v722, 1.0
        %v755 = vadd.f32 %v723, 1.0
        %v756 = vadd.f32 %v724, 1.0
        %v757 = vadd.f32 %v725, 1.0
        %v758 = vadd.f32 %v726, 1.0
        %v759 = vadd.f32 %v727, 1.0
        %v760 = vadd.f32 %v728, 1.0
        %v761 = vadd.f32 %v729, 1.0
        %v762 = vadd.f32 %v730, 1.0
        %v763 = vadd.f32 %v731, 1.0
        %v764 = vadd.f32 %v732, 1.0
        %v765 = vadd.f32 %v733, 1.0
        %v766 = vadd.f32 %v734, 1.0
        %v767 = vadd.f32 %v735, 1.0
        %v768 = vadd.f32 %v736, 1.0
        %v769 = vadd.f32 %v737, 1.0
        %v770 = vadd.f32 %v738, 1.0
        %v771 = vadd.f32 %v739, 1.0
        %v772 = vadd.f32 %v740, 1.0
        %v773 = vadd.f32 %v741, 1.0
        %v774 = vadd.f32 %v742, 1.0
        %v775 = vadd.f32 %v743, 1.0
        %v776 = vadd.f32 %v744, 1.0
        %v777 = vadd.f32 %v745, 1.0
        %v778 = vadd.f32 %v746, 1.0
        %v779 = vadd.f32 %v747, 1.0
        %v780 = vadd.f32 %v748, 1.0
        %v781 = vadd.f32 %v749, 1.0
        %v782 = vadd.f32 %v750, 1.0
        %v783 = vadd.f32 %v751, 1.0
        %v784 = vrcp.pop %v752
        %v785 = vrcp.pop %v753
        %v786 = vrcp.pop %v754
        %v787 = vrcp.pop %v755
        %v788 = vrcp.pop %v756
        %v789 = vrcp.pop %v757
        %v790 = vrcp.pop %v758
        %v791 = vrcp.pop %v759
        %v792 = vrcp.pop %v760
        %v793 = vrcp.pop %v761
        %v794 = vrcp.pop %v762
        %v795 = vrcp.pop %v763
        %v796 = vrcp.pop %v764
        %v797 = vrcp.pop %v765
        %v798 = vrcp.pop %v766
        %v799 = vrcp.pop %v767
        %v800 = vrcp.pop %v768
        %v801 = vrcp.pop %v769
        %v802 = vrcp.pop %v770
        %v803 = vrcp.pop %v771
        %v804 = vrcp.pop %v772
        %v805 = vrcp.pop %v773
        %v806 = vrcp.pop %v774
        %v807 = vrcp.pop %v775
        %v808 = vrcp.pop %v776
        %v809 = vrcp.pop %v777
        %v810 = vrcp.pop %v778
        %v811 = vrcp.pop %v779
        %v812 = vrcp.pop %v780
        %v813 = vrcp.pop %v781
        %v814 = vrcp.pop %v782
        %v815 = vrcp.pop %v783
        %v816 = vmul.f32 %v752, %v784
        %v817 = vmul.f32 %v753, %v785
        %v818 = vmul.f32 %v754, %v786
        %v819 = vmul.f32 %v755, %v787
        %v820 = vmul.f32 %v756, %v788
        %v821 = vmul.f32 %v757, %v789
        %v822 = vmul.f32 %v758, %v790
        %v823 = vmul.f32 %v759, %v791
        %v824 = vmul.f32 %v760, %v792
        %v825 = vmul.f32 %v761, %v793
        %v826 = vmul.f32 %v762, %v794
        %v827 = vmul.f32 %v763, %v795
        %v828 = vmul.f32 %v764, %v796
        %v829 = vmul.f32 %v765, %v797
        %v830 = vmul.f32 %v766, %v798
        %v831 = vmul.f32 %v767, %v799
        %v832 = vmul.f32 %v768, %v800
        %v833 = vmul.f32 %v769, %v801
        %v834 = vmul.f32 %v770, %v802
        %v835 = vmul.f32 %v771, %v803
        %v836 = vmul.f32 %v772, %v804
        %v837 = vmul.f32 %v773, %v805
        %v838 = vmul.f32 %v774, %v806
        %v839 = vmul.f32 %v775, %v807
        %v840 = vmul.f32 %v776, %v808
        %v841 = vmul.f32 %v777, %v809
        %v842 = vmul.f32 %v778, %v810
        %v843 = vmul.f32 %v779, %v811
        %v844 = vmul.f32 %v780, %v812
        %v845 = vmul.f32 %v781, %v813
        %v846 = vmul.f32 %v782, %v814
        %v847 = vmul.f32 %v783, %v815
        %v848 = vsub.f32 2.0, %v816
        %v849 = vsub.f32 2.0, %v817
        %v850 = vsub.f32 2.0, %v818
        %v851 = vsub.f32 2.0, %v819
        %v852 = vsub.f32 2.0, %v820
        %v853 = vsub.f32 2.0, %v821
        %v854 = vsub.f32 2.0, %v822
        %v855 = vsub.f32 2.0, %v823
        %v856 = vsub.f32 2.0, %v824
        %v857 = vsub.f32 2.0, %v825
        %v858 = vsub.f32 2.0, %v826
        %v859 = vsub.f32 2.0, %v827
        %v860 = vsub.f32 2.0, %v828
        %v861 = vsub.f32 2.0, %v829
        %v862 = vsub.f32 2.0, %v830
        %v863 = vsub.f32 2.0, %v831
        %v864 = vsub.f32 2.0, %v832
        %v865 = vsub.f32 2.0, %v833
        %v866 = vsub.f32 2.0, %v834
        %v867 = vsub.f32 2.0, %v835
        %v868 = vsub.f32 2.0, %v836
        %v869 = vsub.f32 2.0, %v837
        %v870 = vsub.f32 2.0, %v838
        %v871 = vsub.f32 2.0, %v839
        %v872 = vsub.f32 2.0, %v840
        %v873 = vsub.f32 2.0, %v841
        %v874 = vsub.f32 2.0, %v842
        %v875 = vsub.f32 2.0, %v843
        %v876 = vsub.f32 2.0, %v844
        %v877 = vsub.f32 2.0, %v845
        %v878 = vsub.f32 2.0, %v846
        %v879 = vsub.f32 2.0, %v847
        %v880 = vmul.f32 %v784, %v848
        %v881 = vmul.f32 %v785, %v849
        %v882 = vmul.f32 %v786, %v850
        %v883 = vmul.f32 %v787, %v851
        %v884 = vmul.f32 %v788, %v852
        %v885 = vmul.f32 %v789, %v853
        %v886 = vmul.f32 %v790, %v854
        %v887 = vmul.f32 %v791, %v855
        %v888 = vmul.f32 %v792, %v856
        %v889 = vmul.f32 %v793, %v857
        %v890 = vmul.f32 %v794, %v858
        %v891 = vmul.f32 %v795, %v859
        %v892 = vmul.f32 %v796, %v860
        %v893 = vmul.f32 %v797, %v861
        %v894 = vmul.f32 %v798, %v862
        %v895 = vmul.f32 %v799, %v863
        %v896 = vmul.f32 %v800, %v864
        %v897 = vmul.f32 %v801, %v865
        %v898 = vmul.f32 %v802, %v866
        %v899 = vmul.f32 %v803, %v867
        %v900 = vmul.f32 %v804, %v868
        %v901 = vmul.f32 %v805, %v869
        %v902 = vmul.f32 %v806, %v870
        %v903 = vmul.f32 %v807, %v871
        %v904 = vmul.f32 %v808, %v872
        %v905 = vmul.f32 %v809, %v873
        %v906 = vmul.f32 %v810, %v874
        %v907 = vmul.f32 %v811, %v875
        %v908 = vmul.f32 %v812, %v876
        %v909 = vmul.f32 %v813, %v877
        %v910 = vmul.f32 %v814, %v878
        %v911 = vmul.f32 %v815, %v879
        %v912 = vmul.f32 %v880, 1.0614054
        %v913 = vmul.f32 %v881, 1.0614054
        %v914 = vmul.f32 %v882, 1.0614054
        %v915 = vmul.f32 %v883, 1.0614054
        %v916 = vmul.f32 %v884, 1.0614054
        %v917 = vmul.f32 %v885, 1.0614054
        %v918 = vmul.f32 %v886, 1.0614054
        %v919 = vmul.f32 %v887, 1.0614054
        %v920 = vmul.f32 %v888, 1.0614054
        %v921 = vmul.f32 %v889, 1.0614054
        %v922 = vmul.f32 %v890, 1.0614054
        %v923 = vmul.f32 %v891, 1.0614054
        %v924 = vmul.f32 %v892, 1.0614054
        %v925 = vmul.f32 %v893, 1.0614054
        %v926 = vmul.f32 %v894, 1.0614054
        %v927 = vmul.f32 %v895, 1.0614054
        %v928 = vmul.f32 %v896, 1.0614054
        %v929 = vmul.f32 %v897, 1.0614054
        %v930 = vmul.f32 %v898, 1.0614054
        %v931 = vmul.f32 %v899, 1.0614054
        %v932 = vmul.f32 %v900, 1.0614054
        %v933 = vmul.f32 %v901, 1.0614054
        %v934 = vmul.f32 %v902, 1.0614054
        %v935 = vmul.f32 %v903, 1.0614054
        %v936 = vmul.f32 %v904, 1.0614054
        %v937 = vmul.f32 %v905, 1.0614054
        %v938 = vmul.f32 %v906, 1.0614054
        %v939 = vmul.f32 %v907, 1.0614054
        %v940 = vmul.f32 %v908, 1.0614054
        %v941 = vmul.f32 %v909, 1.0614054
        %v942 = vmul.f32 %v910, 1.0614054
        %v943 = vmul.f32 %v911, 1.0614054
        %v944 = vadd.f32 %v912, -1.4531521
        %v945 = vadd.f32 %v913, -1.4531521
        %v946 = vadd.f32 %v914, -1.4531521
        %v947 = vadd.f32 %v915, -1.4531521
        %v948 = vadd.f32 %v916, -1.4531521
        %v949 = vadd.f32 %v917, -1.4531521
        %v950 = vadd.f32 %v918, -1.4531521
        %v951 = vadd.f32 %v919, -1.4531521
        %v952 = vadd.f32 %v920, -1.4531521
        %v953 = vadd.f32 %v921, -1.4531521
        %v954 = vadd.f32 %v922, -1.4531521
        %v955 = vadd.f32 %v923, -1.4531521
        %v956 = vadd.f32 %v924, -1.4531521
        %v957 = vadd.f32 %v925, -1.4531521
        %v958 = vadd.f32 %v926, -1.4531521
        %v959 = vadd.f32 %v927, -1.4531521
        %v960 = vadd.f32 %v928, -1.4531521
        %v961 = vadd.f32 %v929, -1.4531521
        %v962 = vadd.f32 %v930, -1.4531521
        %v963 = vadd.f32 %v931, -1.4531521
        %v964 = vadd.f32 %v932, -1.4531521
        %v965 = vadd.f32 %v933, -1.4531521
        %v966 = vadd.f32 %v934, -1.4531521
        %v967 = vadd.f32 %v935, -1.4531521
        %v968 = vadd.f32 %v936, -1.4531521
        %v969 = vadd.f32 %v937, -1.4531521
        %v970 = vadd.f32 %v938, -1.4531521
        %v971 = vadd.f32 %v939, -1.4531521
        %v972 = vadd.f32 %v940, -1.4531521
        %v973 = vadd.f32 %v941, -1.4531521
        %v974 = vadd.f32 %v942, -1.4531521
        %v975 = vadd.f32 %v943, -1.4531521
        %v976 = vmul.f32 %v944, %v880
        %v977 = vmul.f32 %v945, %v881
        %v978 = vmul.f32 %v946, %v882
        %v979 = vmul.f32 %v947, %v883
        %v980 = vmul.f32 %v948, %v884
        %v981 = vmul.f32 %v949, %v885
        %v982 = vmul.f32 %v950, %v886
        %v983 = vmul.f32 %v951, %v887
        %v984 = vmul.f32 %v952, %v888
        %v985 = vmul.f32 %v953, %v889
        %v986 = vmul.f32 %v954, %v890
        %v987 = vmul.f32 %v955, %v891
        %v988 = vmul.f32 %v956, %v892
        %v989 = vmul.f32 %v957, %v893
        %v990 = vmul.f32 %v958, %v894
        %v991 = vmul.f32 %v959, %v895
        %v992 = vmul.f32 %v960, %v896
        %v993 = vmul.f32 %v961, %v897
        %v994 = vmul.f32 %v962, %v898
        %v995 = vmul.f32 %v963, %v899
        %v996 = vmul.f32 %v964, %v900
        %v997 = vmul.f32 %v965, %v901
        %v998 = vmul.f32 %v966, %v902
        %v999 = vmul.f32 %v967, %v903
        %v1000 = vmul.f32 %v968, %v904
        %v1001 = vmul.f32 %v969, %v905
        %v1002 = vmul.f32 %v970, %v906
        %v1003 = vmul.f32 %v971, %v907
        %v1004 = vmul.f32 %v972, %v908
        %v1005 = vmul.f32 %v973, %v909
        %v1006 = vmul.f32 %v974, %v910
        %v1007 = vmul.f32 %v975, %v911
        %v1008 = vadd.f32 %v976, 1.4214138
        %v1009 = vadd.f32 %v977, 1.4214138
        %v1010 = vadd.f32 %v978, 1.4214138
        %v1011 = vadd.f32 %v979, 1.4214138
        %v1012 = vadd.f32 %v980, 1.4214138
        %v1013 = vadd.f32 %v981, 1.4214138
        %v1014 = vadd.f32 %v982, 1.4214138
        %v1015 = vadd.f32 %v983, 1.4214138
        %v1016 = vadd.f32 %v984, 1.4214138
        %v1017 = vadd.f32 %v985, 1.4214138
        %v1018 = vadd.f32 %v986, 1.4214138
        %v1019 = vadd.f32 %v987, 1.4214138
        %v1020 = vadd.f32 %v988, 1.4214138
        %v1021 = vadd.f32 %v989, 1.4214138
        %v1022 = vadd.f32 %v990, 1.4214138
        %v1023 = vadd.f32 %v991, 1.4214138
        %v1024 = vadd.f32 %v992, 1.4214138
        %v1025 = vadd.f32 %v993, 1.4214138
        %v1026 = vadd.f32 %v994, 1.4214138
        %v1027 = vadd.f32 %v995, 1.4214138
        %v1028 = vadd.f32 %v996, 1.4214138
        %v1029 = vadd.f32 %v997, 1.4214138
        %v1030 = vadd.f32 %v998, 1.4214138
        %v1031 = vadd.f32 %v999, 1.4214138
        %v1032 = vadd.f32 %v1000, 1.4214138
        %v1033 = vadd.f32 %v1001, 1.4214138
        %v1034 = vadd.f32 %v1002, 1.4214138
        %v1035 = vadd.f32 %v1003, 1.4214138
        %v1036 = vadd.f32 %v1004, 1.4214138
        %v1037 = vadd.f32 %v1005, 1.4214138
        %v1038 = vadd.f32 %v1006, 1.4214138
        %v1039 = vadd.f32 %v1007, 1.4214138
        %v1040 = vmul.f32 %v1008, %v880
        %v1041 = vmul.f32 %v1009, %v881
        %v1042 = vmul.f32 %v1010, %v882
        %v1043 = vmul.f32 %v1011, %v883
        %v1044 = vmul.f32 %v1012, %v884
        %v1045 = vmul.f32 %v1013, %v885
        %v1046 = vmul.f32 %v1014, %v886
        %v1047 = vmul.f32 %v1015, %v887
        %v1048 = vmul.f32 %v1016, %v888
        %v1049 = vmul.f32 %v1017, %v889
        %v1050 = vmul.f32 %v1018, %v890
        %v1051 = vmul.f32 %v1019, %v891
        %v1052 = vmul.f32 %v1020, %v892
        %v1053 = vmul.f32 %v1021, %v893
        %v1054 = vmul.f32 %v1022, %v894
        %v1055 = vmul.f32 %v1023, %v895
        %v1056 = vmul.f32 %v1024, %v896
        %v1057 = vmul.f32 %v1025, %v897
        %v1058 = vmul.f32 %v1026, %v898
        %v1059 = vmul.f32 %v1027, %v899
        %v1060 = vmul.f32 %v1028, %v900
        %v1061 = vmul.f32 %v1029, %v901
        %v1062 = vmul.f32 %v1030, %v902
        %v1063 = vmul.f32 %v1031, %v903
        %v1064 = vmul.f32 %v1032, %v904
        %v1065 = vmul.f32 %v1033, %v905
        %v1066 = vmul.f32 %v1034, %v906
        %v1067 = vmul.f32 %v1035, %v907
        %v1068 = vmul.f32 %v1036, %v908
        %v1069 = vmul.f32 %v1037, %v909
        %v1070 = vmul.f32 %v1038, %v910
        %v1071 = vmul.f32 %v1039, %v911
        %v1072 = vadd.f32 %v1040, -0.28449672
        %v1073 = vadd.f32 %v1041, -0.28449672
        %v1074 = vadd.f32 %v1042, -0.28449672
        %v1075 = vadd.f32 %v1043, -0.28449672
        %v1076 = vadd.f32 %v1044, -0.28449672
        %v1077 = vadd.f32 %v1045, -0.28449672
        %v1078 = vadd.f32 %v1046, -0.28449672
        %v1079 = vadd.f32 %v1047, -0.28449672
        %v1080 = vadd.f32 %v1048, -0.28449672
        %v1081 = vadd.f32 %v1049, -0.28449672
        %v1082 = vadd.f32 %v1050, -0.28449672
        %v1083 = vadd.f32 %v1051, -0.28449672
        %v1084 = vadd.f32 %v1052, -0.28449672
        %v1085 = vadd.f32 %v1053, -0.28449672
        %v1086 = vadd.f32 %v1054, -0.28449672
        %v1087 = vadd.f32 %v1055, -0.28449672
        %v1088 = vadd.f32 %v1056, -0.28449672
        %v1089 = vadd.f32 %v1057, -0.28449672
        %v1090 = vadd.f32 %v1058, -0.28449672
        %v1091 = vadd.f32 %v1059, -0.28449672
        %v1092 = vadd.f32 %v1060, -0.28449672
        %v1093 = vadd.f32 %v1061, -0.28449672
        %v1094 = vadd.f32 %v1062, -0.28449672
        %v1095 = vadd.f32 %v1063, -0.28449672
        %v1096 = vadd.f32 %v1064, -0.28449672
        %v1097 = vadd.f32 %v1065, -0.28449672
        %v1098 = vadd.f32 %v1066, -0.28449672
        %v1099 = vadd.f32 %v1067, -0.28449672
        %v1100 = vadd.f32 %v1068, -0.28449672
        %v1101 = vadd.f32 %v1069, -0.28449672
        %v1102 = vadd.f32 %v1070, -0.28449672
        %v1103 = vadd.f32 %v1071, -0.28449672
        %v1104 = vmul.f32 %v1072, %v880
        %v1105 = vmul.f32 %v1073, %v881
        %v1106 = vmul.f32 %v1074, %v882
        %v1107 = vmul.f32 %v1075, %v883
        %v1108 = vmul.f32 %v1076, %v884
        %v1109 = vmul.f32 %v1077, %v885
        %v1110 = vmul.f32 %v1078, %v886
        %v1111 = vmul.f32 %v1079, %v887
        %v1112 = vmul.f32 %v1080, %v888
        %v1113 = vmul.f32 %v1081, %v889
        %v1114 = vmul.f32 %v1082, %v890
        %v1115 = vmul.f32 %v1083, %v891
        %v1116 = vmul.f32 %v1084, %v892
        %v1117 = vmul.f32 %v1085, %v893
        %v1118 = vmul.f32 %v1086, %v894
        %v1119 = vmul.f32 %v1087, %v895
        %v1120 = vmul.f32 %v1088, %v896
        %v1121 = vmul.f32 %v1089, %v897
        %v1122 = vmul.f32 %v1090, %v898
        %v1123 = vmul.f32 %v1091, %v899
        %v1124 = vmul.f32 %v1092, %v900
        %v1125 = vmul.f32 %v1093, %v901
        %v1126 = vmul.f32 %v1094, %v902
        %v1127 = vmul.f32 %v1095, %v903
        %v1128 = vmul.f32 %v1096, %v904
        %v1129 = vmul.f32 %v1097, %v905
        %v1130 = vmul.f32 %v1098, %v906
        %v1131 = vmul.f32 %v1099, %v907
        %v1132 = vmul.f32 %v1100, %v908
        %v1133 = vmul.f32 %v1101, %v909
        %v1134 = vmul.f32 %v1102, %v910
        %v1135 = vmul.f32 %v1103, %v911
        %v1136 = vadd.f32 %v1104, 0.2548296
        %v1137 = vadd.f32 %v1105, 0.2548296
        %v1138 = vadd.f32 %v1106, 0.2548296
        %v1139 = vadd.f32 %v1107, 0.2548296
        %v1140 = vadd.f32 %v1108, 0.2548296
        %v1141 = vadd.f32 %v1109, 0.2548296
        %v1142 = vadd.f32 %v1110, 0.2548296
        %v1143 = vadd.f32 %v1111, 0.2548296
        %v1144 = vadd.f32 %v1112, 0.2548296
        %v1145 = vadd.f32 %v1113, 0.2548296
        %v1146 = vadd.f32 %v1114, 0.2548296
        %v1147 = vadd.f32 %v1115, 0.2548296
        %v1148 = vadd.f32 %v1116, 0.2548296
        %v1149 = vadd.f32 %v1117, 0.2548296
        %v1150 = vadd.f32 %v1118, 0.2548296
        %v1151 = vadd.f32 %v1119, 0.2548296
        %v1152 = vadd.f32 %v1120, 0.2548296
        %v1153 = vadd.f32 %v1121, 0.2548296
        %v1154 = vadd.f32 %v1122, 0.2548296
        %v1155 = vadd.f32 %v1123, 0.2548296
        %v1156 = vadd.f32 %v1124, 0.2548296
        %v1157 = vadd.f32 %v1125, 0.2548296
        %v1158 = vadd.f32 %v1126, 0.2548296
        %v1159 = vadd.f32 %v1127, 0.2548296
        %v1160 = vadd.f32 %v1128, 0.2548296
        %v1161 = vadd.f32 %v1129, 0.2548296
        %v1162 = vadd.f32 %v1130, 0.2548296
        %v1163 = vadd.f32 %v1131, 0.2548296
        %v1164 = vadd.f32 %v1132, 0.2548296
        %v1165 = vadd.f32 %v1133, 0.2548296
        %v1166 = vadd.f32 %v1134, 0.2548296
        %v1167 = vadd.f32 %v1135, 0.2548296
        %v1168 = vmul.f32 %v1136, %v880
        %v1169 = vmul.f32 %v1137, %v881
        %v1170 = vmul.f32 %v1138, %v882
        %v1171 = vmul.f32 %v1139, %v883
        %v1172 = vmul.f32 %v1140, %v884
        %v1173 = vmul.f32 %v1141, %v885
        %v1174 = vmul.f32 %v1142, %v886
        %v1175 = vmul.f32 %v1143, %v887
        %v1176 = vmul.f32 %v1144, %v888
        %v1177 = vmul.f32 %v1145, %v889
        %v1178 = vmul.f32 %v1146, %v890
        %v1179 = vmul.f32 %v1147, %v891
        %v1180 = vmul.f32 %v1148, %v892
        %v1181 = vmul.f32 %v1149, %v893
        %v1182 = vmul.f32 %v1150, %v894
        %v1183 = vmul.f32 %v1151, %v895
        %v1184 = vmul.f32 %v1152, %v896
        %v1185 = vmul.f32 %v1153, %v897
        %v1186 = vmul.f32 %v1154, %v898
        %v1187 = vmul.f32 %v1155, %v899
        %v1188 = vmul.f32 %v1156, %v900
        %v1189 = vmul.f32 %v1157, %v901
        %v1190 = vmul.f32 %v1158, %v902
        %v1191 = vmul.f32 %v1159, %v903
        %v1192 = vmul.f32 %v1160, %v904
        %v1193 = vmul.f32 %v1161, %v905
        %v1194 = vmul.f32 %v1162, %v906
        %v1195 = vmul.f32 %v1163, %v907
        %v1196 = vmul.f32 %v1164, %v908
        %v1197 = vmul.f32 %v1165, %v909
        %v1198 = vmul.f32 %v1166, %v910
        %v1199 = vmul.f32 %v1167, %v911
        %v1200 = vsub.f32 0.0, %v688
        %v1201 = vsub.f32 0.0, %v689
        %v1202 = vsub.f32 0.0, %v690
        %v1203 = vsub.f32 0.0, %v691
        %v1204 = vsub.f32 0.0, %v692
        %v1205 = vsub.f32 0.0, %v693
        %v1206 = vsub.f32 0.0, %v694
        %v1207 = vsub.f32 0.0, %v695
        %v1208 = vsub.f32 0.0, %v696
        %v1209 = vsub.f32 0.0, %v697
        %v1210 = vsub.f32 0.0, %v698
        %v1211 = vsub.f32 0.0, %v699
        %v1212 = vsub.f32 0.0, %v700
        %v1213 = vsub.f32 0.0, %v701
        %v1214 = vsub.f32 0.0, %v702
        %v1215 = vsub.f32 0.0, %v703
        %v1216 = vsub.f32 0.0, %v704
        %v1217 = vsub.f32 0.0, %v705
        %v1218 = vsub.f32 0.0, %v706
        %v1219 = vsub.f32 0.0, %v707
        %v1220 = vsub.f32 0.0, %v708
        %v1221 = vsub.f32 0.0, %v709
        %v1222 = vsub.f32 0.0, %v710
        %v1223 = vsub.f32 0.0, %v711
        %v1224 = vsub.f32 0.0, %v712
        %v1225 = vsub.f32 0.0, %v713
        %v1226 = vsub.f32 0.0, %v714
        %v1227 = vsub.f32 0.0, %v715
        %v1228 = vsub.f32 0.0, %v716
        %v1229 = vsub.f32 0.0, %v717
        %v1230 = vsub.f32 0.0, %v718
        %v1231 = vsub.f32 0.0, %v719
        %v1232 = vmul.f32 %v1200, %v688
        %v1233 = vmul.f32 %v1201, %v689
        %v1234 = vmul.f32 %v1202, %v690
        %v1235 = vmul.f32 %v1203, %v691
        %v1236 = vmul.f32 %v1204, %v692
        %v1237 = vmul.f32 %v1205, %v693
        %v1238 = vmul.f32 %v1206, %v694
        %v1239 = vmul.f32 %v1207, %v695
        %v1240 = vmul.f32 %v1208, %v696
        %v1241 = vmul.f32 %v1209, %v697
        %v1242 = vmul.f32 %v1210, %v698
        %v1243 = vmul.f32 %v1211, %v699
        %v1244 = vmul.f32 %v1212, %v700
        %v1245 = vmul.f32 %v1213, %v701
        %v1246 = vmul.f32 %v1214, %v702
        %v1247 = vmul.f32 %v1215, %v703
        %v1248 = vmul.f32 %v1216, %v704
        %v1249 = vmul.f32 %v1217, %v705
        %v1250 = vmul.f32 %v1218, %v706
        %v1251 = vmul.f32 %v1219, %v707
        %v1252 = vmul.f32 %v1220, %v708
        %v1253 = vmul.f32 %v1221, %v709
        %v1254 = vmul.f32 %v1222, %v710
        %v1255 = vmul.f32 %v1223, %v711
        %v1256 = vmul.f32 %v1224, %v712
        %v1257 = vmul.f32 %v1225, %v713
        %v1258 = vmul.f32 %v1226, %v714
        %v1259 = vmul.f32 %v1227, %v715
        %v1260 = vmul.f32 %v1228, %v716
        %v1261 = vmul.f32 %v1229, %v717
        %v1262 = vmul.f32 %v1230, %v718
        %v1263 = vmul.f32 %v1231, %v719
        %v1264 = vmul.f32 %v1232, 1.442695
        %v1265 = vpow.pop %v1264
        %v1266 = vmul.f32 %v1233, 1.442695
        %v1267 = vpow.pop %v1266
        %v1268 = vmul.f32 %v1234, 1.442695
        %v1269 = vpow.pop %v1268
        %v1270 = vmul.f32 %v1235, 1.442695
        %v1271 = vpow.pop %v1270
        %v1272 = vmul.f32 %v1236, 1.442695
        %v1273 = vpow.pop %v1272
        %v1274 = vmul.f32 %v1237, 1.442695
        %v1275 = vpow.pop %v1274
        %v1276 = vmul.f32 %v1238, 1.442695
        %v1277 = vpow.pop %v1276
        %v1278 = vmul.f32 %v1239, 1.442695
        %v1279 = vpow.pop %v1278
        %v1280 = vmul.f32 %v1240, 1.442695
        %v1281 = vpow.pop %v1280
        %v1282 = vmul.f32 %v1241, 1.442695
        %v1283 = vpow.pop %v1282
        %v1284 = vmul.f32 %v1242, 1.442695
        %v1285 = vpow.pop %v1284
        %v1286 = vmul.f32 %v1243, 1.442695
        %v1287 = vpow.pop %v1286
        %v1288 = vmul.f32 %v1244, 1.442695
        %v1289 = vpow.pop %v1288
        %v1290 = vmul.f32 %v1245, 1.442695
        %v1291 = vpow.pop %v1290
        %v1292 = vmul.f32 %v1246, 1.442695
        %v1293 = vpow.pop %v1292
        %v1294 = vmul.f32 %v1247, 1.442695
        %v1295 = vpow.pop %v1294
        %v1296 = vmul.f32 %v1248, 1.442695
        %v1297 = vpow.pop %v1296
        %v1298 = vmul.f32 %v1249, 1.442695
        %v1299 = vpow.pop %v1298
        %v1300 = vmul.f32 %v1250, 1.442695
        %v1301 = vpow.pop %v1300
        %v1302 = vmul.f32 %v1251, 1.442695
        %v1303 = vpow.pop %v1302
        %v1304 = vmul.f32 %v1252, 1.442695
        %v1305 = vpow.pop %v1304
        %v1306 = vmul.f32 %v1253, 1.442695
        %v1307 = vpow.pop %v1306
        %v1308 = vmul.f32 %v1254, 1.442695
        %v1309 = vpow.pop %v1308
        %v1310 = vmul.f32 %v1255, 1.442695
        %v1311 = vpow.pop %v1310
        %v1312 = vmul.f32 %v1256, 1.442695
        %v1313 = vpow.pop %v1312
        %v1314 = vmul.f32 %v1257, 1.442695
        %v1315 = vpow.pop %v1314
        %v1316 = vmul.f32 %v1258, 1.442695
        %v1317 = vpow.pop %v1316
        %v1318 = vmul.f32 %v1259, 1.442695
        %v1319 = vpow.pop %v1318
        %v1320 = vmul.f32 %v1260, 1.442695
        %v1321 = vpow.pop %v1320
        %v1322 = vmul.f32 %v1261, 1.442695
        %v1323 = vpow.pop %v1322
        %v1324 = vmul.f32 %v1262, 1.442695
        %v1325 = vpow.pop %v1324
        %v1326 = vmul.f32 %v1263, 1.442695
        %v1327 = vpow.pop %v1326
        %v1328 = vmul.f32 %v1168, %v1265
        %v1329 = vmul.f32 %v1169, %v1267
        %v1330 = vmul.f32 %v1170, %v1269
        %v1331 = vmul.f32 %v1171, %v1271
        %v1332 = vmul.f32 %v1172, %v1273
        %v1333 = vmul.f32 %v1173, %v1275
        %v1334 = vmul.f32 %v1174, %v1277
        %v1335 = vmul.f32 %v1175, %v1279
        %v1336 = vmul.f32 %v1176, %v1281
        %v1337 = vmul.f32 %v1177, %v1283
        %v1338 = vmul.f32 %v1178, %v1285
        %v1339 = vmul.f32 %v1179, %v1287
        %v1340 = vmul.f32 %v1180, %v1289
        %v1341 = vmul.f32 %v1181, %v1291
        %v1342 = vmul.f32 %v1182, %v1293
        %v1343 = vmul.f32 %v1183, %v1295
        %v1344 = vmul.f32 %v1184, %v1297
        %v1345 = vmul.f32 %v1185, %v1299
        %v1346 = vmul.f32 %v1186, %v1301
        %v1347 = vmul.f32 %v1187, %v1303
        %v1348 = vmul.f32 %v1188, %v1305
        %v1349 = vmul.f32 %v1189, %v1307
        %v1350 = vmul.f32 %v1190, %v1309
        %v1351 = vmul.f32 %v1191, %v1311
        %v1352 = vmul.f32 %v1192, %v1313
        %v1353 = vmul.f32 %v1193, %v1315
        %v1354 = vmul.f32 %v1194, %v1317
        %v1355 = vmul.f32 %v1195, %v1319
        %v1356 = vmul.f32 %v1196, %v1321
        %v1357 = vmul.f32 %v1197, %v1323
        %v1358 = vmul.f32 %v1198, %v1325
        %v1359 = vmul.f32 %v1199, %v1327
        %v1360 = vsub.f32 1.0, %v1328
        %v1361 = vsub.f32 1.0, %v1329
        %v1362 = vsub.f32 1.0, %v1330
        %v1363 = vsub.f32 1.0, %v1331
        %v1364 = vsub.f32 1.0, %v1332
        %v1365 = vsub.f32 1.0, %v1333
        %v1366 = vsub.f32 1.0, %v1334
        %v1367 = vsub.f32 1.0, %v1335
        %v1368 = vsub.f32 1.0, %v1336
        %v1369 = vsub.f32 1.0, %v1337
        %v1370 = vsub.f32 1.0, %v1338
        %v1371 = vsub.f32 1.0, %v1339
        %v1372 = vsub.f32 1.0, %v1340
        %v1373 = vsub.f32 1.0, %v1341
        %v1374 = vsub.f32 1.0, %v1342
        %v1375 = vsub.f32 1.0, %v1343
        %v1376 = vsub.f32 1.0, %v1344
        %v1377 = vsub.f32 1.0, %v1345
        %v1378 = vsub.f32 1.0, %v1346
        %v1379 = vsub.f32 1.0, %v1347
        %v1380 = vsub.f32 1.0, %v1348
        %v1381 = vsub.f32 1.0, %v1349
        %v1382 = vsub.f32 1.0, %v1350
        %v1383 = vsub.f32 1.0, %v1351
        %v1384 = vsub.f32 1.0, %v1352
        %v1385 = vsub.f32 1.0, %v1353
        %v1386 = vsub.f32 1.0, %v1354
        %v1387 = vsub.f32 1.0, %v1355
        %v1388 = vsub.f32 1.0, %v1356
        %v1389 = vsub.f32 1.0, %v1357
        %v1390 = vsub.f32 1.0, %v1358
        %v1391 = vsub.f32 1.0, %v1359
        %v1392 = vmul.f32 %v656, %v1360
        %v1393 = vmul.f32 %v657, %v1361
        %v1394 = vmul.f32 %v658, %v1362
        %v1395 = vmul.f32 %v659, %v1363
        %v1396 = vmul.f32 %v660, %v1364
        %v1397 = vmul.f32 %v661, %v1365
        %v1398 = vmul.f32 %v662, %v1366
        %v1399 = vmul.f32 %v663, %v1367
        %v1400 = vmul.f32 %v664, %v1368
        %v1401 = vmul.f32 %v665, %v1369
        %v1402 = vmul.f32 %v666, %v1370
        %v1403 = vmul.f32 %v667, %v1371
        %v1404 = vmul.f32 %v668, %v1372
        %v1405 = vmul.f32 %v669, %v1373
        %v1406 = vmul.f32 %v670, %v1374
        %v1407 = vmul.f32 %v671, %v1375
        %v1408 = vmul.f32 %v672, %v1376
        %v1409 = vmul.f32 %v673, %v1377
        %v1410 = vmul.f32 %v674, %v1378
        %v1411 = vmul.f32 %v675, %v1379
        %v1412 = vmul.f32 %v676, %v1380
        %v1413 = vmul.f32 %v677, %v1381
        %v1414 = vmul.f32 %v678, %v1382
        %v1415 = vmul.f32 %v679, %v1383
        %v1416 = vmul.f32 %v680, %v1384
        %v1417 = vmul.f32 %v681, %v1385
        %v1418 = vmul.f32 %v682, %v1386
        %v1419 = vmul.f32 %v683, %v1387
        %v1420 = vmul.f32 %v684, %v1388
        %v1421 = vmul.f32 %v685, %v1389
        %v1422 = vmul.f32 %v686, %v1390
        %v1423 = vmul.f32 %v687, %v1391
        %v1424 = vadd.f32 %v1392, 1.0
        %v1425 = vadd.f32 %v1393, 1.0
        %v1426 = vadd.f32 %v1394, 1.0
        %v1427 = vadd.f32 %v1395, 1.0
        %v1428 = vadd.f32 %v1396, 1.0
        %v1429 = vadd.f32 %v1397, 1.0
        %v1430 = vadd.f32 %v1398, 1.0
        %v1431 = vadd.f32 %v1399, 1.0
        %v1432 = vadd.f32 %v1400, 1.0
        %v1433 = vadd.f32 %v1401, 1.0
        %v1434 = vadd.f32 %v1402, 1.0
        %v1435 = vadd.f32 %v1403, 1.0
        %v1436 = vadd.f32 %v1404, 1.0
        %v1437 = vadd.f32 %v1405, 1.0
        %v1438 = vadd.f32 %v1406, 1.0
        %v1439 = vadd.f32 %v1407, 1.0
        %v1440 = vadd.f32 %v1408, 1.0
        %v1441 = vadd.f32 %v1409, 1.0
        %v1442 = vadd.f32 %v1410, 1.0
        %v1443 = vadd.f32 %v1411, 1.0
        %v1444 = vadd.f32 %v1412, 1.0
        %v1445 = vadd.f32 %v1413, 1.0
        %v1446 = vadd.f32 %v1414, 1.0
        %v1447 = vadd.f32 %v1415, 1.0
        %v1448 = vadd.f32 %v1416, 1.0
        %v1449 = vadd.f32 %v1417, 1.0
        %v1450 = vadd.f32 %v1418, 1.0
        %v1451 = vadd.f32 %v1419, 1.0
        %v1452 = vadd.f32 %v1420, 1.0
        %v1453 = vadd.f32 %v1421, 1.0
        %v1454 = vadd.f32 %v1422, 1.0
        %v1455 = vadd.f32 %v1423, 1.0
        %v1456 = vmul.f32 %v560, %v1424
        %v1457 = vmul.f32 %v561, %v1425
        %v1458 = vmul.f32 %v562, %v1426
        %v1459 = vmul.f32 %v563, %v1427
        %v1460 = vmul.f32 %v564, %v1428
        %v1461 = vmul.f32 %v565, %v1429
        %v1462 = vmul.f32 %v566, %v1430
        %v1463 = vmul.f32 %v567, %v1431
        %v1464 = vmul.f32 %v568, %v1432
        %v1465 = vmul.f32 %v569, %v1433
        %v1466 = vmul.f32 %v570, %v1434
        %v1467 = vmul.f32 %v571, %v1435
        %v1468 = vmul.f32 %v572, %v1436
        %v1469 = vmul.f32 %v573, %v1437
        %v1470 = vmul.f32 %v574, %v1438
        %v1471 = vmul.f32 %v575, %v1439
        %v1472 = vmul.f32 %v576, %v1440
        %v1473 = vmul.f32 %v577, %v1441
        %v1474 = vmul.f32 %v578, %v1442
        %v1475 = vmul.f32 %v579, %v1443
        %v1476 = vmul.f32 %v580, %v1444
        %v1477 = vmul.f32 %v581, %v1445
        %v1478 = vmul.f32 %v582, %v1446
        %v1479 = vmul.f32 %v583, %v1447
        %v1480 = vmul.f32 %v584, %v1448
        %v1481 = vmul.f32 %v585, %v1449
        %v1482 = vmul.f32 %v586, %v1450
        %v1483 = vmul.f32 %v587, %v1451
        %v1484 = vmul.f32 %v588, %v1452
        %v1485 = vmul.f32 %v589, %v1453
        %v1486 = vmul.f32 %v590, %v1454
        %v1487 = vmul.f32 %v591, %v1455
        %v1488 = vpack.c.bf16 %v1458, %v1456
        %v1489 = vpack.c.bf16 %v1459, %v1457
        %v1490 = vpack.c.bf16 %v1462, %v1460
        %v1491 = vpack.c.bf16 %v1463, %v1461
        %v1492 = vpack.c.bf16 %v1466, %v1464
        %v1493 = vpack.c.bf16 %v1467, %v1465
        %v1494 = vpack.c.bf16 %v1470, %v1468
        %v1495 = vpack.c.bf16 %v1471, %v1469
        %v1496 = vpack.c.bf16 %v1474, %v1472
        %v1497 = vpack.c.bf16 %v1475, %v1473
        %v1498 = vpack.c.bf16 %v1478, %v1476
        %v1499 = vpack.c.bf16 %v1479, %v1477
        %v1500 = vpack.c.bf16 %v1482, %v1480
        %v1501 = vpack.c.bf16 %v1483, %v1481
        %v1502 = vpack.c.bf16 %v1486, %v1484
        %v1503 = vpack.c.bf16 %v1487, %v1485
        %v1504 = vld [vmem:[#allocation7] sm:$0xf]
        %v1505 = vld [vmem:[#allocation7 + $0x4] sm:$0xf]
        %v1506 = vld [vmem:[#allocation7 + $0x8] sm:$0xf]
        %v1507 = vld [vmem:[#allocation7 + $0xc] sm:$0xf]
        %v1508 = vld [vmem:[#allocation7 + $0x10] sm:$0xf]
        %v1509 = vld [vmem:[#allocation7 + $0x14] sm:$0xf]
        %v1510 = vld [vmem:[#allocation7 + $0x18] sm:$0xf]
        %v1511 = vld [vmem:[#allocation7 + $0x1c] sm:$0xf]
        %v1512 = vld [vmem:[#allocation7 + $0x20] sm:$0xf]
        %v1513 = vld [vmem:[#allocation7 + $0x24] sm:$0xf]
        %v1514 = vld [vmem:[#allocation7 + $0x28] sm:$0xf]
        %v1515 = vld [vmem:[#allocation7 + $0x2c] sm:$0xf]
        %v1516 = vld [vmem:[#allocation7 + $0x30] sm:$0xf]
        %v1517 = vld [vmem:[#allocation7 + $0x34] sm:$0xf]
        %v1518 = vld [vmem:[#allocation7 + $0x38] sm:$0xf]
        %v1519 = vld [vmem:[#allocation7 + $0x3c] sm:$0xf]
        %v1520 = vld [vmem:[#allocation7 + $0x40] sm:$0xf]
        %v1521 = vld [vmem:[#allocation7 + $0x44] sm:$0xf]
        %v1522 = vld [vmem:[#allocation7 + $0x48] sm:$0xf]
        %v1523 = vld [vmem:[#allocation7 + $0x4c] sm:$0xf]
        %v1524 = vld [vmem:[#allocation7 + $0x50] sm:$0xf]
        %v1525 = vld [vmem:[#allocation7 + $0x54] sm:$0xf]
        %v1526 = vld [vmem:[#allocation7 + $0x58] sm:$0xf]
        %v1527 = vld [vmem:[#allocation7 + $0x5c] sm:$0xf]
        %v1528 = vld [vmem:[#allocation7 + $0x60] sm:$0xf]
        %v1529 = vld [vmem:[#allocation7 + $0x64] sm:$0xf]
        %v1530 = vld [vmem:[#allocation7 + $0x68] sm:$0xf]
        %v1531 = vld [vmem:[#allocation7 + $0x6c] sm:$0xf]
        %v1532 = vld [vmem:[#allocation7 + $0x70] sm:$0xf]
        %v1533 = vld [vmem:[#allocation7 + $0x74] sm:$0xf]
        %v1534 = vld [vmem:[#allocation7 + $0x78] sm:$0xf]
        %v1535 = vld [vmem:[#allocation7 + $0x7c] sm:$0xf]
        %v1536 = vld [vmem:[%s4] sm:$0x1]
        %v1538 = vlaneseq
        %v1539 = vshrl.u32 %v1538, 7
        %v1540 = vsub.s32 0, %v1539
        %v1541 = vrot.slane %v1536, %v1540
        %v1575 = vunpack.c.l.b16 %v1504
        %v1576 = vunpack.c.l.b16 %v1505
        %v1577 = vunpack.c.l.b16 %v1506
        %v1578 = vunpack.c.l.b16 %v1507
        %v1579 = vunpack.c.l.b16 %v1508
        %v1580 = vunpack.c.l.b16 %v1509
        %v1581 = vunpack.c.l.b16 %v1510
        %v1582 = vunpack.c.l.b16 %v1511
        %v1583 = vunpack.c.l.b16 %v1512
        %v1584 = vunpack.c.l.b16 %v1513
        %v1585 = vunpack.c.l.b16 %v1514
        %v1586 = vunpack.c.l.b16 %v1515
        %v1587 = vunpack.c.l.b16 %v1516
        %v1588 = vunpack.c.l.b16 %v1517
        %v1589 = vunpack.c.l.b16 %v1518
        %v1590 = vunpack.c.l.b16 %v1519
        %v1591 = vunpack.c.l.b16 %v1520
        %v1592 = vunpack.c.l.b16 %v1521
        %v1593 = vunpack.c.l.b16 %v1522
        %v1594 = vunpack.c.l.b16 %v1523
        %v1595 = vunpack.c.l.b16 %v1524
        %v1596 = vunpack.c.l.b16 %v1525
        %v1597 = vunpack.c.l.b16 %v1526
        %v1598 = vunpack.c.l.b16 %v1527
        %v1599 = vunpack.c.l.b16 %v1528
        %v1600 = vunpack.c.l.b16 %v1529
        %v1601 = vunpack.c.l.b16 %v1530
        %v1602 = vunpack.c.l.b16 %v1531
        %v1603 = vunpack.c.l.b16 %v1532
        %v1604 = vunpack.c.l.b16 %v1533
        %v1605 = vunpack.c.l.b16 %v1534
        %v1606 = vunpack.c.l.b16 %v1535
        %v1607 = vpack.c.b16 %v1576, %v1575
        %v1608 = vpack.c.b16 %v1578, %v1577
        %v1609 = vpack.c.b16 %v1580, %v1579
        %v1610 = vpack.c.b16 %v1582, %v1581
        %v1611 = vpack.c.b16 %v1584, %v1583
        %v1612 = vpack.c.b16 %v1586, %v1585
        %v1613 = vpack.c.b16 %v1588, %v1587
        %v1614 = vpack.c.b16 %v1590, %v1589
        %v1615 = vpack.c.b16 %v1592, %v1591
        %v1616 = vpack.c.b16 %v1594, %v1593
        %v1617 = vpack.c.b16 %v1596, %v1595
        %v1618 = vpack.c.b16 %v1598, %v1597
        %v1619 = vpack.c.b16 %v1600, %v1599
        %v1620 = vpack.c.b16 %v1602, %v1601
        %v1621 = vpack.c.b16 %v1604, %v1603
        %v1622 = vpack.c.b16 %v1606, %v1605
        %1639 = vmatprep.subr.bf16.mxu0 0
        %1640 = vmatpush1.bf16.msra.mxu0 %v1607
        %1641 = vmatprep.subr.bf16.mxu0 0
        %1642 = vmatpush1.bf16.msra.mxu0 %v1608
        %1643 = vmatprep.subr.bf16.mxu0 0
        %1644 = vmatpush1.bf16.msra.mxu0 %v1609
        %1645 = vmatprep.subr.bf16.mxu0 0
        %1646 = vmatpush1.bf16.msra.mxu0 %v1610
        %1647 = vmatprep.subr.bf16.mxu0 0
        %1648 = vmatpush1.bf16.msra.mxu0 %v1611
        %1649 = vmatprep.subr.bf16.mxu0 0
        %1650 = vmatpush1.bf16.msra.mxu0 %v1612
        %1651 = vmatprep.subr.bf16.mxu0 0
        %1652 = vmatpush1.bf16.msra.mxu0 %v1613
        %1653 = vmatprep.subr.bf16.mxu0 0
        %1654 = vmatpush1.bf16.msra.mxu0 %v1614
        %1655 = vmatprep.subr.bf16.mxu0 0
        %1656 = vmatpush1.bf16.msra.mxu0 %v1615
        %1657 = vmatprep.subr.bf16.mxu0 0
        %1658 = vmatpush1.bf16.msra.mxu0 %v1616
        %1659 = vmatprep.subr.bf16.mxu0 0
        %1660 = vmatpush1.bf16.msra.mxu0 %v1617
        %1661 = vmatprep.subr.bf16.mxu0 0
        %1662 = vmatpush1.bf16.msra.mxu0 %v1618
        %1663 = vmatprep.subr.bf16.mxu0 0
        %1664 = vmatpush1.bf16.msra.mxu0 %v1619
        %1665 = vmatprep.subr.bf16.mxu0 0
        %1666 = vmatpush1.bf16.msra.mxu0 %v1620
        %1667 = vmatprep.subr.bf16.mxu0 0
        %1668 = vmatpush1.bf16.msra.mxu0 %v1621
        %1669 = vmatprep.subr.bf16.mxu0 0
        %1670 = vmatpush1.bf16.msra.mxu0 %v1622
        %1671 = vmatprep.mubr.bf16.mxu0 %v1489
        %1672 = vmatmul.mubr.bf16.gmra.mrb[0].mxu0 %v1488
        %v1673 = vpop.f32.mrb[0].mxu0
        %v1674 = vadd.f32 %v1541, %v1673
        %v1675 = vpop.f32.mrb[0].mxu0
        %v1676 = vpop.f32.mrb[0].mxu0
        %v1677 = vadd.f32 %v1541, %v1676
        %v1678 = vpop.f32.mrb[0].mxu0
        %1679 = vmatprep.mubr.bf16.mxu0 %v1491
        %1680 = vmatmul.mubr.bf16.gmra.mrb[0].mxu0 %v1490
        %v1681 = vpop.f32.mrb[0].mxu0
        %v1682 = vadd.f32 %v1541, %v1681
        %v1683 = vpop.f32.mrb[0].mxu0
        %v1684 = vpop.f32.mrb[0].mxu0
        %v1685 = vadd.f32 %v1541, %v1684
        %v1686 = vpop.f32.mrb[0].mxu0
        %1687 = vmatprep.mubr.bf16.mxu0 %v1493
        %1688 = vmatmul.mubr.bf16.gmra.mrb[0].mxu0 %v1492
        %v1689 = vpop.f32.mrb[0].mxu0
        %v1690 = vadd.f32 %v1541, %v1689
        %v1691 = vpop.f32.mrb[0].mxu0
        %v1692 = vpop.f32.mrb[0].mxu0
        %v1693 = vadd.f32 %v1541, %v1692
        %v1694 = vpop.f32.mrb[0].mxu0
        %1695 = vmatprep.mubr.bf16.mxu0 %v1495
        %1696 = vmatmul.mubr.bf16.gmra.mrb[0].mxu0 %v1494
        %v1697 = vpop.f32.mrb[0].mxu0
        %v1698 = vadd.f32 %v1541, %v1697
        %v1699 = vpop.f32.mrb[0].mxu0
        %v1700 = vpop.f32.mrb[0].mxu0
        %v1701 = vadd.f32 %v1541, %v1700
        %v1702 = vpop.f32.mrb[0].mxu0
        %1703 = vmatprep.mubr.bf16.mxu0 %v1497
        %1704 = vmatmul.mubr.bf16.gmra.mrb[0].mxu0 %v1496
        %v1705 = vpop.f32.mrb[0].mxu0
        %v1706 = vadd.f32 %v1541, %v1705
        %v1707 = vpop.f32.mrb[0].mxu0
        %v1708 = vpop.f32.mrb[0].mxu0
        %v1709 = vadd.f32 %v1541, %v1708
        %v1710 = vpop.f32.mrb[0].mxu0
        %1711 = vmatprep.mubr.bf16.mxu0 %v1499
        %1712 = vmatmul.mubr.bf16.gmra.mrb[0].mxu0 %v1498
        %v1713 = vpop.f32.mrb[0].mxu0
        %v1714 = vadd.f32 %v1541, %v1713
        %v1715 = vpop.f32.mrb[0].mxu0
        %v1716 = vpop.f32.mrb[0].mxu0
        %v1717 = vadd.f32 %v1541, %v1716
        %v1718 = vpop.f32.mrb[0].mxu0
        %1719 = vmatprep.mubr.bf16.mxu0 %v1501
        %1720 = vmatmul.mubr.bf16.gmra.mrb[0].mxu0 %v1500
        %v1721 = vpop.f32.mrb[0].mxu0
        %v1722 = vadd.f32 %v1541, %v1721
        %v1723 = vpop.f32.mrb[0].mxu0
        %v1724 = vpop.f32.mrb[0].mxu0
        %v1725 = vadd.f32 %v1541, %v1724
        %v1726 = vpop.f32.mrb[0].mxu0
        %1727 = vmatprep.mubr.bf16.mxu0 %v1503
        %1728 = vmatmul.mubr.bf16.gmra.mrb[0].mxu0 %v1502
        %v1729 = vpop.f32.mrb[0].mxu0
        %v1730 = vadd.f32 %v1541, %v1729
        %v1731 = vpop.f32.mrb[0].mxu0
        %v1732 = vpop.f32.mrb[0].mxu0
        %v1733 = vadd.f32 %v1541, %v1732
        %v1734 = vpop.f32.mrb[0].mxu0
        %1735 = vdwg.mxu0
        %1736 = vst [vmem:[%s271] sm:$0xff] %v1674
        %1737 = vst [vmem:[%s271 + $0x8] sm:$0xff] %v1677
        %1738 = vst [vmem:[%s271 + $0x10] sm:$0xff] %v1682
        %1739 = vst [vmem:[%s271 + $0x18] sm:$0xff] %v1685
        %1740 = vst [vmem:[%s271 + $0x20] sm:$0xff] %v1690
        %1741 = vst [vmem:[%s271 + $0x28] sm:$0xff] %v1693
        %1742 = vst [vmem:[%s271 + $0x30] sm:$0xff] %v1698
        %1743 = vst [vmem:[%s271 + $0x38] sm:$0xff] %v1701
        %1744 = vst [vmem:[%s271 + $0x40] sm:$0xff] %v1706
        %1745 = vst [vmem:[%s271 + $0x48] sm:$0xff] %v1709
        %1746 = vst [vmem:[%s271 + $0x50] sm:$0xff] %v1714
        %1747 = vst [vmem:[%s271 + $0x58] sm:$0xff] %v1717
        %1748 = vst [vmem:[%s271 + $0x60] sm:$0xff] %v1722
        %1749 = vst [vmem:[%s271 + $0x68] sm:$0xff] %v1725
        %1750 = vst [vmem:[%s271 + $0x70] sm:$0xff] %v1730
        %1751 = vst [vmem:[%s271 + $0x78] sm:$0xff] %v1733
        %s1752 = sand.u32 %s141, 1
        %s1753 = scalar_lea.sflag [#allocation4], %s1752
        %s1754 = sand.u32 %s141, 1
        %s1755 = smul.addr %s1754, 128
        %s1756 = scalar_lea.vmem [#allocation8], %s1755
        // Predicated region
        $region53: #{tpu_custom_call.1} parent=39 // pred_check
          %p1757 = pneg %p151
        $region54: #{tpu_custom_call.1} parent=39 // pred_check_branch
          %1759 = sbr.rel (%p1757) target = $region56
        $region55: #{tpu_custom_call.1} parent=39 // pred_region
          %s1760 = smul.u32 16, %s23
          %s1762 = ssub.s32 2048, 2048
          %1763 = vsyncadd %s1753, %s1762
          %s1764 = smul.addr %s1760, 128
          %s1765 = scalar_lea.hbm %s5, %s1764
          %s1766 = sshll.u32 %s1756, 4
          %s1767 = int_to_ptr.vmem [resolvable:$true] %s1766
          %1772 = dma.vmem_to_hbm [thread:$0]  %s1767, 2048, %s1765, %s1753, 128, 128, 8
        $region56: #{tpu_custom_call.1} parent=39 // pred_fallthru
          _
      $region40: #{tpu_custom_call.1} parent=5 // pred_fallthru
        _
      %p1773 = scmp.le.s32.totalorder 2, %s18
      // Predicated region
      $region57: #{tpu_custom_call.1} parent=5 // pred_check
        %p1774 = pneg %p1773
      $region58: #{tpu_custom_call.1} parent=5 // pred_check_branch
        %1776 = sbr.rel (%p1774) target = $region60
      $region59: #{tpu_custom_call.1} parent=5 // pred_region
        %s1777 = ssub.s32 %s18, 2
        // Predicated region
        $region61: #{tpu_custom_call.1} parent=59 // pred_check
          %p1778 = pneg %p157
        $region62: #{tpu_custom_call.1} parent=59 // pred_check_branch
          %1780 = sbr.rel (%p1778) target = $region64
        $region63: #{tpu_custom_call.1} parent=59 // pred_region
          %s1781 = sand.u32 %s142, 1
          %s1782 = scalar_lea.sflag [#allocation4], %s1781
          %s1783 = sand.u32 %s142, 1
          %s1784 = smul.addr %s1783, 128
          %s1785 = scalar_lea.vmem [#allocation8], %s1784
          %1786 = dma.done %s1782, 2048
        $region64: #{tpu_custom_call.1} parent=59 // pred_fallthru
          _
      $region60: #{tpu_custom_call.1} parent=5 // pred_fallthru
        _
    $region6: #{tpu_custom_call.1} parent=1 // loop_footer
      %s22 = sadd.s32 1, %s18
    $region7: #{tpu_custom_call.1} parent=1 // loop_footer_branch
      %17 = sbr.rel target = $region3
    $region8: #{tpu_custom_call.1} parent=1 // loop_exit
      _
    %1787 = vsyncpa [#allocation3], 1
    %s1788 = scalar_lea.sflag [#allocation3], 1
    %1789 = vsyncpa %s1788, 1
    %1790 = vsyncpa [#allocation6], 1
    %1791 = vsyncpa [#allocation4], 1
    %s1792 = scalar_lea.sflag [#allocation4], 1
    %1793 = vsyncpa %s1792, 1

</llo_original>
